<compile_context>
chip_gen: v7x
topology: tpu7x:2x2x1
jax: 0.10.0
libtpu: 0.0.40
codegen_flags: <defaults>
</compile_context>

<pallas_src>
import jax
import jax.numpy as jnp
from jax import lax
from jax.experimental import pallas as pl
from jax.experimental.pallas import tpu as pltpu

EPS = 1e-5
C_BLK = 128  # lane-dense channel block; one grid program per block


def make_kernel(H, W, KH, KW):
    PH, PW = KH // 2, KW // 2
    WP = W + 2 * PW                         # padded row stride (18)
    OUT_ROWS = H * WP                       # flat output rows incl. garbage cols (252)
    N_VALID = H * W                         # real pixels for BN statistics (196)
    OFF = PH * WP + PW                      # flat offset of image pixel (0,0) (38)
    BAND = OUT_ROWS + KW - 1                # rows per horizontal band (256)

    def kernel(x_ref, w1_ref, g1_ref, b1_ref, wdw_ref, g2_ref, b2_ref,
               mask_ref, o_ref, pad_ref):
        # ---- 1x1 conv on the MXU over the whole zero-padded flat image.
        # Padding rows of x are exact zeros -> their conv output is zero and
        # contributes nothing to the batch statistics below.
        y = jnp.dot(x_ref[...], w1_ref[...], preferred_element_type=jnp.float32)

        # ---- BatchNorm #1 (training-mode batch stats, one pass) + ReLU.
        inv_n = 1.0 / N_VALID
        mean1 = jnp.sum(y, axis=0, keepdims=True) * inv_n
        var1 = jnp.sum(y * y, axis=0, keepdims=True) * inv_n - mean1 * mean1
        scale1 = lax.rsqrt(var1 + EPS) * g1_ref[...]
        y = jnp.maximum((y - mean1) * scale1 + b1_ref[...], 0.0)

        # Re-zero the padding rows (the BN affine made them non-zero) and write
        # the padded activation with a single aligned, lane-dense store.
        pad_ref[...] = y * mask_ref[...]

        # ---- Depthwise KHxKW conv, stride 1, in flat padded geometry.
        # One band load per kernel row; the KW column shifts are value-level
        # slices of the band (XLU work hidden under the multiply-adds).
        w_dw = wdw_ref[...]                                   # all taps resident
        acc = None
        for di in range(KH):
            band = pad_ref[di * WP:di * WP + BAND, :]         # [BAND, C]
            for dj in range(KW):
                k = di * KW + dj
                tap = w_dw[k:k + 1, :]                        # [1, C]
                term = band[dj:dj + OUT_ROWS, :] * tap
                acc = term if acc is None else acc + term

        # ---- BatchNorm #2 (training-mode batch stats, one pass).
        # Only the N_VALID real pixels feed the statistics (mask out the
        # garbage columns of the flat geometry).
        m_out = mask_ref[OFF:OFF + OUT_ROWS, :]               # [OUT_ROWS, 1]
        am = acc * m_out
        mean2 = jnp.sum(am, axis=0, keepdims=True) * inv_n
        var2 = jnp.sum(am * am, axis=0, keepdims=True) * inv_n - mean2 * mean2
        o_ref[...] = ((acc - mean2) * lax.rsqrt(var2 + EPS) * g2_ref[...]
                      + b2_ref[...])

    return kernel


def model_forward(x_nchw, params):
    """x_nchw: [1, Cin, H, W] float32. Returns [1, Cout, H, W] float32."""
    w1, g1, b1, wdw, g2, b2 = params        # kernel layouts: [Cin,Cmid], [KH*KW,Cmid]
    N, Cin, H, W = x_nchw.shape
    assert N == 1, "kernel is written for batch = 1 (as in the reference module)"
    C_mid = w1.shape[1]
    KH, KW = 5, 5
    PH, PW = KH // 2, KW // 2
    WP = W + 2 * PW
    OUT_ROWS = H * WP
    PAD_ROWS = (H + KH - 1) * WP + (KW - 1)

    # --- channel padding to a lane-dense multiple of 128 (sliced off at the end)
    C_pad = ((C_mid + C_BLK - 1) // C_BLK) * C_BLK
    pc = C_pad - C_mid
    w1_p = jnp.pad(w1, ((0, 0), (0, pc)))
    wdw_p = jnp.pad(wdw, ((0, 0), (0, pc)))
    g1_p = jnp.pad(g1, (0, pc)).reshape(1, C_pad)
    b1_p = jnp.pad(b1, (0, pc)).reshape(1, C_pad)
    g2_p = jnp.pad(g2, (0, pc)).reshape(1, C_pad)
    b2_p = jnp.pad(b2, (0, pc)).reshape(1, C_pad)

    # --- zero-padded flat (row-major padded-HW) image and validity mask (XLA side)
    x_hwc = jnp.transpose(x_nchw, (0, 2, 3, 1)).reshape(H, W, Cin)
    x_sp = jnp.pad(x_hwc, ((PH, PH), (PW, PW), (0, 0)))          # [H+4, W+4, Cin]
    x_flat = x_sp.reshape((H + 2 * PH) * WP, Cin)
    x_flat = jnp.pad(x_flat, ((0, PAD_ROWS - x_flat.shape[0]), (0, 0)))

    m_sp = jnp.pad(jnp.ones((H, W, 1), jnp.float32), ((PH, PH), (PW, PW), (0, 0)))
    mask = m_sp.reshape((H + 2 * PH) * WP, 1)
    mask = jnp.pad(mask, ((0, PAD_ROWS - mask.shape[0]), (0, 0)))

    n_blk = C_pad // C_BLK
    grid_spec = pltpu.PrefetchScalarGridSpec(
        num_scalar_prefetch=0,
        grid=(n_blk,),
        in_specs=[
            pl.BlockSpec((PAD_ROWS, Cin), lambda c: (0, 0)),      # x (shared)
            pl.BlockSpec((Cin, C_BLK), lambda c: (0, c)),         # w1
            pl.BlockSpec((1, C_BLK), lambda c: (0, c)),           # gamma1
            pl.BlockSpec((1, C_BLK), lambda c: (0, c)),           # beta1
            pl.BlockSpec((KH * KW, C_BLK), lambda c: (0, c)),     # depthwise taps
            pl.BlockSpec((1, C_BLK), lambda c: (0, c)),           # gamma2
            pl.BlockSpec((1, C_BLK), lambda c: (0, c)),           # beta2
            pl.BlockSpec((PAD_ROWS, 1), lambda c: (0, 0)),        # validity mask
        ],
        out_specs=pl.BlockSpec((OUT_ROWS, C_BLK), lambda c: (0, c)),
        scratch_shapes=[pltpu.VMEM((PAD_ROWS, C_BLK), jnp.float32)],
    )

    out_flat = pl.pallas_call(
        make_kernel(H, W, KH, KW),
        out_shape=jax.ShapeDtypeStruct((OUT_ROWS, C_pad), jnp.float32),
        grid_spec=grid_spec,
        compiler_params=pltpu.CompilerParams(
            dimension_semantics=("parallel",)),
    )(x_flat, w1_p, g1_p, b1_p, wdw_p, g2_p, b2_p, mask)

    # drop garbage columns / padded channels, restore NCHW (all cheap XLA ops)
    out = out_flat.reshape(H, WP, C_pad)[:, :W, :C_mid]
    return jnp.transpose(out.reshape(1, H, W, C_mid), (0, 3, 1, 2))


def reference_forward(x_nchw, torch_style_params):
    """Pure-JAX reference mirroring the PyTorch module (training-mode BN)."""
    w1_oihw, g1, b1, wdw_oihw, g2, b2 = torch_style_params

    def bn_train(x, g, b):
        mean = jnp.mean(x, axis=(0, 2, 3), keepdims=True)
        var = jnp.mean((x - mean) ** 2, axis=(0, 2, 3), keepdims=True)
        return (x - mean) * lax.rsqrt(var + EPS) * g.reshape(1, -1, 1, 1) \
            + b.reshape(1, -1, 1, 1)

    y = lax.conv_general_dilated(
        x_nchw, w1_oihw, (1, 1), 'VALID',
        dimension_numbers=('NCHW', 'OIHW', 'NCHW'))
    y = bn_train(y, g1, b1)
    y = jnp.maximum(y, 0.0)
    y = lax.conv_general_dilated(
        y, wdw_oihw, (1, 1), ((2, 2), (2, 2)),
        dimension_numbers=('NCHW', 'OIHW', 'NCHW'),
        feature_group_count=wdw_oihw.shape[0])
    y = bn_train(y, g2, b2)
    return y


if __name__ == "__main__":
    key = jax.random.PRNGKey(0)
    k_x, k_w1, k_wdw, k_g1, k_b1, k_g2, k_b2 = jax.random.split(key, 7)

    Cin, Cmid, H, W = 40, 240, 14, 14
    KH, KW = 5, 5
    x = jax.random.normal(k_x, (1, Cin, H, W), jnp.float32)

    # Deterministic synthetic parameters (shapes from the module __init__).
    w1_oihw = 0.1 * jax.random.normal(k_w1, (Cmid, Cin, 1, 1), jnp.float32)
    wdw_oihw = 0.1 * jax.random.normal(k_wdw, (Cmid, 1, KH, KW), jnp.float32)
    g1 = 1.0 + 0.1 * jax.random.normal(k_g1, (Cmid,), jnp.float32)
    b1 = 0.1 * jax.random.normal(k_b1, (Cmid,), jnp.float32)
    g2 = 1.0 + 0.1 * jax.random.normal(k_g2, (Cmid,), jnp.float32)
    b2 = 0.1 * jax.random.normal(k_b2, (Cmid,), jnp.float32)

    # Kernel-layout params: 1x1 conv as [Cin, Cmid] matmul, dw conv as [25, Cmid].
    w1_k = w1_oihw.reshape(Cmid, Cin).T                 # [Cin, Cmid]
    wdw_k = wdw_oihw.reshape(Cmid, KH * KW).T           # [KH*KW, Cmid]

    out = model_forward(x, (w1_k, g1, b1, wdw_k, g2, b2))
    out = jax.block_until_ready(out)

    ref = reference_forward(x, (w1_oihw, g1, b1, wdw_oihw, g2, b2))
    ref = jax.block_until_ready(ref)

    assert out.shape == (1, Cmid, H, W), out.shape
    max_err = float(jnp.max(jnp.abs(out - ref)))
    assert max_err < 1e-3, f"max abs error too large: {max_err}"

    print("KERNEL_OK")
</pallas_src>

<mosaic_0001>
module attributes {stable_mosaic.version = 11 : i64} {
  func.func @kernel(%arg0: i32, %arg1: memref<328x40xf32, #tpu.memory_space<vmem>>, %arg2: memref<40x128xf32, #tpu.memory_space<vmem>>, %arg3: memref<1x128xf32, #tpu.memory_space<vmem>>, %arg4: memref<1x128xf32, #tpu.memory_space<vmem>>, %arg5: memref<25x128xf32, #tpu.memory_space<vmem>>, %arg6: memref<1x128xf32, #tpu.memory_space<vmem>>, %arg7: memref<1x128xf32, #tpu.memory_space<vmem>>, %arg8: memref<328x1xf32, #tpu.memory_space<vmem>>, %arg9: memref<252x128xf32, #tpu.memory_space<vmem>>, %arg10: memref<328x128xf32, #tpu.memory_space<vmem>>) attributes {dimension_semantics = [#tpu.dimension_semantics<parallel>], iteration_bounds = array<i64: 2>, scalar_prefetch = 0 : i64, scratch_operands = 1 : i64, tpu.core_type = #tpu.core_type<tc>, window_params = [{pipeline_mode = #tpu.pipeline_mode<synchronous>, transform_indices = @transform_0, window_bounds = array<i64: 328, 40>}, {transform_indices = @transform_1, window_bounds = array<i64: 40, 128>}, {transform_indices = @transform_2, window_bounds = array<i64: 1, 128>}, {transform_indices = @transform_3, window_bounds = array<i64: 1, 128>}, {transform_indices = @transform_4, window_bounds = array<i64: 25, 128>}, {transform_indices = @transform_5, window_bounds = array<i64: 1, 128>}, {transform_indices = @transform_6, window_bounds = array<i64: 1, 128>}, {pipeline_mode = #tpu.pipeline_mode<synchronous>, transform_indices = @transform_7, window_bounds = array<i64: 328, 1>}, {transform_indices = @transform_8, window_bounds = array<i64: 252, 128>}]} {
    %c0 = arith.constant 0 : index
    %c0_0 = arith.constant 0 : index
    %0 = vector.load %arg1[%c0, %c0_0] : memref<328x40xf32, #tpu.memory_space<vmem>>, vector<328x40xf32>
    %c0_1 = arith.constant 0 : index
    %c0_2 = arith.constant 0 : index
    %1 = vector.load %arg2[%c0_1, %c0_2] : memref<40x128xf32, #tpu.memory_space<vmem>>, vector<40x128xf32>
    %cst = arith.constant dense<0.000000e+00> : vector<328x128xf32>
    %2 = tpu.matmul %0, %1, %cst {dimension_numbers = #tpu.dot_dimension_numbers<[1], [0], [0], [1], [0, 0, 1, 1], [], []>} : vector<328x40xf32>, vector<40x128xf32>, vector<328x128xf32> -> vector<328x128xf32>
    %cst_3 = arith.constant dense<0.000000e+00> : vector<128xf32>
    %3 = vector.multi_reduction <add>, %2, %cst_3 [0] : vector<328x128xf32> to vector<128xf32>
    %4 = vector.shape_cast %3 : vector<128xf32> to vector<1x128xf32>
    %cst_4 = arith.constant 0.00510204071 : f32
    %5 = vector.broadcast %cst_4 : f32 to vector<1x128xf32>
    %6 = arith.mulf %4, %5 : vector<1x128xf32>
    %7 = arith.mulf %2, %2 : vector<328x128xf32>
    %cst_5 = arith.constant dense<0.000000e+00> : vector<128xf32>
    %8 = vector.multi_reduction <add>, %7, %cst_5 [0] : vector<328x128xf32> to vector<128xf32>
    %9 = vector.shape_cast %8 : vector<128xf32> to vector<1x128xf32>
    %cst_6 = arith.constant 0.00510204071 : f32
    %10 = vector.broadcast %cst_6 : f32 to vector<1x128xf32>
    %11 = arith.mulf %9, %10 : vector<1x128xf32>
    %12 = arith.mulf %6, %6 : vector<1x128xf32>
    %13 = arith.subf %11, %12 : vector<1x128xf32>
    %cst_7 = arith.constant 9.99999974E-6 : f32
    %14 = vector.broadcast %cst_7 : f32 to vector<1x128xf32>
    %15 = arith.addf %13, %14 : vector<1x128xf32>
    %16 = math.rsqrt %15 : vector<1x128xf32>
    %c0_8 = arith.constant 0 : index
    %c0_9 = arith.constant 0 : index
    %17 = vector.load %arg3[%c0_8, %c0_9] : memref<1x128xf32, #tpu.memory_space<vmem>>, vector<1x128xf32>
    %18 = arith.mulf %16, %17 : vector<1x128xf32>
    %19 = vector.broadcast %6 : vector<1x128xf32> to vector<328x128xf32>
    %20 = arith.subf %2, %19 : vector<328x128xf32>
    %21 = vector.broadcast %18 : vector<1x128xf32> to vector<328x128xf32>
    %22 = arith.mulf %20, %21 : vector<328x128xf32>
    %c0_10 = arith.constant 0 : index
    %c0_11 = arith.constant 0 : index
    %23 = vector.load %arg4[%c0_10, %c0_11] : memref<1x128xf32, #tpu.memory_space<vmem>>, vector<1x128xf32>
    %24 = vector.broadcast %23 : vector<1x128xf32> to vector<328x128xf32>
    %25 = arith.addf %22, %24 : vector<328x128xf32>
    %cst_12 = arith.constant 0.000000e+00 : f32
    %26 = vector.broadcast %cst_12 : f32 to vector<328x128xf32>
    %27 = arith.maximumf %25, %26 : vector<328x128xf32>
    %c0_13 = arith.constant 0 : index
    %c0_14 = arith.constant 0 : index
    %28 = vector.load %arg8[%c0_13, %c0_14] : memref<328x1xf32, #tpu.memory_space<vmem>>, vector<328x1xf32>
    %29 = vector.broadcast %28 : vector<328x1xf32> to vector<328x128xf32>
    %30 = arith.mulf %27, %29 : vector<328x128xf32>
    %c0_15 = arith.constant 0 : index
    %c0_16 = arith.constant 0 : index
    %31 = vector.load %arg10[%c0_15, %c0_16] : memref<328x128xf32, #tpu.memory_space<vmem>>, vector<328x128xf32>
    tpu.vector_store %arg10[%c0_15, %c0_16], %30 {strides = array<i32>} : memref<328x128xf32, #tpu.memory_space<vmem>>, vector<328x128xf32>,
    %c0_17 = arith.constant 0 : index
    %c0_18 = arith.constant 0 : index
    %32 = vector.load %arg5[%c0_17, %c0_18] : memref<25x128xf32, #tpu.memory_space<vmem>>, vector<25x128xf32>
    %c0_19 = arith.constant 0 : index
    %c0_20 = arith.constant 0 : index
    %33 = vector.load %arg10[%c0_19, %c0_20] : memref<328x128xf32, #tpu.memory_space<vmem>>, vector<256x128xf32>
    %34 = vector.extract_strided_slice %32 {offsets = [0, 0], sizes = [1, 128], strides = [1, 1]} : vector<25x128xf32> to vector<1x128xf32>
    %35 = vector.extract_strided_slice %33 {offsets = [0, 0], sizes = [252, 128], strides = [1, 1]} : vector<256x128xf32> to vector<252x128xf32>
    %36 = vector.broadcast %34 : vector<1x128xf32> to vector<252x128xf32>
    %37 = arith.mulf %35, %36 : vector<252x128xf32>
    %38 = vector.extract_strided_slice %32 {offsets = [1, 0], sizes = [1, 128], strides = [1, 1]} : vector<25x128xf32> to vector<1x128xf32>
    %39 = vector.extract_strided_slice %33 {offsets = [1, 0], sizes = [252, 128], strides = [1, 1]} : vector<256x128xf32> to vector<252x128xf32>
    %40 = vector.broadcast %38 : vector<1x128xf32> to vector<252x128xf32>
    %41 = arith.mulf %39, %40 : vector<252x128xf32>
    %42 = arith.addf %37, %41 : vector<252x128xf32>
    %43 = vector.extract_strided_slice %32 {offsets = [2, 0], sizes = [1, 128], strides = [1, 1]} : vector<25x128xf32> to vector<1x128xf32>
    %44 = vector.extract_strided_slice %33 {offsets = [2, 0], sizes = [252, 128], strides = [1, 1]} : vector<256x128xf32> to vector<252x128xf32>
    %45 = vector.broadcast %43 : vector<1x128xf32> to vector<252x128xf32>
    %46 = arith.mulf %44, %45 : vector<252x128xf32>
    %47 = arith.addf %42, %46 : vector<252x128xf32>
    %48 = vector.extract_strided_slice %32 {offsets = [3, 0], sizes = [1, 128], strides = [1, 1]} : vector<25x128xf32> to vector<1x128xf32>
    %49 = vector.extract_strided_slice %33 {offsets = [3, 0], sizes = [252, 128], strides = [1, 1]} : vector<256x128xf32> to vector<252x128xf32>
    %50 = vector.broadcast %48 : vector<1x128xf32> to vector<252x128xf32>
    %51 = arith.mulf %49, %50 : vector<252x128xf32>
    %52 = arith.addf %47, %51 : vector<252x128xf32>
    %53 = vector.extract_strided_slice %32 {offsets = [4, 0], sizes = [1, 128], strides = [1, 1]} : vector<25x128xf32> to vector<1x128xf32>
    %54 = vector.extract_strided_slice %33 {offsets = [4, 0], sizes = [252, 128], strides = [1, 1]} : vector<256x128xf32> to vector<252x128xf32>
    %55 = vector.broadcast %53 : vector<1x128xf32> to vector<252x128xf32>
    %56 = arith.mulf %54, %55 : vector<252x128xf32>
    %57 = arith.addf %52, %56 : vector<252x128xf32>
    %c18 = arith.constant 18 : index
    %c0_21 = arith.constant 0 : index
    %58 = vector.load %arg10[%c18, %c0_21] : memref<328x128xf32, #tpu.memory_space<vmem>>, vector<256x128xf32>
    %59 = vector.extract_strided_slice %32 {offsets = [5, 0], sizes = [1, 128], strides = [1, 1]} : vector<25x128xf32> to vector<1x128xf32>
    %60 = vector.extract_strided_slice %58 {offsets = [0, 0], sizes = [252, 128], strides = [1, 1]} : vector<256x128xf32> to vector<252x128xf32>
    %61 = vector.broadcast %59 : vector<1x128xf32> to vector<252x128xf32>
    %62 = arith.mulf %60, %61 : vector<252x128xf32>
    %63 = arith.addf %57, %62 : vector<252x128xf32>
    %64 = vector.extract_strided_slice %32 {offsets = [6, 0], sizes = [1, 128], strides = [1, 1]} : vector<25x128xf32> to vector<1x128xf32>
    %65 = vector.extract_strided_slice %58 {offsets = [1, 0], sizes = [252, 128], strides = [1, 1]} : vector<256x128xf32> to vector<252x128xf32>
    %66 = vector.broadcast %64 : vector<1x128xf32> to vector<252x128xf32>
    %67 = arith.mulf %65, %66 : vector<252x128xf32>
    %68 = arith.addf %63, %67 : vector<252x128xf32>
    %69 = vector.extract_strided_slice %32 {offsets = [7, 0], sizes = [1, 128], strides = [1, 1]} : vector<25x128xf32> to vector<1x128xf32>
    %70 = vector.extract_strided_slice %58 {offsets = [2, 0], sizes = [252, 128], strides = [1, 1]} : vector<256x128xf32> to vector<252x128xf32>
    %71 = vector.broadcast %69 : vector<1x128xf32> to vector<252x128xf32>
    %72 = arith.mulf %70, %71 : vector<252x128xf32>
    %73 = arith.addf %68, %72 : vector<252x128xf32>
    %74 = vector.extract_strided_slice %32 {offsets = [8, 0], sizes = [1, 128], strides = [1, 1]} : vector<25x128xf32> to vector<1x128xf32>
    %75 = vector.extract_strided_slice %58 {offsets = [3, 0], sizes = [252, 128], strides = [1, 1]} : vector<256x128xf32> to vector<252x128xf32>
    %76 = vector.broadcast %74 : vector<1x128xf32> to vector<252x128xf32>
    %77 = arith.mulf %75, %76 : vector<252x128xf32>
    %78 = arith.addf %73, %77 : vector<252x128xf32>
    %79 = vector.extract_strided_slice %32 {offsets = [9, 0], sizes = [1, 128], strides = [1, 1]} : vector<25x128xf32> to vector<1x128xf32>
    %80 = vector.extract_strided_slice %58 {offsets = [4, 0], sizes = [252, 128], strides = [1, 1]} : vector<256x128xf32> to vector<252x128xf32>
    %81 = vector.broadcast %79 : vector<1x128xf32> to vector<252x128xf32>
    %82 = arith.mulf %80, %81 : vector<252x128xf32>
    %83 = arith.addf %78, %82 : vector<252x128xf32>
    %c36 = arith.constant 36 : index
    %c0_22 = arith.constant 0 : index
    %84 = vector.load %arg10[%c36, %c0_22] : memref<328x128xf32, #tpu.memory_space<vmem>>, vector<256x128xf32>
    %85 = vector.extract_strided_slice %32 {offsets = [10, 0], sizes = [1, 128], strides = [1, 1]} : vector<25x128xf32> to vector<1x128xf32>
    %86 = vector.extract_strided_slice %84 {offsets = [0, 0], sizes = [252, 128], strides = [1, 1]} : vector<256x128xf32> to vector<252x128xf32>
    %87 = vector.broadcast %85 : vector<1x128xf32> to vector<252x128xf32>
    %88 = arith.mulf %86, %87 : vector<252x128xf32>
    %89 = arith.addf %83, %88 : vector<252x128xf32>
    %90 = vector.extract_strided_slice %32 {offsets = [11, 0], sizes = [1, 128], strides = [1, 1]} : vector<25x128xf32> to vector<1x128xf32>
    %91 = vector.extract_strided_slice %84 {offsets = [1, 0], sizes = [252, 128], strides = [1, 1]} : vector<256x128xf32> to vector<252x128xf32>
    %92 = vector.broadcast %90 : vector<1x128xf32> to vector<252x128xf32>
    %93 = arith.mulf %91, %92 : vector<252x128xf32>
    %94 = arith.addf %89, %93 : vector<252x128xf32>
    %95 = vector.extract_strided_slice %32 {offsets = [12, 0], sizes = [1, 128], strides = [1, 1]} : vector<25x128xf32> to vector<1x128xf32>
    %96 = vector.extract_strided_slice %84 {offsets = [2, 0], sizes = [252, 128], strides = [1, 1]} : vector<256x128xf32> to vector<252x128xf32>
    %97 = vector.broadcast %95 : vector<1x128xf32> to vector<252x128xf32>
    %98 = arith.mulf %96, %97 : vector<252x128xf32>
    %99 = arith.addf %94, %98 : vector<252x128xf32>
    %100 = vector.extract_strided_slice %32 {offsets = [13, 0], sizes = [1, 128], strides = [1, 1]} : vector<25x128xf32> to vector<1x128xf32>
    %101 = vector.extract_strided_slice %84 {offsets = [3, 0], sizes = [252, 128], strides = [1, 1]} : vector<256x128xf32> to vector<252x128xf32>
    %102 = vector.broadcast %100 : vector<1x128xf32> to vector<252x128xf32>
    %103 = arith.mulf %101, %102 : vector<252x128xf32>
    %104 = arith.addf %99, %103 : vector<252x128xf32>
    %105 = vector.extract_strided_slice %32 {offsets = [14, 0], sizes = [1, 128], strides = [1, 1]} : vector<25x128xf32> to vector<1x128xf32>
    %106 = vector.extract_strided_slice %84 {offsets = [4, 0], sizes = [252, 128], strides = [1, 1]} : vector<256x128xf32> to vector<252x128xf32>
    %107 = vector.broadcast %105 : vector<1x128xf32> to vector<252x128xf32>
    %108 = arith.mulf %106, %107 : vector<252x128xf32>
    %109 = arith.addf %104, %108 : vector<252x128xf32>
    %c54 = arith.constant 54 : index
    %c0_23 = arith.constant 0 : index
    %110 = vector.load %arg10[%c54, %c0_23] : memref<328x128xf32, #tpu.memory_space<vmem>>, vector<256x128xf32>
    %111 = vector.extract_strided_slice %32 {offsets = [15, 0], sizes = [1, 128], strides = [1, 1]} : vector<25x128xf32> to vector<1x128xf32>
    %112 = vector.extract_strided_slice %110 {offsets = [0, 0], sizes = [252, 128], strides = [1, 1]} : vector<256x128xf32> to vector<252x128xf32>
    %113 = vector.broadcast %111 : vector<1x128xf32> to vector<252x128xf32>
    %114 = arith.mulf %112, %113 : vector<252x128xf32>
    %115 = arith.addf %109, %114 : vector<252x128xf32>
    %116 = vector.extract_strided_slice %32 {offsets = [16, 0], sizes = [1, 128], strides = [1, 1]} : vector<25x128xf32> to vector<1x128xf32>
    %117 = vector.extract_strided_slice %110 {offsets = [1, 0], sizes = [252, 128], strides = [1, 1]} : vector<256x128xf32> to vector<252x128xf32>
    %118 = vector.broadcast %116 : vector<1x128xf32> to vector<252x128xf32>
    %119 = arith.mulf %117, %118 : vector<252x128xf32>
    %120 = arith.addf %115, %119 : vector<252x128xf32>
    %121 = vector.extract_strided_slice %32 {offsets = [17, 0], sizes = [1, 128], strides = [1, 1]} : vector<25x128xf32> to vector<1x128xf32>
    %122 = vector.extract_strided_slice %110 {offsets = [2, 0], sizes = [252, 128], strides = [1, 1]} : vector<256x128xf32> to vector<252x128xf32>
    %123 = vector.broadcast %121 : vector<1x128xf32> to vector<252x128xf32>
    %124 = arith.mulf %122, %123 : vector<252x128xf32>
    %125 = arith.addf %120, %124 : vector<252x128xf32>
    %126 = vector.extract_strided_slice %32 {offsets = [18, 0], sizes = [1, 128], strides = [1, 1]} : vector<25x128xf32> to vector<1x128xf32>
    %127 = vector.extract_strided_slice %110 {offsets = [3, 0], sizes = [252, 128], strides = [1, 1]} : vector<256x128xf32> to vector<252x128xf32>
    %128 = vector.broadcast %126 : vector<1x128xf32> to vector<252x128xf32>
    %129 = arith.mulf %127, %128 : vector<252x128xf32>
    %130 = arith.addf %125, %129 : vector<252x128xf32>
    %131 = vector.extract_strided_slice %32 {offsets = [19, 0], sizes = [1, 128], strides = [1, 1]} : vector<25x128xf32> to vector<1x128xf32>
    %132 = vector.extract_strided_slice %110 {offsets = [4, 0], sizes = [252, 128], strides = [1, 1]} : vector<256x128xf32> to vector<252x128xf32>
    %133 = vector.broadcast %131 : vector<1x128xf32> to vector<252x128xf32>
    %134 = arith.mulf %132, %133 : vector<252x128xf32>
    %135 = arith.addf %130, %134 : vector<252x128xf32>
    %c72 = arith.constant 72 : index
    %c0_24 = arith.constant 0 : index
    %136 = vector.load %arg10[%c72, %c0_24] : memref<328x128xf32, #tpu.memory_space<vmem>>, vector<256x128xf32>
    %137 = vector.extract_strided_slice %32 {offsets = [20, 0], sizes = [1, 128], strides = [1, 1]} : vector<25x128xf32> to vector<1x128xf32>
    %138 = vector.extract_strided_slice %136 {offsets = [0, 0], sizes = [252, 128], strides = [1, 1]} : vector<256x128xf32> to vector<252x128xf32>
    %139 = vector.broadcast %137 : vector<1x128xf32> to vector<252x128xf32>
    %140 = arith.mulf %138, %139 : vector<252x128xf32>
    %141 = arith.addf %135, %140 : vector<252x128xf32>
    %142 = vector.extract_strided_slice %32 {offsets = [21, 0], sizes = [1, 128], strides = [1, 1]} : vector<25x128xf32> to vector<1x128xf32>
    %143 = vector.extract_strided_slice %136 {offsets = [1, 0], sizes = [252, 128], strides = [1, 1]} : vector<256x128xf32> to vector<252x128xf32>
    %144 = vector.broadcast %142 : vector<1x128xf32> to vector<252x128xf32>
    %145 = arith.mulf %143, %144 : vector<252x128xf32>
    %146 = arith.addf %141, %145 : vector<252x128xf32>
    %147 = vector.extract_strided_slice %32 {offsets = [22, 0], sizes = [1, 128], strides = [1, 1]} : vector<25x128xf32> to vector<1x128xf32>
    %148 = vector.extract_strided_slice %136 {offsets = [2, 0], sizes = [252, 128], strides = [1, 1]} : vector<256x128xf32> to vector<252x128xf32>
    %149 = vector.broadcast %147 : vector<1x128xf32> to vector<252x128xf32>
    %150 = arith.mulf %148, %149 : vector<252x128xf32>
    %151 = arith.addf %146, %150 : vector<252x128xf32>
    %152 = vector.extract_strided_slice %32 {offsets = [23, 0], sizes = [1, 128], strides = [1, 1]} : vector<25x128xf32> to vector<1x128xf32>
    %153 = vector.extract_strided_slice %136 {offsets = [3, 0], sizes = [252, 128], strides = [1, 1]} : vector<256x128xf32> to vector<252x128xf32>
    %154 = vector.broadcast %152 : vector<1x128xf32> to vector<252x128xf32>
    %155 = arith.mulf %153, %154 : vector<252x128xf32>
    %156 = arith.addf %151, %155 : vector<252x128xf32>
    %157 = vector.extract_strided_slice %32 {offsets = [24, 0], sizes = [1, 128], strides = [1, 1]} : vector<25x128xf32> to vector<1x128xf32>
    %158 = vector.extract_strided_slice %136 {offsets = [4, 0], sizes = [252, 128], strides = [1, 1]} : vector<256x128xf32> to vector<252x128xf32>
    %159 = vector.broadcast %157 : vector<1x128xf32> to vector<252x128xf32>
    %160 = arith.mulf %158, %159 : vector<252x128xf32>
    %161 = arith.addf %156, %160 : vector<252x128xf32>
    %c38 = arith.constant 38 : index
    %c0_25 = arith.constant 0 : index
    %162 = vector.load %arg8[%c38, %c0_25] : memref<328x1xf32, #tpu.memory_space<vmem>>, vector<252x1xf32>
    %163 = vector.broadcast %162 : vector<252x1xf32> to vector<252x128xf32>
    %164 = arith.mulf %161, %163 : vector<252x128xf32>
    %cst_26 = arith.constant dense<0.000000e+00> : vector<128xf32>
    %165 = vector.multi_reduction <add>, %164, %cst_26 [0] : vector<252x128xf32> to vector<128xf32>
    %166 = vector.shape_cast %165 : vector<128xf32> to vector<1x128xf32>
    %cst_27 = arith.constant 0.00510204071 : f32
    %167 = vector.broadcast %cst_27 : f32 to vector<1x128xf32>
    %168 = arith.mulf %166, %167 : vector<1x128xf32>
    %169 = arith.mulf %164, %164 : vector<252x128xf32>
    %cst_28 = arith.constant dense<0.000000e+00> : vector<128xf32>
    %170 = vector.multi_reduction <add>, %169, %cst_28 [0] : vector<252x128xf32> to vector<128xf32>
    %171 = vector.shape_cast %170 : vector<128xf32> to vector<1x128xf32>
    %cst_29 = arith.constant 0.00510204071 : f32
    %172 = vector.broadcast %cst_29 : f32 to vector<1x128xf32>
    %173 = arith.mulf %171, %172 : vector<1x128xf32>
    %174 = arith.mulf %168, %168 : vector<1x128xf32>
    %175 = arith.subf %173, %174 : vector<1x128xf32>
    %176 = vector.broadcast %168 : vector<1x128xf32> to vector<252x128xf32>
    %177 = arith.subf %161, %176 : vector<252x128xf32>
    %cst_30 = arith.constant 9.99999974E-6 : f32
    %178 = vector.broadcast %cst_30 : f32 to vector<1x128xf32>
    %179 = arith.addf %175, %178 : vector<1x128xf32>
    %180 = math.rsqrt %179 : vector<1x128xf32>
    %181 = vector.broadcast %180 : vector<1x128xf32> to vector<252x128xf32>
    %182 = arith.mulf %177, %181 : vector<252x128xf32>
    %c0_31 = arith.constant 0 : index
    %c0_32 = arith.constant 0 : index
    %183 = vector.load %arg6[%c0_31, %c0_32] : memref<1x128xf32, #tpu.memory_space<vmem>>, vector<1x128xf32>
    %184 = vector.broadcast %183 : vector<1x128xf32> to vector<252x128xf32>
    %185 = arith.mulf %182, %184 : vector<252x128xf32>
    %c0_33 = arith.constant 0 : index
    %c0_34 = arith.constant 0 : index
    %186 = vector.load %arg7[%c0_33, %c0_34] : memref<1x128xf32, #tpu.memory_space<vmem>>, vector<1x128xf32>
    %187 = vector.broadcast %186 : vector<1x128xf32> to vector<252x128xf32>
    %188 = arith.addf %185, %187 : vector<252x128xf32>
    %c0_35 = arith.constant 0 : index
    %c0_36 = arith.constant 0 : index
    %189 = vector.load %arg9[%c0_35, %c0_36] : memref<252x128xf32, #tpu.memory_space<vmem>>, vector<252x128xf32>
    tpu.vector_store %arg9[%c0_35, %c0_36], %188 {strides = array<i32>} : memref<252x128xf32, #tpu.memory_space<vmem>>, vector<252x128xf32>,
    return
  }
  func.func @transform_0(%arg0: i32) -> (i32, i32) {
    %c0_i32 = arith.constant 0 : i32
    %c0_i32_0 = arith.constant 0 : i32
    %c0_i32_1 = arith.constant 0 : i32
    return %c0_i32, %c0_i32_0 : i32, i32
  }
  func.func @transform_1(%arg0: i32) -> (i32, i32) {
    %c0_i32 = arith.constant 0 : i32
    %c0_i32_0 = arith.constant 0 : i32
    return %c0_i32, %arg0 : i32, i32
  }
  func.func @transform_2(%arg0: i32) -> (i32, i32) {
    %c0_i32 = arith.constant 0 : i32
    %c0_i32_0 = arith.constant 0 : i32
    return %c0_i32, %arg0 : i32, i32
  }
  func.func @transform_3(%arg0: i32) -> (i32, i32) {
    %c0_i32 = arith.constant 0 : i32
    %c0_i32_0 = arith.constant 0 : i32
    return %c0_i32, %arg0 : i32, i32
  }
  func.func @transform_4(%arg0: i32) -> (i32, i32) {
    %c0_i32 = arith.constant 0 : i32
    %c0_i32_0 = arith.constant 0 : i32
    return %c0_i32, %arg0 : i32, i32
  }
  func.func @transform_5(%arg0: i32) -> (i32, i32) {
    %c0_i32 = arith.constant 0 : i32
    %c0_i32_0 = arith.constant 0 : i32
    return %c0_i32, %arg0 : i32, i32
  }
  func.func @transform_6(%arg0: i32) -> (i32, i32) {
    %c0_i32 = arith.constant 0 : i32
    %c0_i32_0 = arith.constant 0 : i32
    return %c0_i32, %arg0 : i32, i32
  }
  func.func @transform_7(%arg0: i32) -> (i32, i32) {
    %c0_i32 = arith.constant 0 : i32
    %c0_i32_0 = arith.constant 0 : i32
    %c0_i32_1 = arith.constant 0 : i32
    return %c0_i32, %c0_i32_0 : i32, i32
  }
  func.func @transform_8(%arg0: i32) -> (i32, i32) {
    %c0_i32 = arith.constant 0 : i32
    %c0_i32_0 = arith.constant 0 : i32
    return %c0_i32, %arg0 : i32, i32
  }
}

</mosaic_0001>

<llo_original>
// kernel: tpu_custom_call.1
$region0: #{tpu_custom_call.1}
  #allocation0 [shape = 'u32[]', space=smem, size = 0x4, offset = 0x4, fixed_abs, tag = 'smem constant byte address 0x4 - core index']
  #allocation1 [shape = 'u32[144,128]{1,0:T(1,128)}', space=vmem, size = 0x12000, scoped, tag = 'internal scratch']
  #allocation2 [shape = 'f32[328,128]{1,0:T(8,128)}', space=vmem, size = 0x29000, scoped, tag = 'scratch operand']
  %s0 = inlined_call_operand.vmem [shape: f32[328,40], index: 0, kind: input, shape index: {}]
  %s1 = inlined_call_operand.vmem [shape: f32[40,256], index: 1, kind: input, shape index: {}]
  %s2 = inlined_call_operand.vmem [shape: f32[1,256], index: 2, kind: input, shape index: {}]
  %s3 = inlined_call_operand.vmem [shape: f32[1,256], index: 3, kind: input, shape index: {}]
  %s4 = inlined_call_operand.vmem [shape: f32[25,256], index: 4, kind: input, shape index: {}]
  %s5 = inlined_call_operand.vmem [shape: f32[1,256], index: 5, kind: input, shape index: {}]
  %s6 = inlined_call_operand.vmem [shape: f32[1,256], index: 6, kind: input, shape index: {}]
  %s7 = inlined_call_operand.vmem [shape: f32[328,1], index: 7, kind: input, shape index: {}]
  %s8 = inlined_call_operand.hbm [shape: f32[252,256], index: 8, kind: output, shape index: {}]
  %s9 = sld [smem:[#allocation0]]
  $region141: #{tpu_custom_call.1} parent=0
    _
  %s11 = ssub.s32 1, %s9
  %s12 = scalar_select 0, %s11, %s9
  $region1: #{tpu_custom_call.1} parent=0
    #allocation3 [shape = 'u8[40960]{0}', space=vmem, size = 0xa000, scoped, tag = 'input window, operand 1']
    #allocation4 [shape = 'u8[32768]{0}', space=vmem, size = 0x8000, scoped, tag = 'input window, operand 4']
    #allocation5 [shape = 'u8[262144]{0}', space=vmem, size = 0x40000, scoped, tag = 'output window, operand 0']
    #allocation6 [shape = 's32[2]{0}', space=sflag, size = 0x8, scoped, tag = 'scoped memory for tpu_custom_call.1']
    %13 = vsyncpa [#allocation6], 0
    %s14 = scalar_lea.sflag [#allocation6], 1
    %15 = vsyncpa %s14, 0
    loop: start=0, step=1, limit=4
    $region2: #{tpu_custom_call.1} parent=1 // loop_pre_header
      _
    $region3: #{tpu_custom_call.1} parent=1 // loop_header
      %s17 = sphi 0, %s21
      %p18 = scmp.ge.s32.totalorder %s17, 4
      %s25 = sphi 0, %s25
      %s27 = sphi 0, %s25
      %s28 = sphi 0, %s27
      %s42 = sphi 0, %s28
      %s48 = sphi 0, %s50
      %s51 = sphi 0, %s48
      %s52 = sphi 0, %s51
      %s68 = sphi 0, %s52
      %s74 = sphi 0, %s76
      %s77 = sphi 0, %s74
      %s78 = sphi 0, %s77
      %s94 = sphi 0, %s78
      %s100 = sphi 0, %s102
      %s103 = sphi 0, %s100
      %s104 = sphi 0, %s103
      %s120 = sphi 0, %s104
      %s126 = sphi 0, %s128
      %s129 = sphi 0, %s126
      %s130 = sphi 0, %s129
      %s146 = sphi 0, %s130
      %s152 = sphi 0, %s154
      %s155 = sphi 0, %s152
      %s156 = sphi 0, %s155
      %s172 = sphi 0, %s156
      %s178 = sphi 0, %s180
      %s181 = sphi 0, %s178
      %s182 = sphi 0, %s181
      %s198 = sphi 0, %s182
      %s202 = sphi 0, %s202
      %s204 = sphi 0, %s202
      %s205 = sphi 0, %s204
      %s219 = sphi 0, %s205
      %s225 = sphi 0, %s227
      %s228 = sphi 0, %s225
      %s229 = sphi 0, %s228
      %s245 = sphi 0, %s229
    $region4: #{tpu_custom_call.1} parent=1 // loop_header_branch
      %20 = sbr.rel (%p18) target = $region8
    $region5: #{tpu_custom_call.1} parent=1 // loop_body
      %s22 = ssub.s32 %s17, 1
      %s23 = ssub.s32 %s17, 2
      %s24 = sadd.s32 %s17, 1
      %s26 = sadd.s32 %s25, 1
      %p29 = scmp.eq.s32.totalorder %s17, 1
      %p30 = scmp.ne.s32.totalorder %s25, %s27
      %p31 = scmp.eq.s32.totalorder %s17, 0
      %p32 = por %p30, %p31
      %p33 = scmp.ne.s32.totalorder %s25, %s27
      %p34 = scmp.eq.s32.totalorder %s22, 1
      %p35 = por %p33, %p34
      %p36 = scmp.ne.s32.totalorder %s27, %s28
      %p37 = scmp.eq.s32.totalorder %s22, 0
      %p38 = por %p36, %p37
      %p39 = scmp.ne.s32.totalorder %s27, %s28
      %p40 = scmp.eq.s32.totalorder %s23, 1
      %p41 = por %p39, %p40
      %p43 = scmp.ne.s32.totalorder %s28, %s42
      %p44 = scmp.eq.s32.totalorder %s23, 0
      %p45 = por %p43, %p44
      %s46 = ssub.s32 %s17, %s24
      %p47 = scmp.eq.s32.totalorder %s46, 0
      %s49 = sadd.s32 %s48, 1
      %s50 = scalar_select %p47, %s48, %s49
      %p53 = pneg %p47
      %p54 = scmp.eq.s32.totalorder %s17, 1
      %p55 = por %p53, %p54
      %p56 = scmp.ne.s32.totalorder %s48, %s51
      %p57 = scmp.eq.s32.totalorder %s17, 0
      %p58 = por %p56, %p57
      %p59 = scmp.ne.s32.totalorder %s48, %s51
      %p60 = scmp.eq.s32.totalorder %s22, 1
      %p61 = por %p59, %p60
      %p62 = scmp.ne.s32.totalorder %s51, %s52
      %p63 = scmp.eq.s32.totalorder %s22, 0
      %p64 = por %p62, %p63
      %p65 = scmp.ne.s32.totalorder %s51, %s52
      %p66 = scmp.eq.s32.totalorder %s23, 1
      %p67 = por %p65, %p66
      %p69 = scmp.ne.s32.totalorder %s52, %s68
      %p70 = scmp.eq.s32.totalorder %s23, 0
      %p71 = por %p69, %p70
      %s72 = ssub.s32 %s17, %s24
      %p73 = scmp.eq.s32.totalorder %s72, 0
      %s75 = sadd.s32 %s74, 1
      %s76 = scalar_select %p73, %s74, %s75
      %p79 = pneg %p73
      %p80 = scmp.eq.s32.totalorder %s17, 1
      %p81 = por %p79, %p80
      %p82 = scmp.ne.s32.totalorder %s74, %s77
      %p83 = scmp.eq.s32.totalorder %s17, 0
      %p84 = por %p82, %p83
      %p85 = scmp.ne.s32.totalorder %s74, %s77
      %p86 = scmp.eq.s32.totalorder %s22, 1
      %p87 = por %p85, %p86
      %p88 = scmp.ne.s32.totalorder %s77, %s78
      %p89 = scmp.eq.s32.totalorder %s22, 0
      %p90 = por %p88, %p89
      %p91 = scmp.ne.s32.totalorder %s77, %s78
      %p92 = scmp.eq.s32.totalorder %s23, 1
      %p93 = por %p91, %p92
      %p95 = scmp.ne.s32.totalorder %s78, %s94
      %p96 = scmp.eq.s32.totalorder %s23, 0
      %p97 = por %p95, %p96
      %s98 = ssub.s32 %s17, %s24
      %p99 = scmp.eq.s32.totalorder %s98, 0
      %s101 = sadd.s32 %s100, 1
      %s102 = scalar_select %p99, %s100, %s101
      %p105 = pneg %p99
      %p106 = scmp.eq.s32.totalorder %s17, 1
      %p107 = por %p105, %p106
      %p108 = scmp.ne.s32.totalorder %s100, %s103
      %p109 = scmp.eq.s32.totalorder %s17, 0
      %p110 = por %p108, %p109
      %p111 = scmp.ne.s32.totalorder %s100, %s103
      %p112 = scmp.eq.s32.totalorder %s22, 1
      %p113 = por %p111, %p112
      %p114 = scmp.ne.s32.totalorder %s103, %s104
      %p115 = scmp.eq.s32.totalorder %s22, 0
      %p116 = por %p114, %p115
      %p117 = scmp.ne.s32.totalorder %s103, %s104
      %p118 = scmp.eq.s32.totalorder %s23, 1
      %p119 = por %p117, %p118
      %p121 = scmp.ne.s32.totalorder %s104, %s120
      %p122 = scmp.eq.s32.totalorder %s23, 0
      %p123 = por %p121, %p122
      %s124 = ssub.s32 %s17, %s24
      %p125 = scmp.eq.s32.totalorder %s124, 0
      %s127 = sadd.s32 %s126, 1
      %s128 = scalar_select %p125, %s126, %s127
      %p131 = pneg %p125
      %p132 = scmp.eq.s32.totalorder %s17, 1
      %p133 = por %p131, %p132
      %p134 = scmp.ne.s32.totalorder %s126, %s129
      %p135 = scmp.eq.s32.totalorder %s17, 0
      %p136 = por %p134, %p135
      %p137 = scmp.ne.s32.totalorder %s126, %s129
      %p138 = scmp.eq.s32.totalorder %s22, 1
      %p139 = por %p137, %p138
      %p140 = scmp.ne.s32.totalorder %s129, %s130
      %p141 = scmp.eq.s32.totalorder %s22, 0
      %p142 = por %p140, %p141
      %p143 = scmp.ne.s32.totalorder %s129, %s130
      %p144 = scmp.eq.s32.totalorder %s23, 1
      %p145 = por %p143, %p144
      %p147 = scmp.ne.s32.totalorder %s130, %s146
      %p148 = scmp.eq.s32.totalorder %s23, 0
      %p149 = por %p147, %p148
      %s150 = ssub.s32 %s17, %s24
      %p151 = scmp.eq.s32.totalorder %s150, 0
      %s153 = sadd.s32 %s152, 1
      %s154 = scalar_select %p151, %s152, %s153
      %p157 = pneg %p151
      %p158 = scmp.eq.s32.totalorder %s17, 1
      %p159 = por %p157, %p158
      %p160 = scmp.ne.s32.totalorder %s152, %s155
      %p161 = scmp.eq.s32.totalorder %s17, 0
      %p162 = por %p160, %p161
      %p163 = scmp.ne.s32.totalorder %s152, %s155
      %p164 = scmp.eq.s32.totalorder %s22, 1
      %p165 = por %p163, %p164
      %p166 = scmp.ne.s32.totalorder %s155, %s156
      %p167 = scmp.eq.s32.totalorder %s22, 0
      %p168 = por %p166, %p167
      %p169 = scmp.ne.s32.totalorder %s155, %s156
      %p170 = scmp.eq.s32.totalorder %s23, 1
      %p171 = por %p169, %p170
      %p173 = scmp.ne.s32.totalorder %s156, %s172
      %p174 = scmp.eq.s32.totalorder %s23, 0
      %p175 = por %p173, %p174
      %s176 = ssub.s32 %s17, %s24
      %p177 = scmp.eq.s32.totalorder %s176, 0
      %s179 = sadd.s32 %s178, 1
      %s180 = scalar_select %p177, %s178, %s179
      %p183 = pneg %p177
      %p184 = scmp.eq.s32.totalorder %s17, 1
      %p185 = por %p183, %p184
      %p186 = scmp.ne.s32.totalorder %s178, %s181
      %p187 = scmp.eq.s32.totalorder %s17, 0
      %p188 = por %p186, %p187
      %p189 = scmp.ne.s32.totalorder %s178, %s181
      %p190 = scmp.eq.s32.totalorder %s22, 1
      %p191 = por %p189, %p190
      %p192 = scmp.ne.s32.totalorder %s181, %s182
      %p193 = scmp.eq.s32.totalorder %s22, 0
      %p194 = por %p192, %p193
      %p195 = scmp.ne.s32.totalorder %s181, %s182
      %p196 = scmp.eq.s32.totalorder %s23, 1
      %p197 = por %p195, %p196
      %p199 = scmp.ne.s32.totalorder %s182, %s198
      %p200 = scmp.eq.s32.totalorder %s23, 0
      %p201 = por %p199, %p200
      %s203 = sadd.s32 %s202, 1
      %p206 = scmp.eq.s32.totalorder %s17, 1
      %p207 = scmp.ne.s32.totalorder %s202, %s204
      %p208 = scmp.eq.s32.totalorder %s17, 0
      %p209 = por %p207, %p208
      %p210 = scmp.ne.s32.totalorder %s202, %s204
      %p211 = scmp.eq.s32.totalorder %s22, 1
      %p212 = por %p210, %p211
      %p213 = scmp.ne.s32.totalorder %s204, %s205
      %p214 = scmp.eq.s32.totalorder %s22, 0
      %p215 = por %p213, %p214
      %p216 = scmp.ne.s32.totalorder %s204, %s205
      %p217 = scmp.eq.s32.totalorder %s23, 1
      %p218 = por %p216, %p217
      %p220 = scmp.ne.s32.totalorder %s205, %s219
      %p221 = scmp.eq.s32.totalorder %s23, 0
      %p222 = por %p220, %p221
      %s223 = ssub.s32 %s17, %s24
      %p224 = scmp.eq.s32.totalorder %s223, 0
      %s226 = sadd.s32 %s225, 1
      %s227 = scalar_select %p224, %s225, %s226
      %p230 = pneg %p224
      %p231 = scmp.eq.s32.totalorder %s17, 1
      %p232 = por %p230, %p231
      %p233 = scmp.ne.s32.totalorder %s225, %s228
      %p234 = scmp.eq.s32.totalorder %s17, 0
      %p235 = por %p233, %p234
      %p236 = scmp.ne.s32.totalorder %s225, %s228
      %p237 = scmp.eq.s32.totalorder %s22, 1
      %p238 = por %p236, %p237
      %p239 = scmp.ne.s32.totalorder %s228, %s229
      %p240 = scmp.eq.s32.totalorder %s22, 0
      %p241 = por %p239, %p240
      %p242 = scmp.ne.s32.totalorder %s228, %s229
      %p243 = scmp.eq.s32.totalorder %s23, 1
      %p244 = por %p242, %p243
      %p246 = scmp.ne.s32.totalorder %s229, %s245
      %p247 = scmp.eq.s32.totalorder %s23, 0
      %p248 = por %p246, %p247
      %p249 = scmp.le.s32.totalorder 1, %s17
      %p250 = scmp.lt.s32.totalorder %s17, 3
      %p251 = pnand %p249, %p250
      %p252 = pneg %p251
      // Predicated region
      $region9: #{tpu_custom_call.1} parent=5 // pred_check
        _
      $region10: #{tpu_custom_call.1} parent=5 // pred_check_branch
        %254 = sbr.rel (%p251) target = $region12
      $region11: #{tpu_custom_call.1} parent=5 // pred_region
        %s255 = ssub.s32 %s17, 1
        // Predicated region
        $region13: #{tpu_custom_call.1} parent=11 // pred_check
          %p256 = pneg %p38
        $region14: #{tpu_custom_call.1} parent=11 // pred_check_branch
          %258 = sbr.rel (%p256) target = $region16
        $region15: #{tpu_custom_call.1} parent=11 // pred_region
          _
        $region16: #{tpu_custom_call.1} parent=11 // pred_fallthru
          _
        // Predicated region
        $region17: #{tpu_custom_call.1} parent=11 // pred_check
          %p259 = pneg %p215
        $region18: #{tpu_custom_call.1} parent=11 // pred_check_branch
          %261 = sbr.rel (%p259) target = $region20
        $region19: #{tpu_custom_call.1} parent=11 // pred_region
          _
        $region20: #{tpu_custom_call.1} parent=11 // pred_fallthru
          _
      $region12: #{tpu_custom_call.1} parent=5 // pred_fallthru
        _
      %p262 = scmp.lt.s32.totalorder %s17, 2
      // Predicated region
      $region21: #{tpu_custom_call.1} parent=5 // pred_check
        %p263 = pneg %p262
      $region22: #{tpu_custom_call.1} parent=5 // pred_check_branch
        %265 = sbr.rel (%p263) target = $region24
      $region23: #{tpu_custom_call.1} parent=5 // pred_region
        // Predicated region
        $region25: #{tpu_custom_call.1} parent=23 // pred_check
          %p266 = pneg %p58
        $region26: #{tpu_custom_call.1} parent=23 // pred_check_branch
          %268 = sbr.rel (%p266) target = $region28
        $region27: #{tpu_custom_call.1} parent=23 // pred_region
          %s269 = sand.u32 %s48, 1
          %s270 = sand.u32 %s48, 1
          %s271 = smul.addr %s270, 40
          %s272 = scalar_lea.vmem [#allocation3], %s271
          %s273 = smul.addr %s17, 8
          %s274 = scalar_lea.vmem %s1, %s273
          // Predicated region
          $region29: #{tpu_custom_call.1} parent=27 // pred_check
            _
          $region30: #{tpu_custom_call.1} parent=27 // pred_check_branch
            %276 = sbr.rel (0) target = $region32
          $region31: #{tpu_custom_call.1} parent=27 // pred_region
            // Predicated region
            $region33: #{tpu_custom_call.1} parent=31 // pred_check
              _
            $region34: #{tpu_custom_call.1} parent=31 // pred_check_branch
              %278 = sbr.rel (0) target = $region36
            $region35: #{tpu_custom_call.1} parent=31 // pred_region
              // Predicated region
              $region48: #{tpu_custom_call.1} parent=35 // pred_check
                _
              $region49: #{tpu_custom_call.1} parent=35 // pred_check_branch
                %301 = sbr.rel (0) target = $region51
              $region50: #{tpu_custom_call.1} parent=35 // pred_region
                loop: start=0, step=1, limit=1
                $region52: #{tpu_custom_call.1} parent=50 // loop_pre_header
                  _
                $region53: #{tpu_custom_call.1} parent=50 // loop_header
                  %s303 = sphi 0, %s307
                  %p304 = scmp.ge.s32.totalorder %s303, 1
                  %s308 = sphi %s274, %s274
                  %s309 = sphi %s272, %s272
                $region54: #{tpu_custom_call.1} parent=50 // loop_header_branch
                  %306 = sbr.rel (%p304) target = $region58
                $region55: #{tpu_custom_call.1} parent=50 // loop_body
                  %v310 = vld [vmem:[%s308] sm:$0xff]
                  %311 = vst [vmem:[%s309] sm:$0xff] %v310
                  %v312 = vld [vmem:[%s308 + $0x10] sm:$0xff]
                  %313 = vst [vmem:[%s309 + $0x8] sm:$0xff] %v312
                  %v314 = vld [vmem:[%s308 + $0x20] sm:$0xff]
                  %315 = vst [vmem:[%s309 + $0x10] sm:$0xff] %v314
                  %v316 = vld [vmem:[%s308 + $0x30] sm:$0xff]
                  %317 = vst [vmem:[%s309 + $0x18] sm:$0xff] %v316
                  %v318 = vld [vmem:[%s308 + $0x40] sm:$0xff]
                  %319 = vst [vmem:[%s309 + $0x20] sm:$0xff] %v318
                $region56: #{tpu_custom_call.1} parent=50 // loop_footer
                  %s307 = sadd.s32 1, %s303
                $region57: #{tpu_custom_call.1} parent=50 // loop_footer_branch
                  %302 = sbr.rel target = $region53
                $region58: #{tpu_custom_call.1} parent=50 // loop_exit
                  _
              $region51: #{tpu_custom_call.1} parent=35 // pred_fallthru
                _
              // Predicated region
              $region59: #{tpu_custom_call.1} parent=35 // pred_check
                _
              $region60: #{tpu_custom_call.1} parent=35 // pred_check_branch
                %321 = sbr.rel target = $region62
              $region61: #{tpu_custom_call.1} parent=35 // pred_region
                _
              $region62: #{tpu_custom_call.1} parent=35 // pred_fallthru
                _
            $region36: #{tpu_custom_call.1} parent=31 // pred_fallthru
              _
            // Predicated region
            $region37: #{tpu_custom_call.1} parent=31 // pred_check
              _
            $region38: #{tpu_custom_call.1} parent=31 // pred_check_branch
              %280 = sbr.rel target = $region40
            $region39: #{tpu_custom_call.1} parent=31 // pred_region
              loop: start=0, step=1, limit=1
              $region41: #{tpu_custom_call.1} parent=39 // loop_pre_header
                _
              $region42: #{tpu_custom_call.1} parent=39 // loop_header
                %s283 = sphi 0, %s287
                %p284 = scmp.ge.s32.totalorder %s283, 1
                %s288 = sphi %s274, %s274
                %s289 = sphi %s272, %s272
              $region43: #{tpu_custom_call.1} parent=39 // loop_header_branch
                %286 = sbr.rel (%p284) target = $region47
              $region44: #{tpu_custom_call.1} parent=39 // loop_body
                %v290 = vld [vmem:[%s288] sm:$0xff]
                %291 = vst [vmem:[%s289] sm:$0xff] %v290
                %v292 = vld [vmem:[%s288 + $0x10] sm:$0xff]
                %293 = vst [vmem:[%s289 + $0x8] sm:$0xff] %v292
                %v294 = vld [vmem:[%s288 + $0x20] sm:$0xff]
                %295 = vst [vmem:[%s289 + $0x10] sm:$0xff] %v294
                %v296 = vld [vmem:[%s288 + $0x30] sm:$0xff]
                %297 = vst [vmem:[%s289 + $0x18] sm:$0xff] %v296
                %v298 = vld [vmem:[%s288 + $0x40] sm:$0xff]
                %299 = vst [vmem:[%s289 + $0x20] sm:$0xff] %v298
              $region45: #{tpu_custom_call.1} parent=39 // loop_footer
                %s287 = sadd.s32 1, %s283
              $region46: #{tpu_custom_call.1} parent=39 // loop_footer_branch
                %282 = sbr.rel target = $region42
              $region47: #{tpu_custom_call.1} parent=39 // loop_exit
                _
            $region40: #{tpu_custom_call.1} parent=31 // pred_fallthru
              _
          $region32: #{tpu_custom_call.1} parent=27 // pred_fallthru
            _
          %322 = vnop
        $region28: #{tpu_custom_call.1} parent=23 // pred_fallthru
          _
        // Predicated region
        $region63: #{tpu_custom_call.1} parent=23 // pred_check
          %p323 = pneg %p84
        $region64: #{tpu_custom_call.1} parent=23 // pred_check_branch
          %325 = sbr.rel (%p323) target = $region66
        $region65: #{tpu_custom_call.1} parent=23 // pred_region
          %p326 = scmp.lt.s32.totalorder %s17, 1
          %s327 = scalar_select %p326, %s17, 1
          %s328 = scalar_lea.vmem %s2, %s327
        $region66: #{tpu_custom_call.1} parent=23 // pred_fallthru
          _
        // Predicated region
        $region67: #{tpu_custom_call.1} parent=23 // pred_check
          %p329 = pneg %p110
        $region68: #{tpu_custom_call.1} parent=23 // pred_check_branch
          %331 = sbr.rel (%p329) target = $region70
        $region69: #{tpu_custom_call.1} parent=23 // pred_region
          %p332 = scmp.lt.s32.totalorder %s17, 1
          %s333 = scalar_select %p332, %s17, 1
          %s334 = scalar_lea.vmem %s3, %s333
        $region70: #{tpu_custom_call.1} parent=23 // pred_fallthru
          _
        // Predicated region
        $region71: #{tpu_custom_call.1} parent=23 // pred_check
          %p335 = pneg %p136
        $region72: #{tpu_custom_call.1} parent=23 // pred_check_branch
          %337 = sbr.rel (%p335) target = $region74
        $region73: #{tpu_custom_call.1} parent=23 // pred_region
          %s338 = sand.u32 %s126, 1
          %s339 = sand.u32 %s126, 1
          %s340 = smul.addr %s339, 32
          %s341 = scalar_lea.vmem [#allocation4], %s340
          %s342 = smul.addr %s17, 8
          %s343 = scalar_lea.vmem %s4, %s342
          // Predicated region
          $region75: #{tpu_custom_call.1} parent=73 // pred_check
            _
          $region76: #{tpu_custom_call.1} parent=73 // pred_check_branch
            %345 = sbr.rel (0) target = $region78
          $region77: #{tpu_custom_call.1} parent=73 // pred_region
            // Predicated region
            $region79: #{tpu_custom_call.1} parent=77 // pred_check
              _
            $region80: #{tpu_custom_call.1} parent=77 // pred_check_branch
              %347 = sbr.rel (0) target = $region82
            $region81: #{tpu_custom_call.1} parent=77 // pred_region
              // Predicated region
              $region94: #{tpu_custom_call.1} parent=81 // pred_check
                _
              $region95: #{tpu_custom_call.1} parent=81 // pred_check_branch
                %368 = sbr.rel (0) target = $region97
              $region96: #{tpu_custom_call.1} parent=81 // pred_region
                loop: start=0, step=1, limit=1
                $region98: #{tpu_custom_call.1} parent=96 // loop_pre_header
                  _
                $region99: #{tpu_custom_call.1} parent=96 // loop_header
                  %s370 = sphi 0, %s374
                  %p371 = scmp.ge.s32.totalorder %s370, 1
                  %s375 = sphi %s343, %s343
                  %s376 = sphi %s341, %s341
                $region100: #{tpu_custom_call.1} parent=96 // loop_header_branch
                  %373 = sbr.rel (%p371) target = $region104
                $region101: #{tpu_custom_call.1} parent=96 // loop_body
                  %v377 = vld [vmem:[%s375] sm:$0xff]
                  %378 = vst [vmem:[%s376] sm:$0xff] %v377
                  %v379 = vld [vmem:[%s375 + $0x10] sm:$0xff]
                  %380 = vst [vmem:[%s376 + $0x8] sm:$0xff] %v379
                  %v381 = vld [vmem:[%s375 + $0x20] sm:$0xff]
                  %382 = vst [vmem:[%s376 + $0x10] sm:$0xff] %v381
                  %v383 = vld [vmem:[%s375 + $0x30] sm:$0xff]
                  %384 = vst [vmem:[%s376 + $0x18] sm:$0xff] %v383
                $region102: #{tpu_custom_call.1} parent=96 // loop_footer
                  %s374 = sadd.s32 1, %s370
                $region103: #{tpu_custom_call.1} parent=96 // loop_footer_branch
                  %369 = sbr.rel target = $region99
                $region104: #{tpu_custom_call.1} parent=96 // loop_exit
                  _
              $region97: #{tpu_custom_call.1} parent=81 // pred_fallthru
                _
              // Predicated region
              $region105: #{tpu_custom_call.1} parent=81 // pred_check
                _
              $region106: #{tpu_custom_call.1} parent=81 // pred_check_branch
                %386 = sbr.rel target = $region108
              $region107: #{tpu_custom_call.1} parent=81 // pred_region
                _
              $region108: #{tpu_custom_call.1} parent=81 // pred_fallthru
                _
            $region82: #{tpu_custom_call.1} parent=77 // pred_fallthru
              _
            // Predicated region
            $region83: #{tpu_custom_call.1} parent=77 // pred_check
              _
            $region84: #{tpu_custom_call.1} parent=77 // pred_check_branch
              %349 = sbr.rel target = $region86
            $region85: #{tpu_custom_call.1} parent=77 // pred_region
              loop: start=0, step=1, limit=1
              $region87: #{tpu_custom_call.1} parent=85 // loop_pre_header
                _
              $region88: #{tpu_custom_call.1} parent=85 // loop_header
                %s352 = sphi 0, %s356
                %p353 = scmp.ge.s32.totalorder %s352, 1
                %s357 = sphi %s343, %s343
                %s358 = sphi %s341, %s341
              $region89: #{tpu_custom_call.1} parent=85 // loop_header_branch
                %355 = sbr.rel (%p353) target = $region93
              $region90: #{tpu_custom_call.1} parent=85 // loop_body
                %v359 = vld [vmem:[%s357] sm:$0xff]
                %360 = vst [vmem:[%s358] sm:$0xff] %v359
                %v361 = vld [vmem:[%s357 + $0x10] sm:$0xff]
                %362 = vst [vmem:[%s358 + $0x8] sm:$0xff] %v361
                %v363 = vld [vmem:[%s357 + $0x20] sm:$0xff]
                %364 = vst [vmem:[%s358 + $0x10] sm:$0xff] %v363
                %v365 = vld [vmem:[%s357 + $0x30] sm:$0xff]
                %366 = vst [vmem:[%s358 + $0x18] sm:$0xff] %v365
              $region91: #{tpu_custom_call.1} parent=85 // loop_footer
                %s356 = sadd.s32 1, %s352
              $region92: #{tpu_custom_call.1} parent=85 // loop_footer_branch
                %351 = sbr.rel target = $region88
              $region93: #{tpu_custom_call.1} parent=85 // loop_exit
                _
            $region86: #{tpu_custom_call.1} parent=77 // pred_fallthru
              _
          $region78: #{tpu_custom_call.1} parent=73 // pred_fallthru
            _
          %387 = vnop
        $region74: #{tpu_custom_call.1} parent=23 // pred_fallthru
          _
        // Predicated region
        $region109: #{tpu_custom_call.1} parent=23 // pred_check
          %p388 = pneg %p162
        $region110: #{tpu_custom_call.1} parent=23 // pred_check_branch
          %390 = sbr.rel (%p388) target = $region112
        $region111: #{tpu_custom_call.1} parent=23 // pred_region
          %p391 = scmp.lt.s32.totalorder %s17, 1
          %s392 = scalar_select %p391, %s17, 1
          %s393 = scalar_lea.vmem %s5, %s392
        $region112: #{tpu_custom_call.1} parent=23 // pred_fallthru
          _
        // Predicated region
        $region113: #{tpu_custom_call.1} parent=23 // pred_check
          %p394 = pneg %p188
        $region114: #{tpu_custom_call.1} parent=23 // pred_check_branch
          %396 = sbr.rel (%p394) target = $region116
        $region115: #{tpu_custom_call.1} parent=23 // pred_region
          %p397 = scmp.lt.s32.totalorder %s17, 1
          %s398 = scalar_select %p397, %s17, 1
          %s399 = scalar_lea.vmem %s6, %s398
        $region116: #{tpu_custom_call.1} parent=23 // pred_fallthru
          _
      $region24: #{tpu_custom_call.1} parent=5 // pred_fallthru
        _
      %p400 = scmp.le.s32.totalorder 1, %s17
      %p401 = scmp.lt.s32.totalorder %s17, 3
      %p402 = pnand %p400, %p401
      %p403 = pneg %p402
      // Predicated region
      $region117: #{tpu_custom_call.1} parent=5 // pred_check
        _
      $region118: #{tpu_custom_call.1} parent=5 // pred_check_branch
        %405 = sbr.rel (%p402) target = $region120
      $region119: #{tpu_custom_call.1} parent=5 // pred_region
        %s406 = ssub.s32 %s17, 1
        %s407 = sand.u32 %s51, 1
        %s408 = sand.u32 %s51, 1
        %s409 = smul.addr %s408, 40
        %s410 = scalar_lea.vmem [#allocation3], %s409
        // Predicated region
        $region121: #{tpu_custom_call.1} parent=119 // pred_check
          %p411 = pneg %p64
        $region122: #{tpu_custom_call.1} parent=119 // pred_check_branch
          %413 = sbr.rel (%p411) target = $region124
        $region123: #{tpu_custom_call.1} parent=119 // pred_region
          _
        $region124: #{tpu_custom_call.1} parent=119 // pred_fallthru
          _
        %s414 = sand.u32 %s129, 1
        %s415 = sand.u32 %s129, 1
        %s416 = smul.addr %s415, 32
        %s417 = scalar_lea.vmem [#allocation4], %s416
        // Predicated region
        $region125: #{tpu_custom_call.1} parent=119 // pred_check
          %p418 = pneg %p142
        $region126: #{tpu_custom_call.1} parent=119 // pred_check_branch
          %420 = sbr.rel (%p418) target = $region128
        $region127: #{tpu_custom_call.1} parent=119 // pred_region
          _
        $region128: #{tpu_custom_call.1} parent=119 // pred_fallthru
          _
        %p421 = pneg %p38
        %p422 = pneg %p35
        %s423 = sand.u32 %s51, 1
        %s424 = sand.u32 %s51, 1
        %s425 = smul.addr %s424, 40
        %s426 = scalar_lea.vmem [#allocation3], %s425
        %p427 = pneg %p64
        %p428 = pneg %p61
        %p429 = scmp.lt.s32.totalorder %s22, 1
        %s430 = scalar_select %p429, %s22, 1
        %s431 = scalar_lea.vmem %s2, %s430
        %p432 = pneg %p90
        %p433 = pneg %p87
        %p434 = scmp.lt.s32.totalorder %s22, 1
        %s435 = scalar_select %p434, %s22, 1
        %s436 = scalar_lea.vmem %s3, %s435
        %p437 = pneg %p116
        %p438 = pneg %p113
        %s439 = sand.u32 %s129, 1
        %s440 = sand.u32 %s129, 1
        %s441 = smul.addr %s440, 32
        %s442 = scalar_lea.vmem [#allocation4], %s441
        %p443 = pneg %p142
        %p444 = pneg %p139
        %p445 = scmp.lt.s32.totalorder %s22, 1
        %s446 = scalar_select %p445, %s22, 1
        %s447 = scalar_lea.vmem %s5, %s446
        %p448 = pneg %p168
        %p449 = pneg %p165
        %p450 = scmp.lt.s32.totalorder %s22, 1
        %s451 = scalar_select %p450, %s22, 1
        %s452 = scalar_lea.vmem %s6, %s451
        %p453 = pneg %p194
        %p454 = pneg %p191
        %p455 = pneg %p215
        %p456 = pneg %p212
        %p457 = pneg %p241
        %p458 = pneg %p238
        %s459 = sand.u32 %s228, 1
        %s460 = scalar_lea.sflag [#allocation6], %s459
        %s461 = sand.u32 %s228, 1
        %s462 = smul.addr %s461, 256
        %s463 = scalar_lea.vmem [#allocation5], %s462
        %p464 = scmp.lt.s32.totalorder %s22, 1
        %s465 = scalar_select %p464, %s22, 1
        %s466 = scalar_lea.vmem %s2, %s465
        %p467 = scmp.lt.s32.totalorder %s22, 1
        %s468 = scalar_select %p467, %s22, 1
        %s469 = scalar_lea.vmem %s3, %s468
        %p470 = scmp.lt.s32.totalorder %s22, 1
        %s471 = scalar_select %p470, %s22, 1
        %s472 = scalar_lea.vmem %s5, %s471
        %p473 = scmp.lt.s32.totalorder %s22, 1
        %s474 = scalar_select %p473, %s22, 1
        %s475 = scalar_lea.vmem %s6, %s474
        %v476 = vld [vmem:[%s0] sm:$0xff]
        %v477 = vld [vmem:[%s0 + $0x8] sm:$0xff]
        %v478 = vld [vmem:[%s0 + $0x10] sm:$0xff]
        %v479 = vld [vmem:[%s0 + $0x18] sm:$0xff]
        %v480 = vld [vmem:[%s0 + $0x20] sm:$0xff]
        %v481 = vld [vmem:[%s0 + $0x28] sm:$0xff]
        %v482 = vld [vmem:[%s0 + $0x30] sm:$0xff]
        %v483 = vld [vmem:[%s0 + $0x38] sm:$0xff]
        %v484 = vld [vmem:[%s0 + $0x40] sm:$0xff]
        %v485 = vld [vmem:[%s0 + $0x48] sm:$0xff]
        %v486 = vld [vmem:[%s0 + $0x50] sm:$0xff]
        %v487 = vld [vmem:[%s0 + $0x58] sm:$0xff]
        %v488 = vld [vmem:[%s0 + $0x60] sm:$0xff]
        %v489 = vld [vmem:[%s0 + $0x68] sm:$0xff]
        %v490 = vld [vmem:[%s0 + $0x70] sm:$0xff]
        %v491 = vld [vmem:[%s0 + $0x78] sm:$0xff]
        %v492 = vld [vmem:[%s0 + $0x80] sm:$0xff]
        %v493 = vld [vmem:[%s0 + $0x88] sm:$0xff]
        %v494 = vld [vmem:[%s0 + $0x90] sm:$0xff]
        %v495 = vld [vmem:[%s0 + $0x98] sm:$0xff]
        %v496 = vld [vmem:[%s0 + $0xa0] sm:$0xff]
        %v497 = vld [vmem:[%s0 + $0xa8] sm:$0xff]
        %v498 = vld [vmem:[%s0 + $0xb0] sm:$0xff]
        %v499 = vld [vmem:[%s0 + $0xb8] sm:$0xff]
        %v500 = vld [vmem:[%s0 + $0xc0] sm:$0xff]
        %v501 = vld [vmem:[%s0 + $0xc8] sm:$0xff]
        %v502 = vld [vmem:[%s0 + $0xd0] sm:$0xff]
        %v503 = vld [vmem:[%s0 + $0xd8] sm:$0xff]
        %v504 = vld [vmem:[%s0 + $0xe0] sm:$0xff]
        %v505 = vld [vmem:[%s0 + $0xe8] sm:$0xff]
        %v506 = vld [vmem:[%s0 + $0xf0] sm:$0xff]
        %v507 = vld [vmem:[%s0 + $0xf8] sm:$0xff]
        %v508 = vld [vmem:[%s0 + $0x100] sm:$0xff]
        %v509 = vld [vmem:[%s0 + $0x108] sm:$0xff]
        %v510 = vld [vmem:[%s0 + $0x110] sm:$0xff]
        %v511 = vld [vmem:[%s0 + $0x118] sm:$0xff]
        %v512 = vld [vmem:[%s0 + $0x120] sm:$0xff]
        %v513 = vld [vmem:[%s0 + $0x128] sm:$0xff]
        %v514 = vld [vmem:[%s0 + $0x130] sm:$0xff]
        %v515 = vld [vmem:[%s0 + $0x138] sm:$0xff]
        %v516 = vld [vmem:[%s0 + $0x140] sm:$0xff]
        %v517 = vld [vmem:[%s410] sm:$0xff]
        %v518 = vld [vmem:[%s410 + $0x8] sm:$0xff]
        %v519 = vld [vmem:[%s410 + $0x10] sm:$0xff]
        %v520 = vld [vmem:[%s410 + $0x18] sm:$0xff]
        %v521 = vld [vmem:[%s410 + $0x20] sm:$0xff]
        %vm522 = vcmask 326656
        %v524 = vsel %vm522, %v476, 0
        %v527 = vsel %vm522, %v477, 0
        %v530 = vsel %vm522, %v478, 0
        %v533 = vsel %vm522, %v479, 0
        %v536 = vsel %vm522, %v480, 0
        %v539 = vsel %vm522, %v481, 0
        %v542 = vsel %vm522, %v482, 0
        %v545 = vsel %vm522, %v483, 0
        %v548 = vsel %vm522, %v484, 0
        %v551 = vsel %vm522, %v485, 0
        %v554 = vsel %vm522, %v486, 0
        %v557 = vsel %vm522, %v487, 0
        %v560 = vsel %vm522, %v488, 0
        %v563 = vsel %vm522, %v489, 0
        %v566 = vsel %vm522, %v490, 0
        %v569 = vsel %vm522, %v491, 0
        %v572 = vsel %vm522, %v492, 0
        %v575 = vsel %vm522, %v493, 0
        %v578 = vsel %vm522, %v494, 0
        %v581 = vsel %vm522, %v495, 0
        %v584 = vsel %vm522, %v496, 0
        %v587 = vsel %vm522, %v497, 0
        %v590 = vsel %vm522, %v498, 0
        %v593 = vsel %vm522, %v499, 0
        %v596 = vsel %vm522, %v500, 0
        %v599 = vsel %vm522, %v501, 0
        %v602 = vsel %vm522, %v502, 0
        %v605 = vsel %vm522, %v503, 0
        %v608 = vsel %vm522, %v504, 0
        %v611 = vsel %vm522, %v505, 0
        %v614 = vsel %vm522, %v506, 0
        %v617 = vsel %vm522, %v507, 0
        %v620 = vsel %vm522, %v508, 0
        %v623 = vsel %vm522, %v509, 0
        %v626 = vsel %vm522, %v510, 0
        %v629 = vsel %vm522, %v511, 0
        %v632 = vsel %vm522, %v512, 0
        %v635 = vsel %vm522, %v513, 0
        %v638 = vsel %vm522, %v514, 0
        %v641 = vsel %vm522, %v515, 0
        %v644 = vsel %vm522, %v516, 0
        %646 = vmatprep.subr.mxu0 0.0
        %647 = vmatpush1.msra.mxu0 %v517
        %648 = vmatprep.subr.mxu0 0.0
        %649 = vmatpush1.msra.mxu0 %v518
        %650 = vmatprep.subr.mxu0 0.0
        %651 = vmatpush1.msra.mxu0 %v519
        %652 = vmatprep.subr.mxu0 0.0
        %653 = vmatpush1.msra.mxu0 %v520
        %654 = vmatprep.subr.mxu0 0.0
        %655 = vmatpush1.msra.mxu0 %v521
        %656 = vmatprep.subr.mxu0 0.0
        %657 = vmatpush1.msra.mxu0 0.0
        %658 = vmatprep.subr.mxu0 0.0
        %659 = vmatpush1.msra.mxu0 0.0
        %660 = vmatprep.subr.mxu0 0.0
        %661 = vmatpush1.msra.mxu0 0.0
        %662 = vmatprep.subr.mxu0 0.0
        %663 = vmatpush1.msra.mxu0 0.0
        %664 = vmatprep.subr.mxu0 0.0
        %665 = vmatpush1.msra.mxu0 0.0
        %666 = vmatprep.subr.mxu0 0.0
        %667 = vmatpush1.msra.mxu0 0.0
        %668 = vmatprep.subr.mxu0 0.0
        %669 = vmatpush1.msra.mxu0 0.0
        %670 = vmatprep.subr.mxu0 0.0
        %671 = vmatpush1.msra.mxu0 0.0
        %672 = vmatprep.subr.mxu0 0.0
        %673 = vmatpush1.msra.mxu0 0.0
        %674 = vmatprep.subr.mxu0 0.0
        %675 = vmatpush1.msra.mxu0 0.0
        %676 = vmatprep.subr.mxu0 0.0
        %677 = vmatpush1.msra.mxu0 0.0
        %678 = vmatprep.subr.mxu0 0.0
        %679 = vmatpush1.msra.mxu0 0.0
        %680 = vmatprep.subr.mxu0 0.0
        %681 = vmatpush1.msra.mxu0 0.0
        %682 = vmatprep.subr.mxu0 0.0
        %683 = vmatpush1.msra.mxu0 0.0
        %684 = vmatprep.subr.mxu0 0.0
        %685 = vmatpush1.msra.mxu0 0.0
        %686 = vmatprep.subr.mxu0 0.0
        %687 = vmatpush1.msra.mxu0 0.0
        %688 = vmatprep.subr.mxu0 0.0
        %689 = vmatpush1.msra.mxu0 0.0
        %690 = vmatprep.subr.mxu0 0.0
        %691 = vmatpush1.msra.mxu0 0.0
        %692 = vmatprep.subr.mxu0 0.0
        %693 = vmatpush1.msra.mxu0 0.0
        %694 = vmatprep.subr.mxu0 0.0
        %695 = vmatpush1.msra.mxu0 0.0
        %696 = vmatprep.subr.mxu0 0.0
        %697 = vmatpush1.msra.mxu0 0.0
        %698 = vmatprep.subr.mxu0 0.0
        %699 = vmatpush1.msra.mxu0 0.0
        %700 = vmatprep.subr.mxu0 0.0
        %701 = vmatpush1.msra.mxu0 0.0
        %702 = vmatprep.subr.mxu0 0.0
        %703 = vmatpush1.msra.mxu0 0.0
        %704 = vmatprep.subr.mxu0 0.0
        %705 = vmatpush1.msra.mxu0 0.0
        %706 = vmatprep.subr.mxu0 0.0
        %707 = vmatpush1.msra.mxu0 0.0
        %708 = vmatprep.subr.mxu0 0.0
        %709 = vmatpush1.msra.mxu0 0.0
        %710 = vmatprep.mubr.f32.mxu0 0.0
        %711 = vmatmul.mubr.f32.gmra.mrb[0].mxu0 %v524
        %v712 = vpop.f32.mrb[0].mxu0
        %v713 = vadd.f32 0.0, %v712
        %v714 = vpop.f32.mrb[0].mxu0
        %715 = vmatprep.mubr.f32.mxu0 0.0
        %716 = vmatmul.mubr.f32.gmra.mrb[0].mxu0 %v527
        %v717 = vpop.f32.mrb[0].mxu0
        %v718 = vadd.f32 0.0, %v717
        %v719 = vpop.f32.mrb[0].mxu0
        %720 = vmatprep.mubr.f32.mxu0 0.0
        %721 = vmatmul.mubr.f32.gmra.mrb[0].mxu0 %v530
        %v722 = vpop.f32.mrb[0].mxu0
        %v723 = vadd.f32 0.0, %v722
        %v724 = vpop.f32.mrb[0].mxu0
        %725 = vmatprep.mubr.f32.mxu0 0.0
        %726 = vmatmul.mubr.f32.gmra.mrb[0].mxu0 %v533
        %v727 = vpop.f32.mrb[0].mxu0
        %v728 = vadd.f32 0.0, %v727
        %v729 = vpop.f32.mrb[0].mxu0
        %730 = vmatprep.mubr.f32.mxu0 0.0
        %731 = vmatmul.mubr.f32.gmra.mrb[0].mxu0 %v536
        %v732 = vpop.f32.mrb[0].mxu0
        %v733 = vadd.f32 0.0, %v732
        %v734 = vpop.f32.mrb[0].mxu0
        %735 = vmatprep.mubr.f32.mxu0 0.0
        %736 = vmatmul.mubr.f32.gmra.mrb[0].mxu0 %v539
        %v737 = vpop.f32.mrb[0].mxu0
        %v738 = vadd.f32 0.0, %v737
        %v739 = vpop.f32.mrb[0].mxu0
        %740 = vmatprep.mubr.f32.mxu0 0.0
        %741 = vmatmul.mubr.f32.gmra.mrb[0].mxu0 %v542
        %v742 = vpop.f32.mrb[0].mxu0
        %v743 = vadd.f32 0.0, %v742
        %v744 = vpop.f32.mrb[0].mxu0
        %745 = vmatprep.mubr.f32.mxu0 0.0
        %746 = vmatmul.mubr.f32.gmra.mrb[0].mxu0 %v545
        %v747 = vpop.f32.mrb[0].mxu0
        %v748 = vadd.f32 0.0, %v747
        %v749 = vpop.f32.mrb[0].mxu0
        %750 = vmatprep.mubr.f32.mxu0 0.0
        %751 = vmatmul.mubr.f32.gmra.mrb[0].mxu0 %v548
        %v752 = vpop.f32.mrb[0].mxu0
        %v753 = vadd.f32 0.0, %v752
        %v754 = vpop.f32.mrb[0].mxu0
        %755 = vmatprep.mubr.f32.mxu0 0.0
        %756 = vmatmul.mubr.f32.gmra.mrb[0].mxu0 %v551
        %v757 = vpop.f32.mrb[0].mxu0
        %v758 = vadd.f32 0.0, %v757
        %v759 = vpop.f32.mrb[0].mxu0
        %760 = vmatprep.mubr.f32.mxu0 0.0
        %761 = vmatmul.mubr.f32.gmra.mrb[0].mxu0 %v554
        %v762 = vpop.f32.mrb[0].mxu0
        %v763 = vadd.f32 0.0, %v762
        %v764 = vpop.f32.mrb[0].mxu0
        %765 = vmatprep.mubr.f32.mxu0 0.0
        %766 = vmatmul.mubr.f32.gmra.mrb[0].mxu0 %v557
        %v767 = vpop.f32.mrb[0].mxu0
        %v768 = vadd.f32 0.0, %v767
        %v769 = vpop.f32.mrb[0].mxu0
        %770 = vmatprep.mubr.f32.mxu0 0.0
        %771 = vmatmul.mubr.f32.gmra.mrb[0].mxu0 %v560
        %v772 = vpop.f32.mrb[0].mxu0
        %v773 = vadd.f32 0.0, %v772
        %v774 = vpop.f32.mrb[0].mxu0
        %775 = vmatprep.mubr.f32.mxu0 0.0
        %776 = vmatmul.mubr.f32.gmra.mrb[0].mxu0 %v563
        %v777 = vpop.f32.mrb[0].mxu0
        %v778 = vadd.f32 0.0, %v777
        %v779 = vpop.f32.mrb[0].mxu0
        %780 = vmatprep.mubr.f32.mxu0 0.0
        %781 = vmatmul.mubr.f32.gmra.mrb[0].mxu0 %v566
        %v782 = vpop.f32.mrb[0].mxu0
        %v783 = vadd.f32 0.0, %v782
        %v784 = vpop.f32.mrb[0].mxu0
        %785 = vmatprep.mubr.f32.mxu0 0.0
        %786 = vmatmul.mubr.f32.gmra.mrb[0].mxu0 %v569
        %v787 = vpop.f32.mrb[0].mxu0
        %v788 = vadd.f32 0.0, %v787
        %v789 = vpop.f32.mrb[0].mxu0
        %790 = vmatprep.mubr.f32.mxu0 0.0
        %791 = vmatmul.mubr.f32.gmra.mrb[0].mxu0 %v572
        %v792 = vpop.f32.mrb[0].mxu0
        %v793 = vadd.f32 0.0, %v792
        %v794 = vpop.f32.mrb[0].mxu0
        %795 = vmatprep.mubr.f32.mxu0 0.0
        %796 = vmatmul.mubr.f32.gmra.mrb[0].mxu0 %v575
        %v797 = vpop.f32.mrb[0].mxu0
        %v798 = vadd.f32 0.0, %v797
        %v799 = vpop.f32.mrb[0].mxu0
        %800 = vmatprep.mubr.f32.mxu0 0.0
        %801 = vmatmul.mubr.f32.gmra.mrb[0].mxu0 %v578
        %v802 = vpop.f32.mrb[0].mxu0
        %v803 = vadd.f32 0.0, %v802
        %v804 = vpop.f32.mrb[0].mxu0
        %805 = vmatprep.mubr.f32.mxu0 0.0
        %806 = vmatmul.mubr.f32.gmra.mrb[0].mxu0 %v581
        %v807 = vpop.f32.mrb[0].mxu0
        %v808 = vadd.f32 0.0, %v807
        %v809 = vpop.f32.mrb[0].mxu0
        %810 = vmatprep.mubr.f32.mxu0 0.0
        %811 = vmatmul.mubr.f32.gmra.mrb[0].mxu0 %v584
        %v812 = vpop.f32.mrb[0].mxu0
        %v813 = vadd.f32 0.0, %v812
        %v814 = vpop.f32.mrb[0].mxu0
        %815 = vmatprep.mubr.f32.mxu0 0.0
        %816 = vmatmul.mubr.f32.gmra.mrb[0].mxu0 %v587
        %v817 = vpop.f32.mrb[0].mxu0
        %v818 = vadd.f32 0.0, %v817
        %v819 = vpop.f32.mrb[0].mxu0
        %820 = vmatprep.mubr.f32.mxu0 0.0
        %821 = vmatmul.mubr.f32.gmra.mrb[0].mxu0 %v590
        %v822 = vpop.f32.mrb[0].mxu0
        %v823 = vadd.f32 0.0, %v822
        %v824 = vpop.f32.mrb[0].mxu0
        %825 = vmatprep.mubr.f32.mxu0 0.0
        %826 = vmatmul.mubr.f32.gmra.mrb[0].mxu0 %v593
        %v827 = vpop.f32.mrb[0].mxu0
        %v828 = vadd.f32 0.0, %v827
        %v829 = vpop.f32.mrb[0].mxu0
        %830 = vmatprep.mubr.f32.mxu0 0.0
        %831 = vmatmul.mubr.f32.gmra.mrb[0].mxu0 %v596
        %v832 = vpop.f32.mrb[0].mxu0
        %v833 = vadd.f32 0.0, %v832
        %v834 = vpop.f32.mrb[0].mxu0
        %835 = vmatprep.mubr.f32.mxu0 0.0
        %836 = vmatmul.mubr.f32.gmra.mrb[0].mxu0 %v599
        %v837 = vpop.f32.mrb[0].mxu0
        %v838 = vadd.f32 0.0, %v837
        %v839 = vpop.f32.mrb[0].mxu0
        %840 = vmatprep.mubr.f32.mxu0 0.0
        %841 = vmatmul.mubr.f32.gmra.mrb[0].mxu0 %v602
        %v842 = vpop.f32.mrb[0].mxu0
        %v843 = vadd.f32 0.0, %v842
        %v844 = vpop.f32.mrb[0].mxu0
        %845 = vmatprep.mubr.f32.mxu0 0.0
        %846 = vmatmul.mubr.f32.gmra.mrb[0].mxu0 %v605
        %v847 = vpop.f32.mrb[0].mxu0
        %v848 = vadd.f32 0.0, %v847
        %v849 = vpop.f32.mrb[0].mxu0
        %850 = vmatprep.mubr.f32.mxu0 0.0
        %851 = vmatmul.mubr.f32.gmra.mrb[0].mxu0 %v608
        %v852 = vpop.f32.mrb[0].mxu0
        %v853 = vadd.f32 0.0, %v852
        %v854 = vpop.f32.mrb[0].mxu0
        %855 = vmatprep.mubr.f32.mxu0 0.0
        %856 = vmatmul.mubr.f32.gmra.mrb[0].mxu0 %v611
        %v857 = vpop.f32.mrb[0].mxu0
        %v858 = vadd.f32 0.0, %v857
        %v859 = vpop.f32.mrb[0].mxu0
        %860 = vmatprep.mubr.f32.mxu0 0.0
        %861 = vmatmul.mubr.f32.gmra.mrb[0].mxu0 %v614
        %v862 = vpop.f32.mrb[0].mxu0
        %v863 = vadd.f32 0.0, %v862
        %v864 = vpop.f32.mrb[0].mxu0
        %865 = vmatprep.mubr.f32.mxu0 0.0
        %866 = vmatmul.mubr.f32.gmra.mrb[0].mxu0 %v617
        %v867 = vpop.f32.mrb[0].mxu0
        %v868 = vadd.f32 0.0, %v867
        %v869 = vpop.f32.mrb[0].mxu0
        %870 = vmatprep.mubr.f32.mxu0 0.0
        %871 = vmatmul.mubr.f32.gmra.mrb[0].mxu0 %v620
        %v872 = vpop.f32.mrb[0].mxu0
        %v873 = vadd.f32 0.0, %v872
        %v874 = vpop.f32.mrb[0].mxu0
        %875 = vmatprep.mubr.f32.mxu0 0.0
        %876 = vmatmul.mubr.f32.gmra.mrb[0].mxu0 %v623
        %v877 = vpop.f32.mrb[0].mxu0
        %v878 = vadd.f32 0.0, %v877
        %v879 = vpop.f32.mrb[0].mxu0
        %880 = vmatprep.mubr.f32.mxu0 0.0
        %881 = vmatmul.mubr.f32.gmra.mrb[0].mxu0 %v626
        %v882 = vpop.f32.mrb[0].mxu0
        %v883 = vadd.f32 0.0, %v882
        %v884 = vpop.f32.mrb[0].mxu0
        %885 = vmatprep.mubr.f32.mxu0 0.0
        %886 = vmatmul.mubr.f32.gmra.mrb[0].mxu0 %v629
        %v887 = vpop.f32.mrb[0].mxu0
        %v888 = vadd.f32 0.0, %v887
        %v889 = vpop.f32.mrb[0].mxu0
        %890 = vmatprep.mubr.f32.mxu0 0.0
        %891 = vmatmul.mubr.f32.gmra.mrb[0].mxu0 %v632
        %v892 = vpop.f32.mrb[0].mxu0
        %v893 = vadd.f32 0.0, %v892
        %v894 = vpop.f32.mrb[0].mxu0
        %895 = vmatprep.mubr.f32.mxu0 0.0
        %896 = vmatmul.mubr.f32.gmra.mrb[0].mxu0 %v635
        %v897 = vpop.f32.mrb[0].mxu0
        %v898 = vadd.f32 0.0, %v897
        %v899 = vpop.f32.mrb[0].mxu0
        %900 = vmatprep.mubr.f32.mxu0 0.0
        %901 = vmatmul.mubr.f32.gmra.mrb[0].mxu0 %v638
        %v902 = vpop.f32.mrb[0].mxu0
        %v903 = vadd.f32 0.0, %v902
        %v904 = vpop.f32.mrb[0].mxu0
        %905 = vmatprep.mubr.f32.mxu0 0.0
        %906 = vmatmul.mubr.f32.gmra.mrb[0].mxu0 %v641
        %v907 = vpop.f32.mrb[0].mxu0
        %v908 = vadd.f32 0.0, %v907
        %v909 = vpop.f32.mrb[0].mxu0
        %910 = vmatprep.mubr.f32.mxu0 0.0
        %911 = vmatmul.mubr.f32.gmra.mrb[0].mxu0 %v644
        %v912 = vpop.f32.mrb[0].mxu0
        %v913 = vadd.f32 0.0, %v912
        %v914 = vpop.f32.mrb[0].mxu0
        %915 = vdwg.mxu0
        %v916 = vadd.f32 %v713, %v718
        %v917 = vadd.f32 %v916, %v723
        %v918 = vadd.f32 %v917, %v728
        %v919 = vadd.f32 %v918, %v733
        %v920 = vadd.f32 %v919, %v738
        %v921 = vadd.f32 %v920, %v743
        %v922 = vadd.f32 %v921, %v748
        %v923 = vadd.f32 %v922, %v753
        %v924 = vadd.f32 %v923, %v758
        %v925 = vadd.f32 %v924, %v763
        %v926 = vadd.f32 %v925, %v768
        %v927 = vadd.f32 %v926, %v773
        %v928 = vadd.f32 %v927, %v778
        %v929 = vadd.f32 %v928, %v783
        %v930 = vadd.f32 %v929, %v788
        %v931 = vadd.f32 %v930, %v793
        %v932 = vadd.f32 %v931, %v798
        %v933 = vadd.f32 %v932, %v803
        %v934 = vadd.f32 %v933, %v808
        %v935 = vadd.f32 %v934, %v813
        %v936 = vadd.f32 %v935, %v818
        %v937 = vadd.f32 %v936, %v823
        %v938 = vadd.f32 %v937, %v828
        %v939 = vadd.f32 %v938, %v833
        %v940 = vadd.f32 %v939, %v838
        %v941 = vadd.f32 %v940, %v843
        %v942 = vadd.f32 %v941, %v848
        %v943 = vadd.f32 %v942, %v853
        %v944 = vadd.f32 %v943, %v858
        %v945 = vadd.f32 %v944, %v863
        %v946 = vadd.f32 %v945, %v868
        %v947 = vadd.f32 %v946, %v873
        %v948 = vadd.f32 %v947, %v878
        %v949 = vadd.f32 %v948, %v883
        %v950 = vadd.f32 %v949, %v888
        %v951 = vadd.f32 %v950, %v893
        %v952 = vadd.f32 %v951, %v898
        %v953 = vadd.f32 %v952, %v903
        %v954 = vadd.f32 %v953, %v908
        %v955 = vadd.f32 %v954, %v913
        %v956 = vrot.slane %v955, 4
        %v957 = vadd.f32 %v955, %v956
        %v958 = vrot.slane %v957, 2
        %v959 = vadd.f32 %v957, %v958
        %v960 = vrot.slane %v959, 1
        %v961 = vadd.f32 %v959, %v960
        %v962 = vmul.f32 %v961, 0.0051020407
        %v963 = vmul.f32 %v713, %v713
        %v964 = vmul.f32 %v718, %v718
        %v965 = vmul.f32 %v723, %v723
        %v966 = vmul.f32 %v728, %v728
        %v967 = vmul.f32 %v733, %v733
        %v968 = vmul.f32 %v738, %v738
        %v969 = vmul.f32 %v743, %v743
        %v970 = vmul.f32 %v748, %v748
        %v971 = vmul.f32 %v753, %v753
        %v972 = vmul.f32 %v758, %v758
        %v973 = vmul.f32 %v763, %v763
        %v974 = vmul.f32 %v768, %v768
        %v975 = vmul.f32 %v773, %v773
        %v976 = vmul.f32 %v778, %v778
        %v977 = vmul.f32 %v783, %v783
        %v978 = vmul.f32 %v788, %v788
        %v979 = vmul.f32 %v793, %v793
        %v980 = vmul.f32 %v798, %v798
        %v981 = vmul.f32 %v803, %v803
        %v982 = vmul.f32 %v808, %v808
        %v983 = vmul.f32 %v813, %v813
        %v984 = vmul.f32 %v818, %v818
        %v985 = vmul.f32 %v823, %v823
        %v986 = vmul.f32 %v828, %v828
        %v987 = vmul.f32 %v833, %v833
        %v988 = vmul.f32 %v838, %v838
        %v989 = vmul.f32 %v843, %v843
        %v990 = vmul.f32 %v848, %v848
        %v991 = vmul.f32 %v853, %v853
        %v992 = vmul.f32 %v858, %v858
        %v993 = vmul.f32 %v863, %v863
        %v994 = vmul.f32 %v868, %v868
        %v995 = vmul.f32 %v873, %v873
        %v996 = vmul.f32 %v878, %v878
        %v997 = vmul.f32 %v883, %v883
        %v998 = vmul.f32 %v888, %v888
        %v999 = vmul.f32 %v893, %v893
        %v1000 = vmul.f32 %v898, %v898
        %v1001 = vmul.f32 %v903, %v903
        %v1002 = vmul.f32 %v908, %v908
        %v1003 = vmul.f32 %v913, %v913
        %v1004 = vadd.f32 %v963, %v964
        %v1005 = vadd.f32 %v1004, %v965
        %v1006 = vadd.f32 %v1005, %v966
        %v1007 = vadd.f32 %v1006, %v967
        %v1008 = vadd.f32 %v1007, %v968
        %v1009 = vadd.f32 %v1008, %v969
        %v1010 = vadd.f32 %v1009, %v970
        %v1011 = vadd.f32 %v1010, %v971
        %v1012 = vadd.f32 %v1011, %v972
        %v1013 = vadd.f32 %v1012, %v973
        %v1014 = vadd.f32 %v1013, %v974
        %v1015 = vadd.f32 %v1014, %v975
        %v1016 = vadd.f32 %v1015, %v976
        %v1017 = vadd.f32 %v1016, %v977
        %v1018 = vadd.f32 %v1017, %v978
        %v1019 = vadd.f32 %v1018, %v979
        %v1020 = vadd.f32 %v1019, %v980
        %v1021 = vadd.f32 %v1020, %v981
        %v1022 = vadd.f32 %v1021, %v982
        %v1023 = vadd.f32 %v1022, %v983
        %v1024 = vadd.f32 %v1023, %v984
        %v1025 = vadd.f32 %v1024, %v985
        %v1026 = vadd.f32 %v1025, %v986
        %v1027 = vadd.f32 %v1026, %v987
        %v1028 = vadd.f32 %v1027, %v988
        %v1029 = vadd.f32 %v1028, %v989
        %v1030 = vadd.f32 %v1029, %v990
        %v1031 = vadd.f32 %v1030, %v991
        %v1032 = vadd.f32 %v1031, %v992
        %v1033 = vadd.f32 %v1032, %v993
        %v1034 = vadd.f32 %v1033, %v994
        %v1035 = vadd.f32 %v1034, %v995
        %v1036 = vadd.f32 %v1035, %v996
        %v1037 = vadd.f32 %v1036, %v997
        %v1038 = vadd.f32 %v1037, %v998
        %v1039 = vadd.f32 %v1038, %v999
        %v1040 = vadd.f32 %v1039, %v1000
        %v1041 = vadd.f32 %v1040, %v1001
        %v1042 = vadd.f32 %v1041, %v1002
        %v1043 = vadd.f32 %v1042, %v1003
        %v1044 = vrot.slane %v1043, 4
        %v1045 = vadd.f32 %v1043, %v1044
        %v1046 = vrot.slane %v1045, 2
        %v1047 = vadd.f32 %v1045, %v1046
        %v1048 = vrot.slane %v1047, 1
        %v1049 = vadd.f32 %v1047, %v1048
        %v1050 = vmul.f32 %v1049, 0.0051020407
        %v1051 = vmul.f32 %v962, %v962
        %v1052 = vsub.f32 %v1050, %v1051
        %v1053 = vadd.f32 %v1052, 1e-05
        %v1054 = vrsqrt.pop %v1053
        %v1055 = vld [vmem:[%s466] sm:$0x1]
        %v1056 = vmul.f32 %v1054, %v1055
        %v1057 = vsub.f32 %v713, %v962
        %v1058 = vsub.f32 %v718, %v962
        %v1059 = vsub.f32 %v723, %v962
        %v1060 = vsub.f32 %v728, %v962
        %v1061 = vsub.f32 %v733, %v962
        %v1062 = vsub.f32 %v738, %v962
        %v1063 = vsub.f32 %v743, %v962
        %v1064 = vsub.f32 %v748, %v962
        %v1065 = vsub.f32 %v753, %v962
        %v1066 = vsub.f32 %v758, %v962
        %v1067 = vsub.f32 %v763, %v962
        %v1068 = vsub.f32 %v768, %v962
        %v1069 = vsub.f32 %v773, %v962
        %v1070 = vsub.f32 %v778, %v962
        %v1071 = vsub.f32 %v783, %v962
        %v1072 = vsub.f32 %v788, %v962
        %v1073 = vsub.f32 %v793, %v962
        %v1074 = vsub.f32 %v798, %v962
        %v1075 = vsub.f32 %v803, %v962
        %v1076 = vsub.f32 %v808, %v962
        %v1077 = vsub.f32 %v813, %v962
        %v1078 = vsub.f32 %v818, %v962
        %v1079 = vsub.f32 %v823, %v962
        %v1080 = vsub.f32 %v828, %v962
        %v1081 = vsub.f32 %v833, %v962
        %v1082 = vsub.f32 %v838, %v962
        %v1083 = vsub.f32 %v843, %v962
        %v1084 = vsub.f32 %v848, %v962
        %v1085 = vsub.f32 %v853, %v962
        %v1086 = vsub.f32 %v858, %v962
        %v1087 = vsub.f32 %v863, %v962
        %v1088 = vsub.f32 %v868, %v962
        %v1089 = vsub.f32 %v873, %v962
        %v1090 = vsub.f32 %v878, %v962
        %v1091 = vsub.f32 %v883, %v962
        %v1092 = vsub.f32 %v888, %v962
        %v1093 = vsub.f32 %v893, %v962
        %v1094 = vsub.f32 %v898, %v962
        %v1095 = vsub.f32 %v903, %v962
        %v1096 = vsub.f32 %v908, %v962
        %v1097 = vsub.f32 %v913, %v962
        %v1098 = vlaneseq
        %v1099 = vshrl.u32 %v1098, 7
        %v1100 = vsub.s32 0, %v1099
        %v1101 = vrot.slane %v1056, %v1100
        %v1102 = vmul.f32 %v1057, %v1101
        %v1103 = vmul.f32 %v1058, %v1101
        %v1104 = vmul.f32 %v1059, %v1101
        %v1105 = vmul.f32 %v1060, %v1101
        %v1106 = vmul.f32 %v1061, %v1101
        %v1107 = vmul.f32 %v1062, %v1101
        %v1108 = vmul.f32 %v1063, %v1101
        %v1109 = vmul.f32 %v1064, %v1101
        %v1110 = vmul.f32 %v1065, %v1101
        %v1111 = vmul.f32 %v1066, %v1101
        %v1112 = vmul.f32 %v1067, %v1101
        %v1113 = vmul.f32 %v1068, %v1101
        %v1114 = vmul.f32 %v1069, %v1101
        %v1115 = vmul.f32 %v1070, %v1101
        %v1116 = vmul.f32 %v1071, %v1101
        %v1117 = vmul.f32 %v1072, %v1101
        %v1118 = vmul.f32 %v1073, %v1101
        %v1119 = vmul.f32 %v1074, %v1101
        %v1120 = vmul.f32 %v1075, %v1101
        %v1121 = vmul.f32 %v1076, %v1101
        %v1122 = vmul.f32 %v1077, %v1101
        %v1123 = vmul.f32 %v1078, %v1101
        %v1124 = vmul.f32 %v1079, %v1101
        %v1125 = vmul.f32 %v1080, %v1101
        %v1126 = vmul.f32 %v1081, %v1101
        %v1127 = vmul.f32 %v1082, %v1101
        %v1128 = vmul.f32 %v1083, %v1101
        %v1129 = vmul.f32 %v1084, %v1101
        %v1130 = vmul.f32 %v1085, %v1101
        %v1131 = vmul.f32 %v1086, %v1101
        %v1132 = vmul.f32 %v1087, %v1101
        %v1133 = vmul.f32 %v1088, %v1101
        %v1134 = vmul.f32 %v1089, %v1101
        %v1135 = vmul.f32 %v1090, %v1101
        %v1136 = vmul.f32 %v1091, %v1101
        %v1137 = vmul.f32 %v1092, %v1101
        %v1138 = vmul.f32 %v1093, %v1101
        %v1139 = vmul.f32 %v1094, %v1101
        %v1140 = vmul.f32 %v1095, %v1101
        %v1141 = vmul.f32 %v1096, %v1101
        %v1142 = vmul.f32 %v1097, %v1101
        %v1143 = vld [vmem:[%s469] sm:$0x1]
        %v1145 = vlaneseq
        %v1146 = vshrl.u32 %v1145, 7
        %v1147 = vsub.s32 0, %v1146
        %v1148 = vrot.slane %v1143, %v1147
        %v1150 = vadd.f32 %v1102, %v1148
        %v1151 = vadd.f32 %v1103, %v1148
        %v1152 = vadd.f32 %v1104, %v1148
        %v1153 = vadd.f32 %v1105, %v1148
        %v1154 = vadd.f32 %v1106, %v1148
        %v1155 = vadd.f32 %v1107, %v1148
        %v1156 = vadd.f32 %v1108, %v1148
        %v1157 = vadd.f32 %v1109, %v1148
        %v1158 = vadd.f32 %v1110, %v1148
        %v1159 = vadd.f32 %v1111, %v1148
        %v1160 = vadd.f32 %v1112, %v1148
        %v1161 = vadd.f32 %v1113, %v1148
        %v1162 = vadd.f32 %v1114, %v1148
        %v1163 = vadd.f32 %v1115, %v1148
        %v1164 = vadd.f32 %v1116, %v1148
        %v1165 = vadd.f32 %v1117, %v1148
        %v1166 = vadd.f32 %v1118, %v1148
        %v1167 = vadd.f32 %v1119, %v1148
        %v1168 = vadd.f32 %v1120, %v1148
        %v1169 = vadd.f32 %v1121, %v1148
        %v1170 = vadd.f32 %v1122, %v1148
        %v1171 = vadd.f32 %v1123, %v1148
        %v1172 = vadd.f32 %v1124, %v1148
        %v1173 = vadd.f32 %v1125, %v1148
        %v1174 = vadd.f32 %v1126, %v1148
        %v1175 = vadd.f32 %v1127, %v1148
        %v1176 = vadd.f32 %v1128, %v1148
        %v1177 = vadd.f32 %v1129, %v1148
        %v1178 = vadd.f32 %v1130, %v1148
        %v1179 = vadd.f32 %v1131, %v1148
        %v1180 = vadd.f32 %v1132, %v1148
        %v1181 = vadd.f32 %v1133, %v1148
        %v1182 = vadd.f32 %v1134, %v1148
        %v1183 = vadd.f32 %v1135, %v1148
        %v1184 = vadd.f32 %v1136, %v1148
        %v1185 = vadd.f32 %v1137, %v1148
        %v1186 = vadd.f32 %v1138, %v1148
        %v1187 = vadd.f32 %v1139, %v1148
        %v1188 = vadd.f32 %v1140, %v1148
        %v1189 = vadd.f32 %v1141, %v1148
        %v1190 = vadd.f32 %v1142, %v1148
        %v1191 = vmax.f32 %v1150, 0.0
        %v1192 = vmax.f32 %v1151, 0.0
        %v1193 = vmax.f32 %v1152, 0.0
        %v1194 = vmax.f32 %v1153, 0.0
        %v1195 = vmax.f32 %v1154, 0.0
        %v1196 = vmax.f32 %v1155, 0.0
        %v1197 = vmax.f32 %v1156, 0.0
        %v1198 = vmax.f32 %v1157, 0.0
        %v1199 = vmax.f32 %v1158, 0.0
        %v1200 = vmax.f32 %v1159, 0.0
        %v1201 = vmax.f32 %v1160, 0.0
        %v1202 = vmax.f32 %v1161, 0.0
        %v1203 = vmax.f32 %v1162, 0.0
        %v1204 = vmax.f32 %v1163, 0.0
        %v1205 = vmax.f32 %v1164, 0.0
        %v1206 = vmax.f32 %v1165, 0.0
        %v1207 = vmax.f32 %v1166, 0.0
        %v1208 = vmax.f32 %v1167, 0.0
        %v1209 = vmax.f32 %v1168, 0.0
        %v1210 = vmax.f32 %v1169, 0.0
        %v1211 = vmax.f32 %v1170, 0.0
        %v1212 = vmax.f32 %v1171, 0.0
        %v1213 = vmax.f32 %v1172, 0.0
        %v1214 = vmax.f32 %v1173, 0.0
        %v1215 = vmax.f32 %v1174, 0.0
        %v1216 = vmax.f32 %v1175, 0.0
        %v1217 = vmax.f32 %v1176, 0.0
        %v1218 = vmax.f32 %v1177, 0.0
        %v1219 = vmax.f32 %v1178, 0.0
        %v1220 = vmax.f32 %v1179, 0.0
        %v1221 = vmax.f32 %v1180, 0.0
        %v1222 = vmax.f32 %v1181, 0.0
        %v1223 = vmax.f32 %v1182, 0.0
        %v1224 = vmax.f32 %v1183, 0.0
        %v1225 = vmax.f32 %v1184, 0.0
        %v1226 = vmax.f32 %v1185, 0.0
        %v1227 = vmax.f32 %v1186, 0.0
        %v1228 = vmax.f32 %v1187, 0.0
        %v1229 = vmax.f32 %v1188, 0.0
        %v1230 = vmax.f32 %v1189, 0.0
        %v1231 = vmax.f32 %v1190, 0.0
        %v1232 = vld [vmem:[%s7] sm:$0xff]
        %v1233 = vld [vmem:[%s7 + $0x8] sm:$0xff]
        %v1234 = vld [vmem:[%s7 + $0x10] sm:$0xff]
        %v1235 = vld [vmem:[%s7 + $0x18] sm:$0xff]
        %v1236 = vld [vmem:[%s7 + $0x20] sm:$0xff]
        %v1237 = vld [vmem:[%s7 + $0x28] sm:$0xff]
        %v1238 = vld [vmem:[%s7 + $0x30] sm:$0xff]
        %v1239 = vld [vmem:[%s7 + $0x38] sm:$0xff]
        %v1240 = vld [vmem:[%s7 + $0x40] sm:$0xff]
        %v1241 = vld [vmem:[%s7 + $0x48] sm:$0xff]
        %v1242 = vld [vmem:[%s7 + $0x50] sm:$0xff]
        %v1243 = vld [vmem:[%s7 + $0x58] sm:$0xff]
        %v1244 = vld [vmem:[%s7 + $0x60] sm:$0xff]
        %v1245 = vld [vmem:[%s7 + $0x68] sm:$0xff]
        %v1246 = vld [vmem:[%s7 + $0x70] sm:$0xff]
        %v1247 = vld [vmem:[%s7 + $0x78] sm:$0xff]
        %v1248 = vld [vmem:[%s7 + $0x80] sm:$0xff]
        %v1249 = vld [vmem:[%s7 + $0x88] sm:$0xff]
        %v1250 = vld [vmem:[%s7 + $0x90] sm:$0xff]
        %v1251 = vld [vmem:[%s7 + $0x98] sm:$0xff]
        %v1252 = vld [vmem:[%s7 + $0xa0] sm:$0xff]
        %v1253 = vld [vmem:[%s7 + $0xa8] sm:$0xff]
        %v1254 = vld [vmem:[%s7 + $0xb0] sm:$0xff]
        %v1255 = vld [vmem:[%s7 + $0xb8] sm:$0xff]
        %v1256 = vld [vmem:[%s7 + $0xc0] sm:$0xff]
        %v1257 = vld [vmem:[%s7 + $0xc8] sm:$0xff]
        %v1258 = vld [vmem:[%s7 + $0xd0] sm:$0xff]
        %v1259 = vld [vmem:[%s7 + $0xd8] sm:$0xff]
        %v1260 = vld [vmem:[%s7 + $0xe0] sm:$0xff]
        %v1261 = vld [vmem:[%s7 + $0xe8] sm:$0xff]
        %v1262 = vld [vmem:[%s7 + $0xf0] sm:$0xff]
        %v1263 = vld [vmem:[%s7 + $0xf8] sm:$0xff]
        %v1264 = vld [vmem:[%s7 + $0x100] sm:$0xff]
        %v1265 = vld [vmem:[%s7 + $0x108] sm:$0xff]
        %v1266 = vld [vmem:[%s7 + $0x110] sm:$0xff]
        %v1267 = vld [vmem:[%s7 + $0x118] sm:$0xff]
        %v1268 = vld [vmem:[%s7 + $0x120] sm:$0xff]
        %v1269 = vld [vmem:[%s7 + $0x128] sm:$0xff]
        %v1270 = vld [vmem:[%s7 + $0x130] sm:$0xff]
        %v1271 = vld [vmem:[%s7 + $0x138] sm:$0xff]
        %v1272 = vld [vmem:[%s7 + $0x140] sm:$0xff]
        %1274 = vset.pattern.permute.xlu0 0
        %1275 = vperm.xlu0 %1274, %v1232
        %v1276 = vpop.permute.xlu0 %1275
        %1279 = vset.pattern.permute.xlu0 0
        %1280 = vperm.xlu0 %1279, %v1233
        %v1281 = vpop.permute.xlu0 %1280
        %1284 = vset.pattern.permute.xlu0 0
        %1285 = vperm.xlu0 %1284, %v1234
        %v1286 = vpop.permute.xlu0 %1285
        %1289 = vset.pattern.permute.xlu0 0
        %1290 = vperm.xlu0 %1289, %v1235
        %v1291 = vpop.permute.xlu0 %1290
        %1294 = vset.pattern.permute.xlu0 0
        %1295 = vperm.xlu0 %1294, %v1236
        %v1296 = vpop.permute.xlu0 %1295
        %1299 = vset.pattern.permute.xlu0 0
        %1300 = vperm.xlu0 %1299, %v1237
        %v1301 = vpop.permute.xlu0 %1300
        %1304 = vset.pattern.permute.xlu0 0
        %1305 = vperm.xlu0 %1304, %v1238
        %v1306 = vpop.permute.xlu0 %1305
        %1309 = vset.pattern.permute.xlu0 0
        %1310 = vperm.xlu0 %1309, %v1239
        %v1311 = vpop.permute.xlu0 %1310
        %1314 = vset.pattern.permute.xlu0 0
        %1315 = vperm.xlu0 %1314, %v1240
        %v1316 = vpop.permute.xlu0 %1315
        %1319 = vset.pattern.permute.xlu0 0
        %1320 = vperm.xlu0 %1319, %v1241
        %v1321 = vpop.permute.xlu0 %1320
        %1324 = vset.pattern.permute.xlu0 0
        %1325 = vperm.xlu0 %1324, %v1242
        %v1326 = vpop.permute.xlu0 %1325
        %1329 = vset.pattern.permute.xlu0 0
        %1330 = vperm.xlu0 %1329, %v1243
        %v1331 = vpop.permute.xlu0 %1330
        %1334 = vset.pattern.permute.xlu0 0
        %1335 = vperm.xlu0 %1334, %v1244
        %v1336 = vpop.permute.xlu0 %1335
        %1339 = vset.pattern.permute.xlu0 0
        %1340 = vperm.xlu0 %1339, %v1245
        %v1341 = vpop.permute.xlu0 %1340
        %1344 = vset.pattern.permute.xlu0 0
        %1345 = vperm.xlu0 %1344, %v1246
        %v1346 = vpop.permute.xlu0 %1345
        %1349 = vset.pattern.permute.xlu0 0
        %1350 = vperm.xlu0 %1349, %v1247
        %v1351 = vpop.permute.xlu0 %1350
        %1354 = vset.pattern.permute.xlu0 0
        %1355 = vperm.xlu0 %1354, %v1248
        %v1356 = vpop.permute.xlu0 %1355
        %1359 = vset.pattern.permute.xlu0 0
        %1360 = vperm.xlu0 %1359, %v1249
        %v1361 = vpop.permute.xlu0 %1360
        %1364 = vset.pattern.permute.xlu0 0
        %1365 = vperm.xlu0 %1364, %v1250
        %v1366 = vpop.permute.xlu0 %1365
        %1369 = vset.pattern.permute.xlu0 0
        %1370 = vperm.xlu0 %1369, %v1251
        %v1371 = vpop.permute.xlu0 %1370
        %1374 = vset.pattern.permute.xlu0 0
        %1375 = vperm.xlu0 %1374, %v1252
        %v1376 = vpop.permute.xlu0 %1375
        %1379 = vset.pattern.permute.xlu0 0
        %1380 = vperm.xlu0 %1379, %v1253
        %v1381 = vpop.permute.xlu0 %1380
        %1384 = vset.pattern.permute.xlu0 0
        %1385 = vperm.xlu0 %1384, %v1254
        %v1386 = vpop.permute.xlu0 %1385
        %1389 = vset.pattern.permute.xlu0 0
        %1390 = vperm.xlu0 %1389, %v1255
        %v1391 = vpop.permute.xlu0 %1390
        %1394 = vset.pattern.permute.xlu0 0
        %1395 = vperm.xlu0 %1394, %v1256
        %v1396 = vpop.permute.xlu0 %1395
        %1399 = vset.pattern.permute.xlu0 0
        %1400 = vperm.xlu0 %1399, %v1257
        %v1401 = vpop.permute.xlu0 %1400
        %1404 = vset.pattern.permute.xlu0 0
        %1405 = vperm.xlu0 %1404, %v1258
        %v1406 = vpop.permute.xlu0 %1405
        %1409 = vset.pattern.permute.xlu0 0
        %1410 = vperm.xlu0 %1409, %v1259
        %v1411 = vpop.permute.xlu0 %1410
        %1414 = vset.pattern.permute.xlu0 0
        %1415 = vperm.xlu0 %1414, %v1260
        %v1416 = vpop.permute.xlu0 %1415
        %1419 = vset.pattern.permute.xlu0 0
        %1420 = vperm.xlu0 %1419, %v1261
        %v1421 = vpop.permute.xlu0 %1420
        %1424 = vset.pattern.permute.xlu0 0
        %1425 = vperm.xlu0 %1424, %v1262
        %v1426 = vpop.permute.xlu0 %1425
        %1429 = vset.pattern.permute.xlu0 0
        %1430 = vperm.xlu0 %1429, %v1263
        %v1431 = vpop.permute.xlu0 %1430
        %1434 = vset.pattern.permute.xlu0 0
        %1435 = vperm.xlu0 %1434, %v1264
        %v1436 = vpop.permute.xlu0 %1435
        %1439 = vset.pattern.permute.xlu0 0
        %1440 = vperm.xlu0 %1439, %v1265
        %v1441 = vpop.permute.xlu0 %1440
        %1444 = vset.pattern.permute.xlu0 0
        %1445 = vperm.xlu0 %1444, %v1266
        %v1446 = vpop.permute.xlu0 %1445
        %1449 = vset.pattern.permute.xlu0 0
        %1450 = vperm.xlu0 %1449, %v1267
        %v1451 = vpop.permute.xlu0 %1450
        %1454 = vset.pattern.permute.xlu0 0
        %1455 = vperm.xlu0 %1454, %v1268
        %v1456 = vpop.permute.xlu0 %1455
        %1459 = vset.pattern.permute.xlu0 0
        %1460 = vperm.xlu0 %1459, %v1269
        %v1461 = vpop.permute.xlu0 %1460
        %1464 = vset.pattern.permute.xlu0 0
        %1465 = vperm.xlu0 %1464, %v1270
        %v1466 = vpop.permute.xlu0 %1465
        %1469 = vset.pattern.permute.xlu0 0
        %1470 = vperm.xlu0 %1469, %v1271
        %v1471 = vpop.permute.xlu0 %1470
        %1474 = vset.pattern.permute.xlu0 0
        %1475 = vperm.xlu0 %1474, %v1272
        %v1476 = vpop.permute.xlu0 %1475
        %v1478 = vmul.f32 %v1191, %v1276
        %v1479 = vmul.f32 %v1192, %v1281
        %v1480 = vmul.f32 %v1193, %v1286
        %v1481 = vmul.f32 %v1194, %v1291
        %v1482 = vmul.f32 %v1195, %v1296
        %v1483 = vmul.f32 %v1196, %v1301
        %v1484 = vmul.f32 %v1197, %v1306
        %v1485 = vmul.f32 %v1198, %v1311
        %v1486 = vmul.f32 %v1199, %v1316
        %v1487 = vmul.f32 %v1200, %v1321
        %v1488 = vmul.f32 %v1201, %v1326
        %v1489 = vmul.f32 %v1202, %v1331
        %v1490 = vmul.f32 %v1203, %v1336
        %v1491 = vmul.f32 %v1204, %v1341
        %v1492 = vmul.f32 %v1205, %v1346
        %v1493 = vmul.f32 %v1206, %v1351
        %v1494 = vmul.f32 %v1207, %v1356
        %v1495 = vmul.f32 %v1208, %v1361
        %v1496 = vmul.f32 %v1209, %v1366
        %v1497 = vmul.f32 %v1210, %v1371
        %v1498 = vmul.f32 %v1211, %v1376
        %v1499 = vmul.f32 %v1212, %v1381
        %v1500 = vmul.f32 %v1213, %v1386
        %v1501 = vmul.f32 %v1214, %v1391
        %v1502 = vmul.f32 %v1215, %v1396
        %v1503 = vmul.f32 %v1216, %v1401
        %v1504 = vmul.f32 %v1217, %v1406
        %v1505 = vmul.f32 %v1218, %v1411
        %v1506 = vmul.f32 %v1219, %v1416
        %v1507 = vmul.f32 %v1220, %v1421
        %v1508 = vmul.f32 %v1221, %v1426
        %v1509 = vmul.f32 %v1222, %v1431
        %v1510 = vmul.f32 %v1223, %v1436
        %v1511 = vmul.f32 %v1224, %v1441
        %v1512 = vmul.f32 %v1225, %v1446
        %v1513 = vmul.f32 %v1226, %v1451
        %v1514 = vmul.f32 %v1227, %v1456
        %v1515 = vmul.f32 %v1228, %v1461
        %v1516 = vmul.f32 %v1229, %v1466
        %v1517 = vmul.f32 %v1230, %v1471
        %v1518 = vmul.f32 %v1231, %v1476
        %1519 = vst [vmem:[#allocation2] sm:$0xff] %v1478
        %1520 = vst [vmem:[#allocation2 + $0x8] sm:$0xff] %v1479
        %1521 = vst [vmem:[#allocation2 + $0x10] sm:$0xff] %v1480
        %1522 = vst [vmem:[#allocation2 + $0x18] sm:$0xff] %v1481
        %1523 = vst [vmem:[#allocation2 + $0x20] sm:$0xff] %v1482
        %1524 = vst [vmem:[#allocation2 + $0x28] sm:$0xff] %v1483
        %1525 = vst [vmem:[#allocation2 + $0x30] sm:$0xff] %v1484
        %1526 = vst [vmem:[#allocation2 + $0x38] sm:$0xff] %v1485
        %1527 = vst [vmem:[#allocation2 + $0x40] sm:$0xff] %v1486
        %1528 = vst [vmem:[#allocation2 + $0x48] sm:$0xff] %v1487
        %1529 = vst [vmem:[#allocation2 + $0x50] sm:$0xff] %v1488
        %1530 = vst [vmem:[#allocation2 + $0x58] sm:$0xff] %v1489
        %1531 = vst [vmem:[#allocation2 + $0x60] sm:$0xff] %v1490
        %1532 = vst [vmem:[#allocation2 + $0x68] sm:$0xff] %v1491
        %1533 = vst [vmem:[#allocation2 + $0x70] sm:$0xff] %v1492
        %1534 = vst [vmem:[#allocation2 + $0x78] sm:$0xff] %v1493
        %1535 = vst [vmem:[#allocation2 + $0x80] sm:$0xff] %v1494
        %1536 = vst [vmem:[#allocation2 + $0x88] sm:$0xff] %v1495
        %1537 = vst [vmem:[#allocation2 + $0x90] sm:$0xff] %v1496
        %1538 = vst [vmem:[#allocation2 + $0x98] sm:$0xff] %v1497
        %1539 = vst [vmem:[#allocation2 + $0xa0] sm:$0xff] %v1498
        %1540 = vst [vmem:[#allocation2 + $0xa8] sm:$0xff] %v1499
        %1541 = vst [vmem:[#allocation2 + $0xb0] sm:$0xff] %v1500
        %1542 = vst [vmem:[#allocation2 + $0xb8] sm:$0xff] %v1501
        %1543 = vst [vmem:[#allocation2 + $0xc0] sm:$0xff] %v1502
        %1544 = vst [vmem:[#allocation2 + $0xc8] sm:$0xff] %v1503
        %1545 = vst [vmem:[#allocation2 + $0xd0] sm:$0xff] %v1504
        %1546 = vst [vmem:[#allocation2 + $0xd8] sm:$0xff] %v1505
        %1547 = vst [vmem:[#allocation2 + $0xe0] sm:$0xff] %v1506
        %1548 = vst [vmem:[#allocation2 + $0xe8] sm:$0xff] %v1507
        %1549 = vst [vmem:[#allocation2 + $0xf0] sm:$0xff] %v1508
        %1550 = vst [vmem:[#allocation2 + $0xf8] sm:$0xff] %v1509
        %1551 = vst [vmem:[#allocation2 + $0x100] sm:$0xff] %v1510
        %1552 = vst [vmem:[#allocation2 + $0x108] sm:$0xff] %v1511
        %1553 = vst [vmem:[#allocation2 + $0x110] sm:$0xff] %v1512
        %1554 = vst [vmem:[#allocation2 + $0x118] sm:$0xff] %v1513
        %1555 = vst [vmem:[#allocation2 + $0x120] sm:$0xff] %v1514
        %1556 = vst [vmem:[#allocation2 + $0x128] sm:$0xff] %v1515
        %1557 = vst [vmem:[#allocation2 + $0x130] sm:$0xff] %v1516
        %1558 = vst [vmem:[#allocation2 + $0x138] sm:$0xff] %v1517
        %1559 = vst [vmem:[#allocation2 + $0x140] sm:$0xff] %v1518
        %v1560 = vld [vmem:[%s417] sm:$0xff]
        %v1561 = vld [vmem:[%s417 + $0x8] sm:$0xff]
        %v1562 = vld [vmem:[%s417 + $0x10] sm:$0xff]
        %v1563 = vld [vmem:[%s417 + $0x18] sm:$0x1]
        %v1564 = vld [vmem:[#allocation2] sm:$0xff]
        %v1565 = vld [vmem:[#allocation2 + $0x8] sm:$0xff]
        %v1566 = vld [vmem:[#allocation2 + $0x10] sm:$0xff]
        %v1567 = vld [vmem:[#allocation2 + $0x18] sm:$0xff]
        %v1568 = vld [vmem:[#allocation2 + $0x20] sm:$0xff]
        %v1569 = vld [vmem:[#allocation2 + $0x28] sm:$0xff]
        %v1570 = vld [vmem:[#allocation2 + $0x30] sm:$0xff]
        %v1571 = vld [vmem:[#allocation2 + $0x38] sm:$0xff]
        %v1572 = vld [vmem:[#allocation2 + $0x40] sm:$0xff]
        %v1573 = vld [vmem:[#allocation2 + $0x48] sm:$0xff]
        %v1574 = vld [vmem:[#allocation2 + $0x50] sm:$0xff]
        %v1575 = vld [vmem:[#allocation2 + $0x58] sm:$0xff]
        %v1576 = vld [vmem:[#allocation2 + $0x60] sm:$0xff]
        %v1577 = vld [vmem:[#allocation2 + $0x68] sm:$0xff]
        %v1578 = vld [vmem:[#allocation2 + $0x70] sm:$0xff]
        %v1579 = vld [vmem:[#allocation2 + $0x78] sm:$0xff]
        %v1580 = vld [vmem:[#allocation2 + $0x80] sm:$0xff]
        %v1581 = vld [vmem:[#allocation2 + $0x88] sm:$0xff]
        %v1582 = vld [vmem:[#allocation2 + $0x90] sm:$0xff]
        %v1583 = vld [vmem:[#allocation2 + $0x98] sm:$0xff]
        %v1584 = vld [vmem:[#allocation2 + $0xa0] sm:$0xff]
        %v1585 = vld [vmem:[#allocation2 + $0xa8] sm:$0xff]
        %v1586 = vld [vmem:[#allocation2 + $0xb0] sm:$0xff]
        %v1587 = vld [vmem:[#allocation2 + $0xb8] sm:$0xff]
        %v1588 = vld [vmem:[#allocation2 + $0xc0] sm:$0xff]
        %v1589 = vld [vmem:[#allocation2 + $0xc8] sm:$0xff]
        %v1590 = vld [vmem:[#allocation2 + $0xd0] sm:$0xff]
        %v1591 = vld [vmem:[#allocation2 + $0xd8] sm:$0xff]
        %v1592 = vld [vmem:[#allocation2 + $0xe0] sm:$0xff]
        %v1593 = vld [vmem:[#allocation2 + $0xe8] sm:$0xff]
        %v1594 = vld [vmem:[#allocation2 + $0xf0] sm:$0xff]
        %v1595 = vld [vmem:[#allocation2 + $0xf8] sm:$0xff]
        %v1596 = vlaneseq
        %v1597 = vshrl.u32 %v1596, 7
        %v1598 = vsub.s32 0, %v1597
        %v1599 = vrot.slane %v1560, %v1598
        %v1600 = vmul.f32 %v1564, %v1599
        %v1601 = vmul.f32 %v1565, %v1599
        %v1602 = vmul.f32 %v1566, %v1599
        %v1603 = vmul.f32 %v1567, %v1599
        %v1604 = vmul.f32 %v1568, %v1599
        %v1605 = vmul.f32 %v1569, %v1599
        %v1606 = vmul.f32 %v1570, %v1599
        %v1607 = vmul.f32 %v1571, %v1599
        %v1608 = vmul.f32 %v1572, %v1599
        %v1609 = vmul.f32 %v1573, %v1599
        %v1610 = vmul.f32 %v1574, %v1599
        %v1611 = vmul.f32 %v1575, %v1599
        %v1612 = vmul.f32 %v1576, %v1599
        %v1613 = vmul.f32 %v1577, %v1599
        %v1614 = vmul.f32 %v1578, %v1599
        %v1615 = vmul.f32 %v1579, %v1599
        %v1616 = vmul.f32 %v1580, %v1599
        %v1617 = vmul.f32 %v1581, %v1599
        %v1618 = vmul.f32 %v1582, %v1599
        %v1619 = vmul.f32 %v1583, %v1599
        %v1620 = vmul.f32 %v1584, %v1599
        %v1621 = vmul.f32 %v1585, %v1599
        %v1622 = vmul.f32 %v1586, %v1599
        %v1623 = vmul.f32 %v1587, %v1599
        %v1624 = vmul.f32 %v1588, %v1599
        %v1625 = vmul.f32 %v1589, %v1599
        %v1626 = vmul.f32 %v1590, %v1599
        %v1627 = vmul.f32 %v1591, %v1599
        %v1628 = vmul.f32 %v1592, %v1599
        %v1629 = vmul.f32 %v1593, %v1599
        %v1630 = vmul.f32 %v1594, %v1599
        %v1631 = vmul.f32 %v1595, %v1599
        %v1632 = vlaneseq
        %v1633 = vshrl.u32 %v1632, 7
        %v1634 = vsub.s32 1, %v1633
        %v1635 = vrot.slane %v1560, %v1634
        %v1636 = vmul.f32 %v1564, %v1635
        %v1637 = vmul.f32 %v1565, %v1635
        %v1638 = vmul.f32 %v1566, %v1635
        %v1639 = vmul.f32 %v1567, %v1635
        %v1640 = vmul.f32 %v1568, %v1635
        %v1641 = vmul.f32 %v1569, %v1635
        %v1642 = vmul.f32 %v1570, %v1635
        %v1643 = vmul.f32 %v1571, %v1635
        %v1644 = vmul.f32 %v1572, %v1635
        %v1645 = vmul.f32 %v1573, %v1635
        %v1646 = vmul.f32 %v1574, %v1635
        %v1647 = vmul.f32 %v1575, %v1635
        %v1648 = vmul.f32 %v1576, %v1635
        %v1649 = vmul.f32 %v1577, %v1635
        %v1650 = vmul.f32 %v1578, %v1635
        %v1651 = vmul.f32 %v1579, %v1635
        %v1652 = vmul.f32 %v1580, %v1635
        %v1653 = vmul.f32 %v1581, %v1635
        %v1654 = vmul.f32 %v1582, %v1635
        %v1655 = vmul.f32 %v1583, %v1635
        %v1656 = vmul.f32 %v1584, %v1635
        %v1657 = vmul.f32 %v1585, %v1635
        %v1658 = vmul.f32 %v1586, %v1635
        %v1659 = vmul.f32 %v1587, %v1635
        %v1660 = vmul.f32 %v1588, %v1635
        %v1661 = vmul.f32 %v1589, %v1635
        %v1662 = vmul.f32 %v1590, %v1635
        %v1663 = vmul.f32 %v1591, %v1635
        %v1664 = vmul.f32 %v1592, %v1635
        %v1665 = vmul.f32 %v1593, %v1635
        %v1666 = vmul.f32 %v1594, %v1635
        %v1667 = vmul.f32 %v1595, %v1635
        %vm1700 = vcmask 1046528
        %v1701 = vrot.slane %v1636, 1
        %v1702 = vrot.slane %v1637, 1
        %v1703 = vsel %vm1700, %v1701, %v1702
        %v1704 = vrot.slane %v1638, 1
        %v1705 = vsel %vm1700, %v1702, %v1704
        %v1706 = vrot.slane %v1639, 1
        %v1707 = vsel %vm1700, %v1704, %v1706
        %v1708 = vrot.slane %v1640, 1
        %v1709 = vsel %vm1700, %v1706, %v1708
        %v1710 = vrot.slane %v1641, 1
        %v1711 = vsel %vm1700, %v1708, %v1710
        %v1712 = vrot.slane %v1642, 1
        %v1713 = vsel %vm1700, %v1710, %v1712
        %v1714 = vrot.slane %v1643, 1
        %v1715 = vsel %vm1700, %v1712, %v1714
        %v1716 = vrot.slane %v1644, 1
        %v1717 = vsel %vm1700, %v1714, %v1716
        %v1718 = vrot.slane %v1645, 1
        %v1719 = vsel %vm1700, %v1716, %v1718
        %v1720 = vrot.slane %v1646, 1
        %v1721 = vsel %vm1700, %v1718, %v1720
        %v1722 = vrot.slane %v1647, 1
        %v1723 = vsel %vm1700, %v1720, %v1722
        %v1724 = vrot.slane %v1648, 1
        %v1725 = vsel %vm1700, %v1722, %v1724
        %v1726 = vrot.slane %v1649, 1
        %v1727 = vsel %vm1700, %v1724, %v1726
        %v1728 = vrot.slane %v1650, 1
        %v1729 = vsel %vm1700, %v1726, %v1728
        %v1730 = vrot.slane %v1651, 1
        %v1731 = vsel %vm1700, %v1728, %v1730
        %v1732 = vrot.slane %v1652, 1
        %v1733 = vsel %vm1700, %v1730, %v1732
        %v1734 = vrot.slane %v1653, 1
        %v1735 = vsel %vm1700, %v1732, %v1734
        %v1736 = vrot.slane %v1654, 1
        %v1737 = vsel %vm1700, %v1734, %v1736
        %v1738 = vrot.slane %v1655, 1
        %v1739 = vsel %vm1700, %v1736, %v1738
        %v1740 = vrot.slane %v1656, 1
        %v1741 = vsel %vm1700, %v1738, %v1740
        %v1742 = vrot.slane %v1657, 1
        %v1743 = vsel %vm1700, %v1740, %v1742
        %v1744 = vrot.slane %v1658, 1
        %v1745 = vsel %vm1700, %v1742, %v1744
        %v1746 = vrot.slane %v1659, 1
        %v1747 = vsel %vm1700, %v1744, %v1746
        %v1748 = vrot.slane %v1660, 1
        %v1749 = vsel %vm1700, %v1746, %v1748
        %v1750 = vrot.slane %v1661, 1
        %v1751 = vsel %vm1700, %v1748, %v1750
        %v1752 = vrot.slane %v1662, 1
        %v1753 = vsel %vm1700, %v1750, %v1752
        %v1754 = vrot.slane %v1663, 1
        %v1755 = vsel %vm1700, %v1752, %v1754
        %v1756 = vrot.slane %v1664, 1
        %v1757 = vsel %vm1700, %v1754, %v1756
        %v1758 = vrot.slane %v1665, 1
        %v1759 = vsel %vm1700, %v1756, %v1758
        %v1760 = vrot.slane %v1666, 1
        %v1761 = vsel %vm1700, %v1758, %v1760
        %v1762 = vrot.slane %v1667, 1
        %v1763 = vsel %vm1700, %v1760, %v1762
        %v1796 = vadd.f32 %v1600, %v1703
        %v1797 = vadd.f32 %v1601, %v1705
        %v1798 = vadd.f32 %v1602, %v1707
        %v1799 = vadd.f32 %v1603, %v1709
        %v1800 = vadd.f32 %v1604, %v1711
        %v1801 = vadd.f32 %v1605, %v1713
        %v1802 = vadd.f32 %v1606, %v1715
        %v1803 = vadd.f32 %v1607, %v1717
        %v1804 = vadd.f32 %v1608, %v1719
        %v1805 = vadd.f32 %v1609, %v1721
        %v1806 = vadd.f32 %v1610, %v1723
        %v1807 = vadd.f32 %v1611, %v1725
        %v1808 = vadd.f32 %v1612, %v1727
        %v1809 = vadd.f32 %v1613, %v1729
        %v1810 = vadd.f32 %v1614, %v1731
        %v1811 = vadd.f32 %v1615, %v1733
        %v1812 = vadd.f32 %v1616, %v1735
        %v1813 = vadd.f32 %v1617, %v1737
        %v1814 = vadd.f32 %v1618, %v1739
        %v1815 = vadd.f32 %v1619, %v1741
        %v1816 = vadd.f32 %v1620, %v1743
        %v1817 = vadd.f32 %v1621, %v1745
        %v1818 = vadd.f32 %v1622, %v1747
        %v1819 = vadd.f32 %v1623, %v1749
        %v1820 = vadd.f32 %v1624, %v1751
        %v1821 = vadd.f32 %v1625, %v1753
        %v1822 = vadd.f32 %v1626, %v1755
        %v1823 = vadd.f32 %v1627, %v1757
        %v1824 = vadd.f32 %v1628, %v1759
        %v1825 = vadd.f32 %v1629, %v1761
        %v1826 = vadd.f32 %v1630, %v1763
        %v1827 = vadd.f32 %v1631, %v1762
        %v1828 = vlaneseq
        %v1829 = vshrl.u32 %v1828, 7
        %v1830 = vsub.s32 2, %v1829
        %v1831 = vrot.slane %v1560, %v1830
        %v1832 = vmul.f32 %v1564, %v1831
        %v1833 = vmul.f32 %v1565, %v1831
        %v1834 = vmul.f32 %v1566, %v1831
        %v1835 = vmul.f32 %v1567, %v1831
        %v1836 = vmul.f32 %v1568, %v1831
        %v1837 = vmul.f32 %v1569, %v1831
        %v1838 = vmul.f32 %v1570, %v1831
        %v1839 = vmul.f32 %v1571, %v1831
        %v1840 = vmul.f32 %v1572, %v1831
        %v1841 = vmul.f32 %v1573, %v1831
        %v1842 = vmul.f32 %v1574, %v1831
        %v1843 = vmul.f32 %v1575, %v1831
        %v1844 = vmul.f32 %v1576, %v1831
        %v1845 = vmul.f32 %v1577, %v1831
        %v1846 = vmul.f32 %v1578, %v1831
        %v1847 = vmul.f32 %v1579, %v1831
        %v1848 = vmul.f32 %v1580, %v1831
        %v1849 = vmul.f32 %v1581, %v1831
        %v1850 = vmul.f32 %v1582, %v1831
        %v1851 = vmul.f32 %v1583, %v1831
        %v1852 = vmul.f32 %v1584, %v1831
        %v1853 = vmul.f32 %v1585, %v1831
        %v1854 = vmul.f32 %v1586, %v1831
        %v1855 = vmul.f32 %v1587, %v1831
        %v1856 = vmul.f32 %v1588, %v1831
        %v1857 = vmul.f32 %v1589, %v1831
        %v1858 = vmul.f32 %v1590, %v1831
        %v1859 = vmul.f32 %v1591, %v1831
        %v1860 = vmul.f32 %v1592, %v1831
        %v1861 = vmul.f32 %v1593, %v1831
        %v1862 = vmul.f32 %v1594, %v1831
        %v1863 = vmul.f32 %v1595, %v1831
        %vm1896 = vcmask 1045504
        %v1897 = vrot.slane %v1832, 2
        %v1898 = vrot.slane %v1833, 2
        %v1899 = vsel %vm1896, %v1897, %v1898
        %v1900 = vrot.slane %v1834, 2
        %v1901 = vsel %vm1896, %v1898, %v1900
        %v1902 = vrot.slane %v1835, 2
        %v1903 = vsel %vm1896, %v1900, %v1902
        %v1904 = vrot.slane %v1836, 2
        %v1905 = vsel %vm1896, %v1902, %v1904
        %v1906 = vrot.slane %v1837, 2
        %v1907 = vsel %vm1896, %v1904, %v1906
        %v1908 = vrot.slane %v1838, 2
        %v1909 = vsel %vm1896, %v1906, %v1908
        %v1910 = vrot.slane %v1839, 2
        %v1911 = vsel %vm1896, %v1908, %v1910
        %v1912 = vrot.slane %v1840, 2
        %v1913 = vsel %vm1896, %v1910, %v1912
        %v1914 = vrot.slane %v1841, 2
        %v1915 = vsel %vm1896, %v1912, %v1914
        %v1916 = vrot.slane %v1842, 2
        %v1917 = vsel %vm1896, %v1914, %v1916
        %v1918 = vrot.slane %v1843, 2
        %v1919 = vsel %vm1896, %v1916, %v1918
        %v1920 = vrot.slane %v1844, 2
        %v1921 = vsel %vm1896, %v1918, %v1920
        %v1922 = vrot.slane %v1845, 2
        %v1923 = vsel %vm1896, %v1920, %v1922
        %v1924 = vrot.slane %v1846, 2
        %v1925 = vsel %vm1896, %v1922, %v1924
        %v1926 = vrot.slane %v1847, 2
        %v1927 = vsel %vm1896, %v1924, %v1926
        %v1928 = vrot.slane %v1848, 2
        %v1929 = vsel %vm1896, %v1926, %v1928
        %v1930 = vrot.slane %v1849, 2
        %v1931 = vsel %vm1896, %v1928, %v1930
        %v1932 = vrot.slane %v1850, 2
        %v1933 = vsel %vm1896, %v1930, %v1932
        %v1934 = vrot.slane %v1851, 2
        %v1935 = vsel %vm1896, %v1932, %v1934
        %v1936 = vrot.slane %v1852, 2
        %v1937 = vsel %vm1896, %v1934, %v1936
        %v1938 = vrot.slane %v1853, 2
        %v1939 = vsel %vm1896, %v1936, %v1938
        %v1940 = vrot.slane %v1854, 2
        %v1941 = vsel %vm1896, %v1938, %v1940
        %v1942 = vrot.slane %v1855, 2
        %v1943 = vsel %vm1896, %v1940, %v1942
        %v1944 = vrot.slane %v1856, 2
        %v1945 = vsel %vm1896, %v1942, %v1944
        %v1946 = vrot.slane %v1857, 2
        %v1947 = vsel %vm1896, %v1944, %v1946
        %v1948 = vrot.slane %v1858, 2
        %v1949 = vsel %vm1896, %v1946, %v1948
        %v1950 = vrot.slane %v1859, 2
        %v1951 = vsel %vm1896, %v1948, %v1950
        %v1952 = vrot.slane %v1860, 2
        %v1953 = vsel %vm1896, %v1950, %v1952
        %v1954 = vrot.slane %v1861, 2
        %v1955 = vsel %vm1896, %v1952, %v1954
        %v1956 = vrot.slane %v1862, 2
        %v1957 = vsel %vm1896, %v1954, %v1956
        %v1958 = vrot.slane %v1863, 2
        %v1959 = vsel %vm1896, %v1956, %v1958
        %v1992 = vadd.f32 %v1796, %v1899
        %v1993 = vadd.f32 %v1797, %v1901
        %v1994 = vadd.f32 %v1798, %v1903
        %v1995 = vadd.f32 %v1799, %v1905
        %v1996 = vadd.f32 %v1800, %v1907
        %v1997 = vadd.f32 %v1801, %v1909
        %v1998 = vadd.f32 %v1802, %v1911
        %v1999 = vadd.f32 %v1803, %v1913
        %v2000 = vadd.f32 %v1804, %v1915
        %v2001 = vadd.f32 %v1805, %v1917
        %v2002 = vadd.f32 %v1806, %v1919
        %v2003 = vadd.f32 %v1807, %v1921
        %v2004 = vadd.f32 %v1808, %v1923
        %v2005 = vadd.f32 %v1809, %v1925
        %v2006 = vadd.f32 %v1810, %v1927
        %v2007 = vadd.f32 %v1811, %v1929
        %v2008 = vadd.f32 %v1812, %v1931
        %v2009 = vadd.f32 %v1813, %v1933
        %v2010 = vadd.f32 %v1814, %v1935
        %v2011 = vadd.f32 %v1815, %v1937
        %v2012 = vadd.f32 %v1816, %v1939
        %v2013 = vadd.f32 %v1817, %v1941
        %v2014 = vadd.f32 %v1818, %v1943
        %v2015 = vadd.f32 %v1819, %v1945
        %v2016 = vadd.f32 %v1820, %v1947
        %v2017 = vadd.f32 %v1821, %v1949
        %v2018 = vadd.f32 %v1822, %v1951
        %v2019 = vadd.f32 %v1823, %v1953
        %v2020 = vadd.f32 %v1824, %v1955
        %v2021 = vadd.f32 %v1825, %v1957
        %v2022 = vadd.f32 %v1826, %v1959
        %v2023 = vadd.f32 %v1827, %v1958
        %v2024 = vlaneseq
        %v2025 = vshrl.u32 %v2024, 7
        %v2026 = vsub.s32 3, %v2025
        %v2027 = vrot.slane %v1560, %v2026
        %v2028 = vmul.f32 %v1564, %v2027
        %v2029 = vmul.f32 %v1565, %v2027
        %v2030 = vmul.f32 %v1566, %v2027
        %v2031 = vmul.f32 %v1567, %v2027
        %v2032 = vmul.f32 %v1568, %v2027
        %v2033 = vmul.f32 %v1569, %v2027
        %v2034 = vmul.f32 %v1570, %v2027
        %v2035 = vmul.f32 %v1571, %v2027
        %v2036 = vmul.f32 %v1572, %v2027
        %v2037 = vmul.f32 %v1573, %v2027
        %v2038 = vmul.f32 %v1574, %v2027
        %v2039 = vmul.f32 %v1575, %v2027
        %v2040 = vmul.f32 %v1576, %v2027
        %v2041 = vmul.f32 %v1577, %v2027
        %v2042 = vmul.f32 %v1578, %v2027
        %v2043 = vmul.f32 %v1579, %v2027
        %v2044 = vmul.f32 %v1580, %v2027
        %v2045 = vmul.f32 %v1581, %v2027
        %v2046 = vmul.f32 %v1582, %v2027
        %v2047 = vmul.f32 %v1583, %v2027
        %v2048 = vmul.f32 %v1584, %v2027
        %v2049 = vmul.f32 %v1585, %v2027
        %v2050 = vmul.f32 %v1586, %v2027
        %v2051 = vmul.f32 %v1587, %v2027
        %v2052 = vmul.f32 %v1588, %v2027
        %v2053 = vmul.f32 %v1589, %v2027
        %v2054 = vmul.f32 %v1590, %v2027
        %v2055 = vmul.f32 %v1591, %v2027
        %v2056 = vmul.f32 %v1592, %v2027
        %v2057 = vmul.f32 %v1593, %v2027
        %v2058 = vmul.f32 %v1594, %v2027
        %v2059 = vmul.f32 %v1595, %v2027
        %vm2092 = vcmask 1044480
        %v2093 = vrot.slane %v2028, 3
        %v2094 = vrot.slane %v2029, 3
        %v2095 = vsel %vm2092, %v2093, %v2094
        %v2096 = vrot.slane %v2030, 3
        %v2097 = vsel %vm2092, %v2094, %v2096
        %v2098 = vrot.slane %v2031, 3
        %v2099 = vsel %vm2092, %v2096, %v2098
        %v2100 = vrot.slane %v2032, 3
        %v2101 = vsel %vm2092, %v2098, %v2100
        %v2102 = vrot.slane %v2033, 3
        %v2103 = vsel %vm2092, %v2100, %v2102
        %v2104 = vrot.slane %v2034, 3
        %v2105 = vsel %vm2092, %v2102, %v2104
        %v2106 = vrot.slane %v2035, 3
        %v2107 = vsel %vm2092, %v2104, %v2106
        %v2108 = vrot.slane %v2036, 3
        %v2109 = vsel %vm2092, %v2106, %v2108
        %v2110 = vrot.slane %v2037, 3
        %v2111 = vsel %vm2092, %v2108, %v2110
        %v2112 = vrot.slane %v2038, 3
        %v2113 = vsel %vm2092, %v2110, %v2112
        %v2114 = vrot.slane %v2039, 3
        %v2115 = vsel %vm2092, %v2112, %v2114
        %v2116 = vrot.slane %v2040, 3
        %v2117 = vsel %vm2092, %v2114, %v2116
        %v2118 = vrot.slane %v2041, 3
        %v2119 = vsel %vm2092, %v2116, %v2118
        %v2120 = vrot.slane %v2042, 3
        %v2121 = vsel %vm2092, %v2118, %v2120
        %v2122 = vrot.slane %v2043, 3
        %v2123 = vsel %vm2092, %v2120, %v2122
        %v2124 = vrot.slane %v2044, 3
        %v2125 = vsel %vm2092, %v2122, %v2124
        %v2126 = vrot.slane %v2045, 3
        %v2127 = vsel %vm2092, %v2124, %v2126
        %v2128 = vrot.slane %v2046, 3
        %v2129 = vsel %vm2092, %v2126, %v2128
        %v2130 = vrot.slane %v2047, 3
        %v2131 = vsel %vm2092, %v2128, %v2130
        %v2132 = vrot.slane %v2048, 3
        %v2133 = vsel %vm2092, %v2130, %v2132
        %v2134 = vrot.slane %v2049, 3
        %v2135 = vsel %vm2092, %v2132, %v2134
        %v2136 = vrot.slane %v2050, 3
        %v2137 = vsel %vm2092, %v2134, %v2136
        %v2138 = vrot.slane %v2051, 3
        %v2139 = vsel %vm2092, %v2136, %v2138
        %v2140 = vrot.slane %v2052, 3
        %v2141 = vsel %vm2092, %v2138, %v2140
        %v2142 = vrot.slane %v2053, 3
        %v2143 = vsel %vm2092, %v2140, %v2142
        %v2144 = vrot.slane %v2054, 3
        %v2145 = vsel %vm2092, %v2142, %v2144
        %v2146 = vrot.slane %v2055, 3
        %v2147 = vsel %vm2092, %v2144, %v2146
        %v2148 = vrot.slane %v2056, 3
        %v2149 = vsel %vm2092, %v2146, %v2148
        %v2150 = vrot.slane %v2057, 3
        %v2151 = vsel %vm2092, %v2148, %v2150
        %v2152 = vrot.slane %v2058, 3
        %v2153 = vsel %vm2092, %v2150, %v2152
        %v2154 = vrot.slane %v2059, 3
        %v2155 = vsel %vm2092, %v2152, %v2154
        %v2188 = vadd.f32 %v1992, %v2095
        %v2189 = vadd.f32 %v1993, %v2097
        %v2190 = vadd.f32 %v1994, %v2099
        %v2191 = vadd.f32 %v1995, %v2101
        %v2192 = vadd.f32 %v1996, %v2103
        %v2193 = vadd.f32 %v1997, %v2105
        %v2194 = vadd.f32 %v1998, %v2107
        %v2195 = vadd.f32 %v1999, %v2109
        %v2196 = vadd.f32 %v2000, %v2111
        %v2197 = vadd.f32 %v2001, %v2113
        %v2198 = vadd.f32 %v2002, %v2115
        %v2199 = vadd.f32 %v2003, %v2117
        %v2200 = vadd.f32 %v2004, %v2119
        %v2201 = vadd.f32 %v2005, %v2121
        %v2202 = vadd.f32 %v2006, %v2123
        %v2203 = vadd.f32 %v2007, %v2125
        %v2204 = vadd.f32 %v2008, %v2127
        %v2205 = vadd.f32 %v2009, %v2129
        %v2206 = vadd.f32 %v2010, %v2131
        %v2207 = vadd.f32 %v2011, %v2133
        %v2208 = vadd.f32 %v2012, %v2135
        %v2209 = vadd.f32 %v2013, %v2137
        %v2210 = vadd.f32 %v2014, %v2139
        %v2211 = vadd.f32 %v2015, %v2141
        %v2212 = vadd.f32 %v2016, %v2143
        %v2213 = vadd.f32 %v2017, %v2145
        %v2214 = vadd.f32 %v2018, %v2147
        %v2215 = vadd.f32 %v2019, %v2149
        %v2216 = vadd.f32 %v2020, %v2151
        %v2217 = vadd.f32 %v2021, %v2153
        %v2218 = vadd.f32 %v2022, %v2155
        %v2219 = vadd.f32 %v2023, %v2154
        %v2220 = vlaneseq
        %v2221 = vshrl.u32 %v2220, 7
        %v2222 = vsub.s32 4, %v2221
        %v2223 = vrot.slane %v1560, %v2222
        %v2224 = vmul.f32 %v1564, %v2223
        %v2225 = vmul.f32 %v1565, %v2223
        %v2226 = vmul.f32 %v1566, %v2223
        %v2227 = vmul.f32 %v1567, %v2223
        %v2228 = vmul.f32 %v1568, %v2223
        %v2229 = vmul.f32 %v1569, %v2223
        %v2230 = vmul.f32 %v1570, %v2223
        %v2231 = vmul.f32 %v1571, %v2223
        %v2232 = vmul.f32 %v1572, %v2223
        %v2233 = vmul.f32 %v1573, %v2223
        %v2234 = vmul.f32 %v1574, %v2223
        %v2235 = vmul.f32 %v1575, %v2223
        %v2236 = vmul.f32 %v1576, %v2223
        %v2237 = vmul.f32 %v1577, %v2223
        %v2238 = vmul.f32 %v1578, %v2223
        %v2239 = vmul.f32 %v1579, %v2223
        %v2240 = vmul.f32 %v1580, %v2223
        %v2241 = vmul.f32 %v1581, %v2223
        %v2242 = vmul.f32 %v1582, %v2223
        %v2243 = vmul.f32 %v1583, %v2223
        %v2244 = vmul.f32 %v1584, %v2223
        %v2245 = vmul.f32 %v1585, %v2223
        %v2246 = vmul.f32 %v1586, %v2223
        %v2247 = vmul.f32 %v1587, %v2223
        %v2248 = vmul.f32 %v1588, %v2223
        %v2249 = vmul.f32 %v1589, %v2223
        %v2250 = vmul.f32 %v1590, %v2223
        %v2251 = vmul.f32 %v1591, %v2223
        %v2252 = vmul.f32 %v1592, %v2223
        %v2253 = vmul.f32 %v1593, %v2223
        %v2254 = vmul.f32 %v1594, %v2223
        %v2255 = vmul.f32 %v1595, %v2223
        %vm2288 = vcmask 1043456
        %v2289 = vrot.slane %v2224, 4
        %v2290 = vrot.slane %v2225, 4
        %v2291 = vsel %vm2288, %v2289, %v2290
        %v2292 = vrot.slane %v2226, 4
        %v2293 = vsel %vm2288, %v2290, %v2292
        %v2294 = vrot.slane %v2227, 4
        %v2295 = vsel %vm2288, %v2292, %v2294
        %v2296 = vrot.slane %v2228, 4
        %v2297 = vsel %vm2288, %v2294, %v2296
        %v2298 = vrot.slane %v2229, 4
        %v2299 = vsel %vm2288, %v2296, %v2298
        %v2300 = vrot.slane %v2230, 4
        %v2301 = vsel %vm2288, %v2298, %v2300
        %v2302 = vrot.slane %v2231, 4
        %v2303 = vsel %vm2288, %v2300, %v2302
        %v2304 = vrot.slane %v2232, 4
        %v2305 = vsel %vm2288, %v2302, %v2304
        %v2306 = vrot.slane %v2233, 4
        %v2307 = vsel %vm2288, %v2304, %v2306
        %v2308 = vrot.slane %v2234, 4
        %v2309 = vsel %vm2288, %v2306, %v2308
        %v2310 = vrot.slane %v2235, 4
        %v2311 = vsel %vm2288, %v2308, %v2310
        %v2312 = vrot.slane %v2236, 4
        %v2313 = vsel %vm2288, %v2310, %v2312
        %v2314 = vrot.slane %v2237, 4
        %v2315 = vsel %vm2288, %v2312, %v2314
        %v2316 = vrot.slane %v2238, 4
        %v2317 = vsel %vm2288, %v2314, %v2316
        %v2318 = vrot.slane %v2239, 4
        %v2319 = vsel %vm2288, %v2316, %v2318
        %v2320 = vrot.slane %v2240, 4
        %v2321 = vsel %vm2288, %v2318, %v2320
        %v2322 = vrot.slane %v2241, 4
        %v2323 = vsel %vm2288, %v2320, %v2322
        %v2324 = vrot.slane %v2242, 4
        %v2325 = vsel %vm2288, %v2322, %v2324
        %v2326 = vrot.slane %v2243, 4
        %v2327 = vsel %vm2288, %v2324, %v2326
        %v2328 = vrot.slane %v2244, 4
        %v2329 = vsel %vm2288, %v2326, %v2328
        %v2330 = vrot.slane %v2245, 4
        %v2331 = vsel %vm2288, %v2328, %v2330
        %v2332 = vrot.slane %v2246, 4
        %v2333 = vsel %vm2288, %v2330, %v2332
        %v2334 = vrot.slane %v2247, 4
        %v2335 = vsel %vm2288, %v2332, %v2334
        %v2336 = vrot.slane %v2248, 4
        %v2337 = vsel %vm2288, %v2334, %v2336
        %v2338 = vrot.slane %v2249, 4
        %v2339 = vsel %vm2288, %v2336, %v2338
        %v2340 = vrot.slane %v2250, 4
        %v2341 = vsel %vm2288, %v2338, %v2340
        %v2342 = vrot.slane %v2251, 4
        %v2343 = vsel %vm2288, %v2340, %v2342
        %v2344 = vrot.slane %v2252, 4
        %v2345 = vsel %vm2288, %v2342, %v2344
        %v2346 = vrot.slane %v2253, 4
        %v2347 = vsel %vm2288, %v2344, %v2346
        %v2348 = vrot.slane %v2254, 4
        %v2349 = vsel %vm2288, %v2346, %v2348
        %v2350 = vrot.slane %v2255, 4
        %v2351 = vsel %vm2288, %v2348, %v2350
        %v2384 = vadd.f32 %v2188, %v2291
        %v2385 = vadd.f32 %v2189, %v2293
        %v2386 = vadd.f32 %v2190, %v2295
        %v2387 = vadd.f32 %v2191, %v2297
        %v2388 = vadd.f32 %v2192, %v2299
        %v2389 = vadd.f32 %v2193, %v2301
        %v2390 = vadd.f32 %v2194, %v2303
        %v2391 = vadd.f32 %v2195, %v2305
        %v2392 = vadd.f32 %v2196, %v2307
        %v2393 = vadd.f32 %v2197, %v2309
        %v2394 = vadd.f32 %v2198, %v2311
        %v2395 = vadd.f32 %v2199, %v2313
        %v2396 = vadd.f32 %v2200, %v2315
        %v2397 = vadd.f32 %v2201, %v2317
        %v2398 = vadd.f32 %v2202, %v2319
        %v2399 = vadd.f32 %v2203, %v2321
        %v2400 = vadd.f32 %v2204, %v2323
        %v2401 = vadd.f32 %v2205, %v2325
        %v2402 = vadd.f32 %v2206, %v2327
        %v2403 = vadd.f32 %v2207, %v2329
        %v2404 = vadd.f32 %v2208, %v2331
        %v2405 = vadd.f32 %v2209, %v2333
        %v2406 = vadd.f32 %v2210, %v2335
        %v2407 = vadd.f32 %v2211, %v2337
        %v2408 = vadd.f32 %v2212, %v2339
        %v2409 = vadd.f32 %v2213, %v2341
        %v2410 = vadd.f32 %v2214, %v2343
        %v2411 = vadd.f32 %v2215, %v2345
        %v2412 = vadd.f32 %v2216, %v2347
        %v2413 = vadd.f32 %v2217, %v2349
        %v2414 = vadd.f32 %v2218, %v2351
        %v2415 = vadd.f32 %v2219, %v2350
        %v2416 = vld [vmem:[#allocation2 + $0x12] sm:$0xff]
        %v2417 = vld [vmem:[#allocation2 + $0x1a] sm:$0xff]
        %v2418 = vld [vmem:[#allocation2 + $0x22] sm:$0xff]
        %v2419 = vld [vmem:[#allocation2 + $0x2a] sm:$0xff]
        %v2420 = vld [vmem:[#allocation2 + $0x32] sm:$0xff]
        %v2421 = vld [vmem:[#allocation2 + $0x3a] sm:$0xff]
        %v2422 = vld [vmem:[#allocation2 + $0x42] sm:$0xff]
        %v2423 = vld [vmem:[#allocation2 + $0x4a] sm:$0xff]
        %v2424 = vld [vmem:[#allocation2 + $0x52] sm:$0xff]
        %v2425 = vld [vmem:[#allocation2 + $0x5a] sm:$0xff]
        %v2426 = vld [vmem:[#allocation2 + $0x62] sm:$0xff]
        %v2427 = vld [vmem:[#allocation2 + $0x6a] sm:$0xff]
        %v2428 = vld [vmem:[#allocation2 + $0x72] sm:$0xff]
        %v2429 = vld [vmem:[#allocation2 + $0x7a] sm:$0xff]
        %v2430 = vld [vmem:[#allocation2 + $0x82] sm:$0xff]
        %v2431 = vld [vmem:[#allocation2 + $0x8a] sm:$0xff]
        %v2432 = vld [vmem:[#allocation2 + $0x92] sm:$0xff]
        %v2433 = vld [vmem:[#allocation2 + $0x9a] sm:$0xff]
        %v2434 = vld [vmem:[#allocation2 + $0xa2] sm:$0xff]
        %v2435 = vld [vmem:[#allocation2 + $0xaa] sm:$0xff]
        %v2436 = vld [vmem:[#allocation2 + $0xb2] sm:$0xff]
        %v2437 = vld [vmem:[#allocation2 + $0xba] sm:$0xff]
        %v2438 = vld [vmem:[#allocation2 + $0xc2] sm:$0xff]
        %v2439 = vld [vmem:[#allocation2 + $0xca] sm:$0xff]
        %v2440 = vld [vmem:[#allocation2 + $0xd2] sm:$0xff]
        %v2441 = vld [vmem:[#allocation2 + $0xda] sm:$0xff]
        %v2442 = vld [vmem:[#allocation2 + $0xe2] sm:$0xff]
        %v2443 = vld [vmem:[#allocation2 + $0xea] sm:$0xff]
        %v2444 = vld [vmem:[#allocation2 + $0xf2] sm:$0xff]
        %v2445 = vld [vmem:[#allocation2 + $0xfa] sm:$0xff]
        %v2446 = vld [vmem:[#allocation2 + $0x102] sm:$0xff]
        %v2447 = vld [vmem:[#allocation2 + $0x10a] sm:$0xff]
        %v2448 = vlaneseq
        %v2449 = vshrl.u32 %v2448, 7
        %v2450 = vsub.s32 5, %v2449
        %v2451 = vrot.slane %v1560, %v2450
        %v2452 = vmul.f32 %v2416, %v2451
        %v2453 = vmul.f32 %v2417, %v2451
        %v2454 = vmul.f32 %v2418, %v2451
        %v2455 = vmul.f32 %v2419, %v2451
        %v2456 = vmul.f32 %v2420, %v2451
        %v2457 = vmul.f32 %v2421, %v2451
        %v2458 = vmul.f32 %v2422, %v2451
        %v2459 = vmul.f32 %v2423, %v2451
        %v2460 = vmul.f32 %v2424, %v2451
        %v2461 = vmul.f32 %v2425, %v2451
        %v2462 = vmul.f32 %v2426, %v2451
        %v2463 = vmul.f32 %v2427, %v2451
        %v2464 = vmul.f32 %v2428, %v2451
        %v2465 = vmul.f32 %v2429, %v2451
        %v2466 = vmul.f32 %v2430, %v2451
        %v2467 = vmul.f32 %v2431, %v2451
        %v2468 = vmul.f32 %v2432, %v2451
        %v2469 = vmul.f32 %v2433, %v2451
        %v2470 = vmul.f32 %v2434, %v2451
        %v2471 = vmul.f32 %v2435, %v2451
        %v2472 = vmul.f32 %v2436, %v2451
        %v2473 = vmul.f32 %v2437, %v2451
        %v2474 = vmul.f32 %v2438, %v2451
        %v2475 = vmul.f32 %v2439, %v2451
        %v2476 = vmul.f32 %v2440, %v2451
        %v2477 = vmul.f32 %v2441, %v2451
        %v2478 = vmul.f32 %v2442, %v2451
        %v2479 = vmul.f32 %v2443, %v2451
        %v2480 = vmul.f32 %v2444, %v2451
        %v2481 = vmul.f32 %v2445, %v2451
        %v2482 = vmul.f32 %v2446, %v2451
        %v2483 = vmul.f32 %v2447, %v2451
        %v2484 = vadd.f32 %v2384, %v2452
        %v2485 = vadd.f32 %v2385, %v2453
        %v2486 = vadd.f32 %v2386, %v2454
        %v2487 = vadd.f32 %v2387, %v2455
        %v2488 = vadd.f32 %v2388, %v2456
        %v2489 = vadd.f32 %v2389, %v2457
        %v2490 = vadd.f32 %v2390, %v2458
        %v2491 = vadd.f32 %v2391, %v2459
        %v2492 = vadd.f32 %v2392, %v2460
        %v2493 = vadd.f32 %v2393, %v2461
        %v2494 = vadd.f32 %v2394, %v2462
        %v2495 = vadd.f32 %v2395, %v2463
        %v2496 = vadd.f32 %v2396, %v2464
        %v2497 = vadd.f32 %v2397, %v2465
        %v2498 = vadd.f32 %v2398, %v2466
        %v2499 = vadd.f32 %v2399, %v2467
        %v2500 = vadd.f32 %v2400, %v2468
        %v2501 = vadd.f32 %v2401, %v2469
        %v2502 = vadd.f32 %v2402, %v2470
        %v2503 = vadd.f32 %v2403, %v2471
        %v2504 = vadd.f32 %v2404, %v2472
        %v2505 = vadd.f32 %v2405, %v2473
        %v2506 = vadd.f32 %v2406, %v2474
        %v2507 = vadd.f32 %v2407, %v2475
        %v2508 = vadd.f32 %v2408, %v2476
        %v2509 = vadd.f32 %v2409, %v2477
        %v2510 = vadd.f32 %v2410, %v2478
        %v2511 = vadd.f32 %v2411, %v2479
        %v2512 = vadd.f32 %v2412, %v2480
        %v2513 = vadd.f32 %v2413, %v2481
        %v2514 = vadd.f32 %v2414, %v2482
        %v2515 = vadd.f32 %v2415, %v2483
        %v2516 = vlaneseq
        %v2517 = vshrl.u32 %v2516, 7
        %v2518 = vsub.s32 6, %v2517
        %v2519 = vrot.slane %v1560, %v2518
        %v2520 = vmul.f32 %v2416, %v2519
        %v2521 = vmul.f32 %v2417, %v2519
        %v2522 = vmul.f32 %v2418, %v2519
        %v2523 = vmul.f32 %v2419, %v2519
        %v2524 = vmul.f32 %v2420, %v2519
        %v2525 = vmul.f32 %v2421, %v2519
        %v2526 = vmul.f32 %v2422, %v2519
        %v2527 = vmul.f32 %v2423, %v2519
        %v2528 = vmul.f32 %v2424, %v2519
        %v2529 = vmul.f32 %v2425, %v2519
        %v2530 = vmul.f32 %v2426, %v2519
        %v2531 = vmul.f32 %v2427, %v2519
        %v2532 = vmul.f32 %v2428, %v2519
        %v2533 = vmul.f32 %v2429, %v2519
        %v2534 = vmul.f32 %v2430, %v2519
        %v2535 = vmul.f32 %v2431, %v2519
        %v2536 = vmul.f32 %v2432, %v2519
        %v2537 = vmul.f32 %v2433, %v2519
        %v2538 = vmul.f32 %v2434, %v2519
        %v2539 = vmul.f32 %v2435, %v2519
        %v2540 = vmul.f32 %v2436, %v2519
        %v2541 = vmul.f32 %v2437, %v2519
        %v2542 = vmul.f32 %v2438, %v2519
        %v2543 = vmul.f32 %v2439, %v2519
        %v2544 = vmul.f32 %v2440, %v2519
        %v2545 = vmul.f32 %v2441, %v2519
        %v2546 = vmul.f32 %v2442, %v2519
        %v2547 = vmul.f32 %v2443, %v2519
        %v2548 = vmul.f32 %v2444, %v2519
        %v2549 = vmul.f32 %v2445, %v2519
        %v2550 = vmul.f32 %v2446, %v2519
        %v2551 = vmul.f32 %v2447, %v2519
        %v2584 = vrot.slane %v2520, 1
        %v2585 = vrot.slane %v2521, 1
        %v2586 = vsel %vm1700, %v2584, %v2585
        %v2587 = vrot.slane %v2522, 1
        %v2588 = vsel %vm1700, %v2585, %v2587
        %v2589 = vrot.slane %v2523, 1
        %v2590 = vsel %vm1700, %v2587, %v2589
        %v2591 = vrot.slane %v2524, 1
        %v2592 = vsel %vm1700, %v2589, %v2591
        %v2593 = vrot.slane %v2525, 1
        %v2594 = vsel %vm1700, %v2591, %v2593
        %v2595 = vrot.slane %v2526, 1
        %v2596 = vsel %vm1700, %v2593, %v2595
        %v2597 = vrot.slane %v2527, 1
        %v2598 = vsel %vm1700, %v2595, %v2597
        %v2599 = vrot.slane %v2528, 1
        %v2600 = vsel %vm1700, %v2597, %v2599
        %v2601 = vrot.slane %v2529, 1
        %v2602 = vsel %vm1700, %v2599, %v2601
        %v2603 = vrot.slane %v2530, 1
        %v2604 = vsel %vm1700, %v2601, %v2603
        %v2605 = vrot.slane %v2531, 1
        %v2606 = vsel %vm1700, %v2603, %v2605
        %v2607 = vrot.slane %v2532, 1
        %v2608 = vsel %vm1700, %v2605, %v2607
        %v2609 = vrot.slane %v2533, 1
        %v2610 = vsel %vm1700, %v2607, %v2609
        %v2611 = vrot.slane %v2534, 1
        %v2612 = vsel %vm1700, %v2609, %v2611
        %v2613 = vrot.slane %v2535, 1
        %v2614 = vsel %vm1700, %v2611, %v2613
        %v2615 = vrot.slane %v2536, 1
        %v2616 = vsel %vm1700, %v2613, %v2615
        %v2617 = vrot.slane %v2537, 1
        %v2618 = vsel %vm1700, %v2615, %v2617
        %v2619 = vrot.slane %v2538, 1
        %v2620 = vsel %vm1700, %v2617, %v2619
        %v2621 = vrot.slane %v2539, 1
        %v2622 = vsel %vm1700, %v2619, %v2621
        %v2623 = vrot.slane %v2540, 1
        %v2624 = vsel %vm1700, %v2621, %v2623
        %v2625 = vrot.slane %v2541, 1
        %v2626 = vsel %vm1700, %v2623, %v2625
        %v2627 = vrot.slane %v2542, 1
        %v2628 = vsel %vm1700, %v2625, %v2627
        %v2629 = vrot.slane %v2543, 1
        %v2630 = vsel %vm1700, %v2627, %v2629
        %v2631 = vrot.slane %v2544, 1
        %v2632 = vsel %vm1700, %v2629, %v2631
        %v2633 = vrot.slane %v2545, 1
        %v2634 = vsel %vm1700, %v2631, %v2633
        %v2635 = vrot.slane %v2546, 1
        %v2636 = vsel %vm1700, %v2633, %v2635
        %v2637 = vrot.slane %v2547, 1
        %v2638 = vsel %vm1700, %v2635, %v2637
        %v2639 = vrot.slane %v2548, 1
        %v2640 = vsel %vm1700, %v2637, %v2639
        %v2641 = vrot.slane %v2549, 1
        %v2642 = vsel %vm1700, %v2639, %v2641
        %v2643 = vrot.slane %v2550, 1
        %v2644 = vsel %vm1700, %v2641, %v2643
        %v2645 = vrot.slane %v2551, 1
        %v2646 = vsel %vm1700, %v2643, %v2645
        %v2679 = vadd.f32 %v2484, %v2586
        %v2680 = vadd.f32 %v2485, %v2588
        %v2681 = vadd.f32 %v2486, %v2590
        %v2682 = vadd.f32 %v2487, %v2592
        %v2683 = vadd.f32 %v2488, %v2594
        %v2684 = vadd.f32 %v2489, %v2596
        %v2685 = vadd.f32 %v2490, %v2598
        %v2686 = vadd.f32 %v2491, %v2600
        %v2687 = vadd.f32 %v2492, %v2602
        %v2688 = vadd.f32 %v2493, %v2604
        %v2689 = vadd.f32 %v2494, %v2606
        %v2690 = vadd.f32 %v2495, %v2608
        %v2691 = vadd.f32 %v2496, %v2610
        %v2692 = vadd.f32 %v2497, %v2612
        %v2693 = vadd.f32 %v2498, %v2614
        %v2694 = vadd.f32 %v2499, %v2616
        %v2695 = vadd.f32 %v2500, %v2618
        %v2696 = vadd.f32 %v2501, %v2620
        %v2697 = vadd.f32 %v2502, %v2622
        %v2698 = vadd.f32 %v2503, %v2624
        %v2699 = vadd.f32 %v2504, %v2626
        %v2700 = vadd.f32 %v2505, %v2628
        %v2701 = vadd.f32 %v2506, %v2630
        %v2702 = vadd.f32 %v2507, %v2632
        %v2703 = vadd.f32 %v2508, %v2634
        %v2704 = vadd.f32 %v2509, %v2636
        %v2705 = vadd.f32 %v2510, %v2638
        %v2706 = vadd.f32 %v2511, %v2640
        %v2707 = vadd.f32 %v2512, %v2642
        %v2708 = vadd.f32 %v2513, %v2644
        %v2709 = vadd.f32 %v2514, %v2646
        %v2710 = vadd.f32 %v2515, %v2645
        %v2711 = vlaneseq
        %v2712 = vshrl.u32 %v2711, 7
        %v2713 = vsub.s32 7, %v2712
        %v2714 = vrot.slane %v1560, %v2713
        %v2715 = vmul.f32 %v2416, %v2714
        %v2716 = vmul.f32 %v2417, %v2714
        %v2717 = vmul.f32 %v2418, %v2714
        %v2718 = vmul.f32 %v2419, %v2714
        %v2719 = vmul.f32 %v2420, %v2714
        %v2720 = vmul.f32 %v2421, %v2714
        %v2721 = vmul.f32 %v2422, %v2714
        %v2722 = vmul.f32 %v2423, %v2714
        %v2723 = vmul.f32 %v2424, %v2714
        %v2724 = vmul.f32 %v2425, %v2714
        %v2725 = vmul.f32 %v2426, %v2714
        %v2726 = vmul.f32 %v2427, %v2714
        %v2727 = vmul.f32 %v2428, %v2714
        %v2728 = vmul.f32 %v2429, %v2714
        %v2729 = vmul.f32 %v2430, %v2714
        %v2730 = vmul.f32 %v2431, %v2714
        %v2731 = vmul.f32 %v2432, %v2714
        %v2732 = vmul.f32 %v2433, %v2714
        %v2733 = vmul.f32 %v2434, %v2714
        %v2734 = vmul.f32 %v2435, %v2714
        %v2735 = vmul.f32 %v2436, %v2714
        %v2736 = vmul.f32 %v2437, %v2714
        %v2737 = vmul.f32 %v2438, %v2714
        %v2738 = vmul.f32 %v2439, %v2714
        %v2739 = vmul.f32 %v2440, %v2714
        %v2740 = vmul.f32 %v2441, %v2714
        %v2741 = vmul.f32 %v2442, %v2714
        %v2742 = vmul.f32 %v2443, %v2714
        %v2743 = vmul.f32 %v2444, %v2714
        %v2744 = vmul.f32 %v2445, %v2714
        %v2745 = vmul.f32 %v2446, %v2714
        %v2746 = vmul.f32 %v2447, %v2714
        %v2779 = vrot.slane %v2715, 2
        %v2780 = vrot.slane %v2716, 2
        %v2781 = vsel %vm1896, %v2779, %v2780
        %v2782 = vrot.slane %v2717, 2
        %v2783 = vsel %vm1896, %v2780, %v2782
        %v2784 = vrot.slane %v2718, 2
        %v2785 = vsel %vm1896, %v2782, %v2784
        %v2786 = vrot.slane %v2719, 2
        %v2787 = vsel %vm1896, %v2784, %v2786
        %v2788 = vrot.slane %v2720, 2
        %v2789 = vsel %vm1896, %v2786, %v2788
        %v2790 = vrot.slane %v2721, 2
        %v2791 = vsel %vm1896, %v2788, %v2790
        %v2792 = vrot.slane %v2722, 2
        %v2793 = vsel %vm1896, %v2790, %v2792
        %v2794 = vrot.slane %v2723, 2
        %v2795 = vsel %vm1896, %v2792, %v2794
        %v2796 = vrot.slane %v2724, 2
        %v2797 = vsel %vm1896, %v2794, %v2796
        %v2798 = vrot.slane %v2725, 2
        %v2799 = vsel %vm1896, %v2796, %v2798
        %v2800 = vrot.slane %v2726, 2
        %v2801 = vsel %vm1896, %v2798, %v2800
        %v2802 = vrot.slane %v2727, 2
        %v2803 = vsel %vm1896, %v2800, %v2802
        %v2804 = vrot.slane %v2728, 2
        %v2805 = vsel %vm1896, %v2802, %v2804
        %v2806 = vrot.slane %v2729, 2
        %v2807 = vsel %vm1896, %v2804, %v2806
        %v2808 = vrot.slane %v2730, 2
        %v2809 = vsel %vm1896, %v2806, %v2808
        %v2810 = vrot.slane %v2731, 2
        %v2811 = vsel %vm1896, %v2808, %v2810
        %v2812 = vrot.slane %v2732, 2
        %v2813 = vsel %vm1896, %v2810, %v2812
        %v2814 = vrot.slane %v2733, 2
        %v2815 = vsel %vm1896, %v2812, %v2814
        %v2816 = vrot.slane %v2734, 2
        %v2817 = vsel %vm1896, %v2814, %v2816
        %v2818 = vrot.slane %v2735, 2
        %v2819 = vsel %vm1896, %v2816, %v2818
        %v2820 = vrot.slane %v2736, 2
        %v2821 = vsel %vm1896, %v2818, %v2820
        %v2822 = vrot.slane %v2737, 2
        %v2823 = vsel %vm1896, %v2820, %v2822
        %v2824 = vrot.slane %v2738, 2
        %v2825 = vsel %vm1896, %v2822, %v2824
        %v2826 = vrot.slane %v2739, 2
        %v2827 = vsel %vm1896, %v2824, %v2826
        %v2828 = vrot.slane %v2740, 2
        %v2829 = vsel %vm1896, %v2826, %v2828
        %v2830 = vrot.slane %v2741, 2
        %v2831 = vsel %vm1896, %v2828, %v2830
        %v2832 = vrot.slane %v2742, 2
        %v2833 = vsel %vm1896, %v2830, %v2832
        %v2834 = vrot.slane %v2743, 2
        %v2835 = vsel %vm1896, %v2832, %v2834
        %v2836 = vrot.slane %v2744, 2
        %v2837 = vsel %vm1896, %v2834, %v2836
        %v2838 = vrot.slane %v2745, 2
        %v2839 = vsel %vm1896, %v2836, %v2838
        %v2840 = vrot.slane %v2746, 2
        %v2841 = vsel %vm1896, %v2838, %v2840
        %v2874 = vadd.f32 %v2679, %v2781
        %v2875 = vadd.f32 %v2680, %v2783
        %v2876 = vadd.f32 %v2681, %v2785
        %v2877 = vadd.f32 %v2682, %v2787
        %v2878 = vadd.f32 %v2683, %v2789
        %v2879 = vadd.f32 %v2684, %v2791
        %v2880 = vadd.f32 %v2685, %v2793
        %v2881 = vadd.f32 %v2686, %v2795
        %v2882 = vadd.f32 %v2687, %v2797
        %v2883 = vadd.f32 %v2688, %v2799
        %v2884 = vadd.f32 %v2689, %v2801
        %v2885 = vadd.f32 %v2690, %v2803
        %v2886 = vadd.f32 %v2691, %v2805
        %v2887 = vadd.f32 %v2692, %v2807
        %v2888 = vadd.f32 %v2693, %v2809
        %v2889 = vadd.f32 %v2694, %v2811
        %v2890 = vadd.f32 %v2695, %v2813
        %v2891 = vadd.f32 %v2696, %v2815
        %v2892 = vadd.f32 %v2697, %v2817
        %v2893 = vadd.f32 %v2698, %v2819
        %v2894 = vadd.f32 %v2699, %v2821
        %v2895 = vadd.f32 %v2700, %v2823
        %v2896 = vadd.f32 %v2701, %v2825
        %v2897 = vadd.f32 %v2702, %v2827
        %v2898 = vadd.f32 %v2703, %v2829
        %v2899 = vadd.f32 %v2704, %v2831
        %v2900 = vadd.f32 %v2705, %v2833
        %v2901 = vadd.f32 %v2706, %v2835
        %v2902 = vadd.f32 %v2707, %v2837
        %v2903 = vadd.f32 %v2708, %v2839
        %v2904 = vadd.f32 %v2709, %v2841
        %v2905 = vadd.f32 %v2710, %v2840
        %v2906 = vlaneseq
        %v2907 = vshrl.u32 %v2906, 7
        %v2908 = vsub.s32 0, %v2907
        %v2909 = vrot.slane %v1561, %v2908
        %v2910 = vmul.f32 %v2416, %v2909
        %v2911 = vmul.f32 %v2417, %v2909
        %v2912 = vmul.f32 %v2418, %v2909
        %v2913 = vmul.f32 %v2419, %v2909
        %v2914 = vmul.f32 %v2420, %v2909
        %v2915 = vmul.f32 %v2421, %v2909
        %v2916 = vmul.f32 %v2422, %v2909
        %v2917 = vmul.f32 %v2423, %v2909
        %v2918 = vmul.f32 %v2424, %v2909
        %v2919 = vmul.f32 %v2425, %v2909
        %v2920 = vmul.f32 %v2426, %v2909
        %v2921 = vmul.f32 %v2427, %v2909
        %v2922 = vmul.f32 %v2428, %v2909
        %v2923 = vmul.f32 %v2429, %v2909
        %v2924 = vmul.f32 %v2430, %v2909
        %v2925 = vmul.f32 %v2431, %v2909
        %v2926 = vmul.f32 %v2432, %v2909
        %v2927 = vmul.f32 %v2433, %v2909
        %v2928 = vmul.f32 %v2434, %v2909
        %v2929 = vmul.f32 %v2435, %v2909
        %v2930 = vmul.f32 %v2436, %v2909
        %v2931 = vmul.f32 %v2437, %v2909
        %v2932 = vmul.f32 %v2438, %v2909
        %v2933 = vmul.f32 %v2439, %v2909
        %v2934 = vmul.f32 %v2440, %v2909
        %v2935 = vmul.f32 %v2441, %v2909
        %v2936 = vmul.f32 %v2442, %v2909
        %v2937 = vmul.f32 %v2443, %v2909
        %v2938 = vmul.f32 %v2444, %v2909
        %v2939 = vmul.f32 %v2445, %v2909
        %v2940 = vmul.f32 %v2446, %v2909
        %v2941 = vmul.f32 %v2447, %v2909
        %v2974 = vrot.slane %v2910, 3
        %v2975 = vrot.slane %v2911, 3
        %v2976 = vsel %vm2092, %v2974, %v2975
        %v2977 = vrot.slane %v2912, 3
        %v2978 = vsel %vm2092, %v2975, %v2977
        %v2979 = vrot.slane %v2913, 3
        %v2980 = vsel %vm2092, %v2977, %v2979
        %v2981 = vrot.slane %v2914, 3
        %v2982 = vsel %vm2092, %v2979, %v2981
        %v2983 = vrot.slane %v2915, 3
        %v2984 = vsel %vm2092, %v2981, %v2983
        %v2985 = vrot.slane %v2916, 3
        %v2986 = vsel %vm2092, %v2983, %v2985
        %v2987 = vrot.slane %v2917, 3
        %v2988 = vsel %vm2092, %v2985, %v2987
        %v2989 = vrot.slane %v2918, 3
        %v2990 = vsel %vm2092, %v2987, %v2989
        %v2991 = vrot.slane %v2919, 3
        %v2992 = vsel %vm2092, %v2989, %v2991
        %v2993 = vrot.slane %v2920, 3
        %v2994 = vsel %vm2092, %v2991, %v2993
        %v2995 = vrot.slane %v2921, 3
        %v2996 = vsel %vm2092, %v2993, %v2995
        %v2997 = vrot.slane %v2922, 3
        %v2998 = vsel %vm2092, %v2995, %v2997
        %v2999 = vrot.slane %v2923, 3
        %v3000 = vsel %vm2092, %v2997, %v2999
        %v3001 = vrot.slane %v2924, 3
        %v3002 = vsel %vm2092, %v2999, %v3001
        %v3003 = vrot.slane %v2925, 3
        %v3004 = vsel %vm2092, %v3001, %v3003
        %v3005 = vrot.slane %v2926, 3
        %v3006 = vsel %vm2092, %v3003, %v3005
        %v3007 = vrot.slane %v2927, 3
        %v3008 = vsel %vm2092, %v3005, %v3007
        %v3009 = vrot.slane %v2928, 3
        %v3010 = vsel %vm2092, %v3007, %v3009
        %v3011 = vrot.slane %v2929, 3
        %v3012 = vsel %vm2092, %v3009, %v3011
        %v3013 = vrot.slane %v2930, 3
        %v3014 = vsel %vm2092, %v3011, %v3013
        %v3015 = vrot.slane %v2931, 3
        %v3016 = vsel %vm2092, %v3013, %v3015
        %v3017 = vrot.slane %v2932, 3
        %v3018 = vsel %vm2092, %v3015, %v3017
        %v3019 = vrot.slane %v2933, 3
        %v3020 = vsel %vm2092, %v3017, %v3019
        %v3021 = vrot.slane %v2934, 3
        %v3022 = vsel %vm2092, %v3019, %v3021
        %v3023 = vrot.slane %v2935, 3
        %v3024 = vsel %vm2092, %v3021, %v3023
        %v3025 = vrot.slane %v2936, 3
        %v3026 = vsel %vm2092, %v3023, %v3025
        %v3027 = vrot.slane %v2937, 3
        %v3028 = vsel %vm2092, %v3025, %v3027
        %v3029 = vrot.slane %v2938, 3
        %v3030 = vsel %vm2092, %v3027, %v3029
        %v3031 = vrot.slane %v2939, 3
        %v3032 = vsel %vm2092, %v3029, %v3031
        %v3033 = vrot.slane %v2940, 3
        %v3034 = vsel %vm2092, %v3031, %v3033
        %v3035 = vrot.slane %v2941, 3
        %v3036 = vsel %vm2092, %v3033, %v3035
        %v3069 = vadd.f32 %v2874, %v2976
        %v3070 = vadd.f32 %v2875, %v2978
        %v3071 = vadd.f32 %v2876, %v2980
        %v3072 = vadd.f32 %v2877, %v2982
        %v3073 = vadd.f32 %v2878, %v2984
        %v3074 = vadd.f32 %v2879, %v2986
        %v3075 = vadd.f32 %v2880, %v2988
        %v3076 = vadd.f32 %v2881, %v2990
        %v3077 = vadd.f32 %v2882, %v2992
        %v3078 = vadd.f32 %v2883, %v2994
        %v3079 = vadd.f32 %v2884, %v2996
        %v3080 = vadd.f32 %v2885, %v2998
        %v3081 = vadd.f32 %v2886, %v3000
        %v3082 = vadd.f32 %v2887, %v3002
        %v3083 = vadd.f32 %v2888, %v3004
        %v3084 = vadd.f32 %v2889, %v3006
        %v3085 = vadd.f32 %v2890, %v3008
        %v3086 = vadd.f32 %v2891, %v3010
        %v3087 = vadd.f32 %v2892, %v3012
        %v3088 = vadd.f32 %v2893, %v3014
        %v3089 = vadd.f32 %v2894, %v3016
        %v3090 = vadd.f32 %v2895, %v3018
        %v3091 = vadd.f32 %v2896, %v3020
        %v3092 = vadd.f32 %v2897, %v3022
        %v3093 = vadd.f32 %v2898, %v3024
        %v3094 = vadd.f32 %v2899, %v3026
        %v3095 = vadd.f32 %v2900, %v3028
        %v3096 = vadd.f32 %v2901, %v3030
        %v3097 = vadd.f32 %v2902, %v3032
        %v3098 = vadd.f32 %v2903, %v3034
        %v3099 = vadd.f32 %v2904, %v3036
        %v3100 = vadd.f32 %v2905, %v3035
        %v3101 = vlaneseq
        %v3102 = vshrl.u32 %v3101, 7
        %v3103 = vsub.s32 1, %v3102
        %v3104 = vrot.slane %v1561, %v3103
        %v3105 = vmul.f32 %v2416, %v3104
        %v3106 = vmul.f32 %v2417, %v3104
        %v3107 = vmul.f32 %v2418, %v3104
        %v3108 = vmul.f32 %v2419, %v3104
        %v3109 = vmul.f32 %v2420, %v3104
        %v3110 = vmul.f32 %v2421, %v3104
        %v3111 = vmul.f32 %v2422, %v3104
        %v3112 = vmul.f32 %v2423, %v3104
        %v3113 = vmul.f32 %v2424, %v3104
        %v3114 = vmul.f32 %v2425, %v3104
        %v3115 = vmul.f32 %v2426, %v3104
        %v3116 = vmul.f32 %v2427, %v3104
        %v3117 = vmul.f32 %v2428, %v3104
        %v3118 = vmul.f32 %v2429, %v3104
        %v3119 = vmul.f32 %v2430, %v3104
        %v3120 = vmul.f32 %v2431, %v3104
        %v3121 = vmul.f32 %v2432, %v3104
        %v3122 = vmul.f32 %v2433, %v3104
        %v3123 = vmul.f32 %v2434, %v3104
        %v3124 = vmul.f32 %v2435, %v3104
        %v3125 = vmul.f32 %v2436, %v3104
        %v3126 = vmul.f32 %v2437, %v3104
        %v3127 = vmul.f32 %v2438, %v3104
        %v3128 = vmul.f32 %v2439, %v3104
        %v3129 = vmul.f32 %v2440, %v3104
        %v3130 = vmul.f32 %v2441, %v3104
        %v3131 = vmul.f32 %v2442, %v3104
        %v3132 = vmul.f32 %v2443, %v3104
        %v3133 = vmul.f32 %v2444, %v3104
        %v3134 = vmul.f32 %v2445, %v3104
        %v3135 = vmul.f32 %v2446, %v3104
        %v3136 = vmul.f32 %v2447, %v3104
        %v3169 = vrot.slane %v3105, 4
        %v3170 = vrot.slane %v3106, 4
        %v3171 = vsel %vm2288, %v3169, %v3170
        %v3172 = vrot.slane %v3107, 4
        %v3173 = vsel %vm2288, %v3170, %v3172
        %v3174 = vrot.slane %v3108, 4
        %v3175 = vsel %vm2288, %v3172, %v3174
        %v3176 = vrot.slane %v3109, 4
        %v3177 = vsel %vm2288, %v3174, %v3176
        %v3178 = vrot.slane %v3110, 4
        %v3179 = vsel %vm2288, %v3176, %v3178
        %v3180 = vrot.slane %v3111, 4
        %v3181 = vsel %vm2288, %v3178, %v3180
        %v3182 = vrot.slane %v3112, 4
        %v3183 = vsel %vm2288, %v3180, %v3182
        %v3184 = vrot.slane %v3113, 4
        %v3185 = vsel %vm2288, %v3182, %v3184
        %v3186 = vrot.slane %v3114, 4
        %v3187 = vsel %vm2288, %v3184, %v3186
        %v3188 = vrot.slane %v3115, 4
        %v3189 = vsel %vm2288, %v3186, %v3188
        %v3190 = vrot.slane %v3116, 4
        %v3191 = vsel %vm2288, %v3188, %v3190
        %v3192 = vrot.slane %v3117, 4
        %v3193 = vsel %vm2288, %v3190, %v3192
        %v3194 = vrot.slane %v3118, 4
        %v3195 = vsel %vm2288, %v3192, %v3194
        %v3196 = vrot.slane %v3119, 4
        %v3197 = vsel %vm2288, %v3194, %v3196
        %v3198 = vrot.slane %v3120, 4
        %v3199 = vsel %vm2288, %v3196, %v3198
        %v3200 = vrot.slane %v3121, 4
        %v3201 = vsel %vm2288, %v3198, %v3200
        %v3202 = vrot.slane %v3122, 4
        %v3203 = vsel %vm2288, %v3200, %v3202
        %v3204 = vrot.slane %v3123, 4
        %v3205 = vsel %vm2288, %v3202, %v3204
        %v3206 = vrot.slane %v3124, 4
        %v3207 = vsel %vm2288, %v3204, %v3206
        %v3208 = vrot.slane %v3125, 4
        %v3209 = vsel %vm2288, %v3206, %v3208
        %v3210 = vrot.slane %v3126, 4
        %v3211 = vsel %vm2288, %v3208, %v3210
        %v3212 = vrot.slane %v3127, 4
        %v3213 = vsel %vm2288, %v3210, %v3212
        %v3214 = vrot.slane %v3128, 4
        %v3215 = vsel %vm2288, %v3212, %v3214
        %v3216 = vrot.slane %v3129, 4
        %v3217 = vsel %vm2288, %v3214, %v3216
        %v3218 = vrot.slane %v3130, 4
        %v3219 = vsel %vm2288, %v3216, %v3218
        %v3220 = vrot.slane %v3131, 4
        %v3221 = vsel %vm2288, %v3218, %v3220
        %v3222 = vrot.slane %v3132, 4
        %v3223 = vsel %vm2288, %v3220, %v3222
        %v3224 = vrot.slane %v3133, 4
        %v3225 = vsel %vm2288, %v3222, %v3224
        %v3226 = vrot.slane %v3134, 4
        %v3227 = vsel %vm2288, %v3224, %v3226
        %v3228 = vrot.slane %v3135, 4
        %v3229 = vsel %vm2288, %v3226, %v3228
        %v3230 = vrot.slane %v3136, 4
        %v3231 = vsel %vm2288, %v3228, %v3230
        %v3264 = vadd.f32 %v3069, %v3171
        %v3265 = vadd.f32 %v3070, %v3173
        %v3266 = vadd.f32 %v3071, %v3175
        %v3267 = vadd.f32 %v3072, %v3177
        %v3268 = vadd.f32 %v3073, %v3179
        %v3269 = vadd.f32 %v3074, %v3181
        %v3270 = vadd.f32 %v3075, %v3183
        %v3271 = vadd.f32 %v3076, %v3185
        %v3272 = vadd.f32 %v3077, %v3187
        %v3273 = vadd.f32 %v3078, %v3189
        %v3274 = vadd.f32 %v3079, %v3191
        %v3275 = vadd.f32 %v3080, %v3193
        %v3276 = vadd.f32 %v3081, %v3195
        %v3277 = vadd.f32 %v3082, %v3197
        %v3278 = vadd.f32 %v3083, %v3199
        %v3279 = vadd.f32 %v3084, %v3201
        %v3280 = vadd.f32 %v3085, %v3203
        %v3281 = vadd.f32 %v3086, %v3205
        %v3282 = vadd.f32 %v3087, %v3207
        %v3283 = vadd.f32 %v3088, %v3209
        %v3284 = vadd.f32 %v3089, %v3211
        %v3285 = vadd.f32 %v3090, %v3213
        %v3286 = vadd.f32 %v3091, %v3215
        %v3287 = vadd.f32 %v3092, %v3217
        %v3288 = vadd.f32 %v3093, %v3219
        %v3289 = vadd.f32 %v3094, %v3221
        %v3290 = vadd.f32 %v3095, %v3223
        %v3291 = vadd.f32 %v3096, %v3225
        %v3292 = vadd.f32 %v3097, %v3227
        %v3293 = vadd.f32 %v3098, %v3229
        %v3294 = vadd.f32 %v3099, %v3231
        %v3295 = vadd.f32 %v3100, %v3230
        %v3296 = vld [vmem:[#allocation2 + $0x24] sm:$0xff]
        %v3297 = vld [vmem:[#allocation2 + $0x2c] sm:$0xff]
        %v3298 = vld [vmem:[#allocation2 + $0x34] sm:$0xff]
        %v3299 = vld [vmem:[#allocation2 + $0x3c] sm:$0xff]
        %v3300 = vld [vmem:[#allocation2 + $0x44] sm:$0xff]
        %v3301 = vld [vmem:[#allocation2 + $0x4c] sm:$0xff]
        %v3302 = vld [vmem:[#allocation2 + $0x54] sm:$0xff]
        %v3303 = vld [vmem:[#allocation2 + $0x5c] sm:$0xff]
        %v3304 = vld [vmem:[#allocation2 + $0x64] sm:$0xff]
        %v3305 = vld [vmem:[#allocation2 + $0x6c] sm:$0xff]
        %v3306 = vld [vmem:[#allocation2 + $0x74] sm:$0xff]
        %v3307 = vld [vmem:[#allocation2 + $0x7c] sm:$0xff]
        %v3308 = vld [vmem:[#allocation2 + $0x84] sm:$0xff]
        %v3309 = vld [vmem:[#allocation2 + $0x8c] sm:$0xff]
        %v3310 = vld [vmem:[#allocation2 + $0x94] sm:$0xff]
        %v3311 = vld [vmem:[#allocation2 + $0x9c] sm:$0xff]
        %v3312 = vld [vmem:[#allocation2 + $0xa4] sm:$0xff]
        %v3313 = vld [vmem:[#allocation2 + $0xac] sm:$0xff]
        %v3314 = vld [vmem:[#allocation2 + $0xb4] sm:$0xff]
        %v3315 = vld [vmem:[#allocation2 + $0xbc] sm:$0xff]
        %v3316 = vld [vmem:[#allocation2 + $0xc4] sm:$0xff]
        %v3317 = vld [vmem:[#allocation2 + $0xcc] sm:$0xff]
        %v3318 = vld [vmem:[#allocation2 + $0xd4] sm:$0xff]
        %v3319 = vld [vmem:[#allocation2 + $0xdc] sm:$0xff]
        %v3320 = vld [vmem:[#allocation2 + $0xe4] sm:$0xff]
        %v3321 = vld [vmem:[#allocation2 + $0xec] sm:$0xff]
        %v3322 = vld [vmem:[#allocation2 + $0xf4] sm:$0xff]
        %v3323 = vld [vmem:[#allocation2 + $0xfc] sm:$0xff]
        %v3324 = vld [vmem:[#allocation2 + $0x104] sm:$0xff]
        %v3325 = vld [vmem:[#allocation2 + $0x10c] sm:$0xff]
        %v3326 = vld [vmem:[#allocation2 + $0x114] sm:$0xff]
        %v3327 = vld [vmem:[#allocation2 + $0x11c] sm:$0xff]
        %v3328 = vlaneseq
        %v3329 = vshrl.u32 %v3328, 7
        %v3330 = vsub.s32 2, %v3329
        %v3331 = vrot.slane %v1561, %v3330
        %v3332 = vmul.f32 %v3296, %v3331
        %v3333 = vmul.f32 %v3297, %v3331
        %v3334 = vmul.f32 %v3298, %v3331
        %v3335 = vmul.f32 %v3299, %v3331
        %v3336 = vmul.f32 %v3300, %v3331
        %v3337 = vmul.f32 %v3301, %v3331
        %v3338 = vmul.f32 %v3302, %v3331
        %v3339 = vmul.f32 %v3303, %v3331
        %v3340 = vmul.f32 %v3304, %v3331
        %v3341 = vmul.f32 %v3305, %v3331
        %v3342 = vmul.f32 %v3306, %v3331
        %v3343 = vmul.f32 %v3307, %v3331
        %v3344 = vmul.f32 %v3308, %v3331
        %v3345 = vmul.f32 %v3309, %v3331
        %v3346 = vmul.f32 %v3310, %v3331
        %v3347 = vmul.f32 %v3311, %v3331
        %v3348 = vmul.f32 %v3312, %v3331
        %v3349 = vmul.f32 %v3313, %v3331
        %v3350 = vmul.f32 %v3314, %v3331
        %v3351 = vmul.f32 %v3315, %v3331
        %v3352 = vmul.f32 %v3316, %v3331
        %v3353 = vmul.f32 %v3317, %v3331
        %v3354 = vmul.f32 %v3318, %v3331
        %v3355 = vmul.f32 %v3319, %v3331
        %v3356 = vmul.f32 %v3320, %v3331
        %v3357 = vmul.f32 %v3321, %v3331
        %v3358 = vmul.f32 %v3322, %v3331
        %v3359 = vmul.f32 %v3323, %v3331
        %v3360 = vmul.f32 %v3324, %v3331
        %v3361 = vmul.f32 %v3325, %v3331
        %v3362 = vmul.f32 %v3326, %v3331
        %v3363 = vmul.f32 %v3327, %v3331
        %v3364 = vadd.f32 %v3264, %v3332
        %v3365 = vadd.f32 %v3265, %v3333
        %v3366 = vadd.f32 %v3266, %v3334
        %v3367 = vadd.f32 %v3267, %v3335
        %v3368 = vadd.f32 %v3268, %v3336
        %v3369 = vadd.f32 %v3269, %v3337
        %v3370 = vadd.f32 %v3270, %v3338
        %v3371 = vadd.f32 %v3271, %v3339
        %v3372 = vadd.f32 %v3272, %v3340
        %v3373 = vadd.f32 %v3273, %v3341
        %v3374 = vadd.f32 %v3274, %v3342
        %v3375 = vadd.f32 %v3275, %v3343
        %v3376 = vadd.f32 %v3276, %v3344
        %v3377 = vadd.f32 %v3277, %v3345
        %v3378 = vadd.f32 %v3278, %v3346
        %v3379 = vadd.f32 %v3279, %v3347
        %v3380 = vadd.f32 %v3280, %v3348
        %v3381 = vadd.f32 %v3281, %v3349
        %v3382 = vadd.f32 %v3282, %v3350
        %v3383 = vadd.f32 %v3283, %v3351
        %v3384 = vadd.f32 %v3284, %v3352
        %v3385 = vadd.f32 %v3285, %v3353
        %v3386 = vadd.f32 %v3286, %v3354
        %v3387 = vadd.f32 %v3287, %v3355
        %v3388 = vadd.f32 %v3288, %v3356
        %v3389 = vadd.f32 %v3289, %v3357
        %v3390 = vadd.f32 %v3290, %v3358
        %v3391 = vadd.f32 %v3291, %v3359
        %v3392 = vadd.f32 %v3292, %v3360
        %v3393 = vadd.f32 %v3293, %v3361
        %v3394 = vadd.f32 %v3294, %v3362
        %v3395 = vadd.f32 %v3295, %v3363
        %v3396 = vlaneseq
        %v3397 = vshrl.u32 %v3396, 7
        %v3398 = vsub.s32 3, %v3397
        %v3399 = vrot.slane %v1561, %v3398
        %v3400 = vmul.f32 %v3296, %v3399
        %v3401 = vmul.f32 %v3297, %v3399
        %v3402 = vmul.f32 %v3298, %v3399
        %v3403 = vmul.f32 %v3299, %v3399
        %v3404 = vmul.f32 %v3300, %v3399
        %v3405 = vmul.f32 %v3301, %v3399
        %v3406 = vmul.f32 %v3302, %v3399
        %v3407 = vmul.f32 %v3303, %v3399
        %v3408 = vmul.f32 %v3304, %v3399
        %v3409 = vmul.f32 %v3305, %v3399
        %v3410 = vmul.f32 %v3306, %v3399
        %v3411 = vmul.f32 %v3307, %v3399
        %v3412 = vmul.f32 %v3308, %v3399
        %v3413 = vmul.f32 %v3309, %v3399
        %v3414 = vmul.f32 %v3310, %v3399
        %v3415 = vmul.f32 %v3311, %v3399
        %v3416 = vmul.f32 %v3312, %v3399
        %v3417 = vmul.f32 %v3313, %v3399
        %v3418 = vmul.f32 %v3314, %v3399
        %v3419 = vmul.f32 %v3315, %v3399
        %v3420 = vmul.f32 %v3316, %v3399
        %v3421 = vmul.f32 %v3317, %v3399
        %v3422 = vmul.f32 %v3318, %v3399
        %v3423 = vmul.f32 %v3319, %v3399
        %v3424 = vmul.f32 %v3320, %v3399
        %v3425 = vmul.f32 %v3321, %v3399
        %v3426 = vmul.f32 %v3322, %v3399
        %v3427 = vmul.f32 %v3323, %v3399
        %v3428 = vmul.f32 %v3324, %v3399
        %v3429 = vmul.f32 %v3325, %v3399
        %v3430 = vmul.f32 %v3326, %v3399
        %v3431 = vmul.f32 %v3327, %v3399
        %v3464 = vrot.slane %v3400, 1
        %v3465 = vrot.slane %v3401, 1
        %v3466 = vsel %vm1700, %v3464, %v3465
        %v3467 = vrot.slane %v3402, 1
        %v3468 = vsel %vm1700, %v3465, %v3467
        %v3469 = vrot.slane %v3403, 1
        %v3470 = vsel %vm1700, %v3467, %v3469
        %v3471 = vrot.slane %v3404, 1
        %v3472 = vsel %vm1700, %v3469, %v3471
        %v3473 = vrot.slane %v3405, 1
        %v3474 = vsel %vm1700, %v3471, %v3473
        %v3475 = vrot.slane %v3406, 1
        %v3476 = vsel %vm1700, %v3473, %v3475
        %v3477 = vrot.slane %v3407, 1
        %v3478 = vsel %vm1700, %v3475, %v3477
        %v3479 = vrot.slane %v3408, 1
        %v3480 = vsel %vm1700, %v3477, %v3479
        %v3481 = vrot.slane %v3409, 1
        %v3482 = vsel %vm1700, %v3479, %v3481
        %v3483 = vrot.slane %v3410, 1
        %v3484 = vsel %vm1700, %v3481, %v3483
        %v3485 = vrot.slane %v3411, 1
        %v3486 = vsel %vm1700, %v3483, %v3485
        %v3487 = vrot.slane %v3412, 1
        %v3488 = vsel %vm1700, %v3485, %v3487
        %v3489 = vrot.slane %v3413, 1
        %v3490 = vsel %vm1700, %v3487, %v3489
        %v3491 = vrot.slane %v3414, 1
        %v3492 = vsel %vm1700, %v3489, %v3491
        %v3493 = vrot.slane %v3415, 1
        %v3494 = vsel %vm1700, %v3491, %v3493
        %v3495 = vrot.slane %v3416, 1
        %v3496 = vsel %vm1700, %v3493, %v3495
        %v3497 = vrot.slane %v3417, 1
        %v3498 = vsel %vm1700, %v3495, %v3497
        %v3499 = vrot.slane %v3418, 1
        %v3500 = vsel %vm1700, %v3497, %v3499
        %v3501 = vrot.slane %v3419, 1
        %v3502 = vsel %vm1700, %v3499, %v3501
        %v3503 = vrot.slane %v3420, 1
        %v3504 = vsel %vm1700, %v3501, %v3503
        %v3505 = vrot.slane %v3421, 1
        %v3506 = vsel %vm1700, %v3503, %v3505
        %v3507 = vrot.slane %v3422, 1
        %v3508 = vsel %vm1700, %v3505, %v3507
        %v3509 = vrot.slane %v3423, 1
        %v3510 = vsel %vm1700, %v3507, %v3509
        %v3511 = vrot.slane %v3424, 1
        %v3512 = vsel %vm1700, %v3509, %v3511
        %v3513 = vrot.slane %v3425, 1
        %v3514 = vsel %vm1700, %v3511, %v3513
        %v3515 = vrot.slane %v3426, 1
        %v3516 = vsel %vm1700, %v3513, %v3515
        %v3517 = vrot.slane %v3427, 1
        %v3518 = vsel %vm1700, %v3515, %v3517
        %v3519 = vrot.slane %v3428, 1
        %v3520 = vsel %vm1700, %v3517, %v3519
        %v3521 = vrot.slane %v3429, 1
        %v3522 = vsel %vm1700, %v3519, %v3521
        %v3523 = vrot.slane %v3430, 1
        %v3524 = vsel %vm1700, %v3521, %v3523
        %v3525 = vrot.slane %v3431, 1
        %v3526 = vsel %vm1700, %v3523, %v3525
        %v3559 = vadd.f32 %v3364, %v3466
        %v3560 = vadd.f32 %v3365, %v3468
        %v3561 = vadd.f32 %v3366, %v3470
        %v3562 = vadd.f32 %v3367, %v3472
        %v3563 = vadd.f32 %v3368, %v3474
        %v3564 = vadd.f32 %v3369, %v3476
        %v3565 = vadd.f32 %v3370, %v3478
        %v3566 = vadd.f32 %v3371, %v3480
        %v3567 = vadd.f32 %v3372, %v3482
        %v3568 = vadd.f32 %v3373, %v3484
        %v3569 = vadd.f32 %v3374, %v3486
        %v3570 = vadd.f32 %v3375, %v3488
        %v3571 = vadd.f32 %v3376, %v3490
        %v3572 = vadd.f32 %v3377, %v3492
        %v3573 = vadd.f32 %v3378, %v3494
        %v3574 = vadd.f32 %v3379, %v3496
        %v3575 = vadd.f32 %v3380, %v3498
        %v3576 = vadd.f32 %v3381, %v3500
        %v3577 = vadd.f32 %v3382, %v3502
        %v3578 = vadd.f32 %v3383, %v3504
        %v3579 = vadd.f32 %v3384, %v3506
        %v3580 = vadd.f32 %v3385, %v3508
        %v3581 = vadd.f32 %v3386, %v3510
        %v3582 = vadd.f32 %v3387, %v3512
        %v3583 = vadd.f32 %v3388, %v3514
        %v3584 = vadd.f32 %v3389, %v3516
        %v3585 = vadd.f32 %v3390, %v3518
        %v3586 = vadd.f32 %v3391, %v3520
        %v3587 = vadd.f32 %v3392, %v3522
        %v3588 = vadd.f32 %v3393, %v3524
        %v3589 = vadd.f32 %v3394, %v3526
        %v3590 = vadd.f32 %v3395, %v3525
        %v3591 = vlaneseq
        %v3592 = vshrl.u32 %v3591, 7
        %v3593 = vsub.s32 4, %v3592
        %v3594 = vrot.slane %v1561, %v3593
        %v3595 = vmul.f32 %v3296, %v3594
        %v3596 = vmul.f32 %v3297, %v3594
        %v3597 = vmul.f32 %v3298, %v3594
        %v3598 = vmul.f32 %v3299, %v3594
        %v3599 = vmul.f32 %v3300, %v3594
        %v3600 = vmul.f32 %v3301, %v3594
        %v3601 = vmul.f32 %v3302, %v3594
        %v3602 = vmul.f32 %v3303, %v3594
        %v3603 = vmul.f32 %v3304, %v3594
        %v3604 = vmul.f32 %v3305, %v3594
        %v3605 = vmul.f32 %v3306, %v3594
        %v3606 = vmul.f32 %v3307, %v3594
        %v3607 = vmul.f32 %v3308, %v3594
        %v3608 = vmul.f32 %v3309, %v3594
        %v3609 = vmul.f32 %v3310, %v3594
        %v3610 = vmul.f32 %v3311, %v3594
        %v3611 = vmul.f32 %v3312, %v3594
        %v3612 = vmul.f32 %v3313, %v3594
        %v3613 = vmul.f32 %v3314, %v3594
        %v3614 = vmul.f32 %v3315, %v3594
        %v3615 = vmul.f32 %v3316, %v3594
        %v3616 = vmul.f32 %v3317, %v3594
        %v3617 = vmul.f32 %v3318, %v3594
        %v3618 = vmul.f32 %v3319, %v3594
        %v3619 = vmul.f32 %v3320, %v3594
        %v3620 = vmul.f32 %v3321, %v3594
        %v3621 = vmul.f32 %v3322, %v3594
        %v3622 = vmul.f32 %v3323, %v3594
        %v3623 = vmul.f32 %v3324, %v3594
        %v3624 = vmul.f32 %v3325, %v3594
        %v3625 = vmul.f32 %v3326, %v3594
        %v3626 = vmul.f32 %v3327, %v3594
        %v3659 = vrot.slane %v3595, 2
        %v3660 = vrot.slane %v3596, 2
        %v3661 = vsel %vm1896, %v3659, %v3660
        %v3662 = vrot.slane %v3597, 2
        %v3663 = vsel %vm1896, %v3660, %v3662
        %v3664 = vrot.slane %v3598, 2
        %v3665 = vsel %vm1896, %v3662, %v3664
        %v3666 = vrot.slane %v3599, 2
        %v3667 = vsel %vm1896, %v3664, %v3666
        %v3668 = vrot.slane %v3600, 2
        %v3669 = vsel %vm1896, %v3666, %v3668
        %v3670 = vrot.slane %v3601, 2
        %v3671 = vsel %vm1896, %v3668, %v3670
        %v3672 = vrot.slane %v3602, 2
        %v3673 = vsel %vm1896, %v3670, %v3672
        %v3674 = vrot.slane %v3603, 2
        %v3675 = vsel %vm1896, %v3672, %v3674
        %v3676 = vrot.slane %v3604, 2
        %v3677 = vsel %vm1896, %v3674, %v3676
        %v3678 = vrot.slane %v3605, 2
        %v3679 = vsel %vm1896, %v3676, %v3678
        %v3680 = vrot.slane %v3606, 2
        %v3681 = vsel %vm1896, %v3678, %v3680
        %v3682 = vrot.slane %v3607, 2
        %v3683 = vsel %vm1896, %v3680, %v3682
        %v3684 = vrot.slane %v3608, 2
        %v3685 = vsel %vm1896, %v3682, %v3684
        %v3686 = vrot.slane %v3609, 2
        %v3687 = vsel %vm1896, %v3684, %v3686
        %v3688 = vrot.slane %v3610, 2
        %v3689 = vsel %vm1896, %v3686, %v3688
        %v3690 = vrot.slane %v3611, 2
        %v3691 = vsel %vm1896, %v3688, %v3690
        %v3692 = vrot.slane %v3612, 2
        %v3693 = vsel %vm1896, %v3690, %v3692
        %v3694 = vrot.slane %v3613, 2
        %v3695 = vsel %vm1896, %v3692, %v3694
        %v3696 = vrot.slane %v3614, 2
        %v3697 = vsel %vm1896, %v3694, %v3696
        %v3698 = vrot.slane %v3615, 2
        %v3699 = vsel %vm1896, %v3696, %v3698
        %v3700 = vrot.slane %v3616, 2
        %v3701 = vsel %vm1896, %v3698, %v3700
        %v3702 = vrot.slane %v3617, 2
        %v3703 = vsel %vm1896, %v3700, %v3702
        %v3704 = vrot.slane %v3618, 2
        %v3705 = vsel %vm1896, %v3702, %v3704
        %v3706 = vrot.slane %v3619, 2
        %v3707 = vsel %vm1896, %v3704, %v3706
        %v3708 = vrot.slane %v3620, 2
        %v3709 = vsel %vm1896, %v3706, %v3708
        %v3710 = vrot.slane %v3621, 2
        %v3711 = vsel %vm1896, %v3708, %v3710
        %v3712 = vrot.slane %v3622, 2
        %v3713 = vsel %vm1896, %v3710, %v3712
        %v3714 = vrot.slane %v3623, 2
        %v3715 = vsel %vm1896, %v3712, %v3714
        %v3716 = vrot.slane %v3624, 2
        %v3717 = vsel %vm1896, %v3714, %v3716
        %v3718 = vrot.slane %v3625, 2
        %v3719 = vsel %vm1896, %v3716, %v3718
        %v3720 = vrot.slane %v3626, 2
        %v3721 = vsel %vm1896, %v3718, %v3720
        %v3754 = vadd.f32 %v3559, %v3661
        %v3755 = vadd.f32 %v3560, %v3663
        %v3756 = vadd.f32 %v3561, %v3665
        %v3757 = vadd.f32 %v3562, %v3667
        %v3758 = vadd.f32 %v3563, %v3669
        %v3759 = vadd.f32 %v3564, %v3671
        %v3760 = vadd.f32 %v3565, %v3673
        %v3761 = vadd.f32 %v3566, %v3675
        %v3762 = vadd.f32 %v3567, %v3677
        %v3763 = vadd.f32 %v3568, %v3679
        %v3764 = vadd.f32 %v3569, %v3681
        %v3765 = vadd.f32 %v3570, %v3683
        %v3766 = vadd.f32 %v3571, %v3685
        %v3767 = vadd.f32 %v3572, %v3687
        %v3768 = vadd.f32 %v3573, %v3689
        %v3769 = vadd.f32 %v3574, %v3691
        %v3770 = vadd.f32 %v3575, %v3693
        %v3771 = vadd.f32 %v3576, %v3695
        %v3772 = vadd.f32 %v3577, %v3697
        %v3773 = vadd.f32 %v3578, %v3699
        %v3774 = vadd.f32 %v3579, %v3701
        %v3775 = vadd.f32 %v3580, %v3703
        %v3776 = vadd.f32 %v3581, %v3705
        %v3777 = vadd.f32 %v3582, %v3707
        %v3778 = vadd.f32 %v3583, %v3709
        %v3779 = vadd.f32 %v3584, %v3711
        %v3780 = vadd.f32 %v3585, %v3713
        %v3781 = vadd.f32 %v3586, %v3715
        %v3782 = vadd.f32 %v3587, %v3717
        %v3783 = vadd.f32 %v3588, %v3719
        %v3784 = vadd.f32 %v3589, %v3721
        %v3785 = vadd.f32 %v3590, %v3720
        %v3786 = vlaneseq
        %v3787 = vshrl.u32 %v3786, 7
        %v3788 = vsub.s32 5, %v3787
        %v3789 = vrot.slane %v1561, %v3788
        %v3790 = vmul.f32 %v3296, %v3789
        %v3791 = vmul.f32 %v3297, %v3789
        %v3792 = vmul.f32 %v3298, %v3789
        %v3793 = vmul.f32 %v3299, %v3789
        %v3794 = vmul.f32 %v3300, %v3789
        %v3795 = vmul.f32 %v3301, %v3789
        %v3796 = vmul.f32 %v3302, %v3789
        %v3797 = vmul.f32 %v3303, %v3789
        %v3798 = vmul.f32 %v3304, %v3789
        %v3799 = vmul.f32 %v3305, %v3789
        %v3800 = vmul.f32 %v3306, %v3789
        %v3801 = vmul.f32 %v3307, %v3789
        %v3802 = vmul.f32 %v3308, %v3789
        %v3803 = vmul.f32 %v3309, %v3789
        %v3804 = vmul.f32 %v3310, %v3789
        %v3805 = vmul.f32 %v3311, %v3789
        %v3806 = vmul.f32 %v3312, %v3789
        %v3807 = vmul.f32 %v3313, %v3789
        %v3808 = vmul.f32 %v3314, %v3789
        %v3809 = vmul.f32 %v3315, %v3789
        %v3810 = vmul.f32 %v3316, %v3789
        %v3811 = vmul.f32 %v3317, %v3789
        %v3812 = vmul.f32 %v3318, %v3789
        %v3813 = vmul.f32 %v3319, %v3789
        %v3814 = vmul.f32 %v3320, %v3789
        %v3815 = vmul.f32 %v3321, %v3789
        %v3816 = vmul.f32 %v3322, %v3789
        %v3817 = vmul.f32 %v3323, %v3789
        %v3818 = vmul.f32 %v3324, %v3789
        %v3819 = vmul.f32 %v3325, %v3789
        %v3820 = vmul.f32 %v3326, %v3789
        %v3821 = vmul.f32 %v3327, %v3789
        %v3854 = vrot.slane %v3790, 3
        %v3855 = vrot.slane %v3791, 3
        %v3856 = vsel %vm2092, %v3854, %v3855
        %v3857 = vrot.slane %v3792, 3
        %v3858 = vsel %vm2092, %v3855, %v3857
        %v3859 = vrot.slane %v3793, 3
        %v3860 = vsel %vm2092, %v3857, %v3859
        %v3861 = vrot.slane %v3794, 3
        %v3862 = vsel %vm2092, %v3859, %v3861
        %v3863 = vrot.slane %v3795, 3
        %v3864 = vsel %vm2092, %v3861, %v3863
        %v3865 = vrot.slane %v3796, 3
        %v3866 = vsel %vm2092, %v3863, %v3865
        %v3867 = vrot.slane %v3797, 3
        %v3868 = vsel %vm2092, %v3865, %v3867
        %v3869 = vrot.slane %v3798, 3
        %v3870 = vsel %vm2092, %v3867, %v3869
        %v3871 = vrot.slane %v3799, 3
        %v3872 = vsel %vm2092, %v3869, %v3871
        %v3873 = vrot.slane %v3800, 3
        %v3874 = vsel %vm2092, %v3871, %v3873
        %v3875 = vrot.slane %v3801, 3
        %v3876 = vsel %vm2092, %v3873, %v3875
        %v3877 = vrot.slane %v3802, 3
        %v3878 = vsel %vm2092, %v3875, %v3877
        %v3879 = vrot.slane %v3803, 3
        %v3880 = vsel %vm2092, %v3877, %v3879
        %v3881 = vrot.slane %v3804, 3
        %v3882 = vsel %vm2092, %v3879, %v3881
        %v3883 = vrot.slane %v3805, 3
        %v3884 = vsel %vm2092, %v3881, %v3883
        %v3885 = vrot.slane %v3806, 3
        %v3886 = vsel %vm2092, %v3883, %v3885
        %v3887 = vrot.slane %v3807, 3
        %v3888 = vsel %vm2092, %v3885, %v3887
        %v3889 = vrot.slane %v3808, 3
        %v3890 = vsel %vm2092, %v3887, %v3889
        %v3891 = vrot.slane %v3809, 3
        %v3892 = vsel %vm2092, %v3889, %v3891
        %v3893 = vrot.slane %v3810, 3
        %v3894 = vsel %vm2092, %v3891, %v3893
        %v3895 = vrot.slane %v3811, 3
        %v3896 = vsel %vm2092, %v3893, %v3895
        %v3897 = vrot.slane %v3812, 3
        %v3898 = vsel %vm2092, %v3895, %v3897
        %v3899 = vrot.slane %v3813, 3
        %v3900 = vsel %vm2092, %v3897, %v3899
        %v3901 = vrot.slane %v3814, 3
        %v3902 = vsel %vm2092, %v3899, %v3901
        %v3903 = vrot.slane %v3815, 3
        %v3904 = vsel %vm2092, %v3901, %v3903
        %v3905 = vrot.slane %v3816, 3
        %v3906 = vsel %vm2092, %v3903, %v3905
        %v3907 = vrot.slane %v3817, 3
        %v3908 = vsel %vm2092, %v3905, %v3907
        %v3909 = vrot.slane %v3818, 3
        %v3910 = vsel %vm2092, %v3907, %v3909
        %v3911 = vrot.slane %v3819, 3
        %v3912 = vsel %vm2092, %v3909, %v3911
        %v3913 = vrot.slane %v3820, 3
        %v3914 = vsel %vm2092, %v3911, %v3913
        %v3915 = vrot.slane %v3821, 3
        %v3916 = vsel %vm2092, %v3913, %v3915
        %v3949 = vadd.f32 %v3754, %v3856
        %v3950 = vadd.f32 %v3755, %v3858
        %v3951 = vadd.f32 %v3756, %v3860
        %v3952 = vadd.f32 %v3757, %v3862
        %v3953 = vadd.f32 %v3758, %v3864
        %v3954 = vadd.f32 %v3759, %v3866
        %v3955 = vadd.f32 %v3760, %v3868
        %v3956 = vadd.f32 %v3761, %v3870
        %v3957 = vadd.f32 %v3762, %v3872
        %v3958 = vadd.f32 %v3763, %v3874
        %v3959 = vadd.f32 %v3764, %v3876
        %v3960 = vadd.f32 %v3765, %v3878
        %v3961 = vadd.f32 %v3766, %v3880
        %v3962 = vadd.f32 %v3767, %v3882
        %v3963 = vadd.f32 %v3768, %v3884
        %v3964 = vadd.f32 %v3769, %v3886
        %v3965 = vadd.f32 %v3770, %v3888
        %v3966 = vadd.f32 %v3771, %v3890
        %v3967 = vadd.f32 %v3772, %v3892
        %v3968 = vadd.f32 %v3773, %v3894
        %v3969 = vadd.f32 %v3774, %v3896
        %v3970 = vadd.f32 %v3775, %v3898
        %v3971 = vadd.f32 %v3776, %v3900
        %v3972 = vadd.f32 %v3777, %v3902
        %v3973 = vadd.f32 %v3778, %v3904
        %v3974 = vadd.f32 %v3779, %v3906
        %v3975 = vadd.f32 %v3780, %v3908
        %v3976 = vadd.f32 %v3781, %v3910
        %v3977 = vadd.f32 %v3782, %v3912
        %v3978 = vadd.f32 %v3783, %v3914
        %v3979 = vadd.f32 %v3784, %v3916
        %v3980 = vadd.f32 %v3785, %v3915
        %v3981 = vlaneseq
        %v3982 = vshrl.u32 %v3981, 7
        %v3983 = vsub.s32 6, %v3982
        %v3984 = vrot.slane %v1561, %v3983
        %v3985 = vmul.f32 %v3296, %v3984
        %v3986 = vmul.f32 %v3297, %v3984
        %v3987 = vmul.f32 %v3298, %v3984
        %v3988 = vmul.f32 %v3299, %v3984
        %v3989 = vmul.f32 %v3300, %v3984
        %v3990 = vmul.f32 %v3301, %v3984
        %v3991 = vmul.f32 %v3302, %v3984
        %v3992 = vmul.f32 %v3303, %v3984
        %v3993 = vmul.f32 %v3304, %v3984
        %v3994 = vmul.f32 %v3305, %v3984
        %v3995 = vmul.f32 %v3306, %v3984
        %v3996 = vmul.f32 %v3307, %v3984
        %v3997 = vmul.f32 %v3308, %v3984
        %v3998 = vmul.f32 %v3309, %v3984
        %v3999 = vmul.f32 %v3310, %v3984
        %v4000 = vmul.f32 %v3311, %v3984
        %v4001 = vmul.f32 %v3312, %v3984
        %v4002 = vmul.f32 %v3313, %v3984
        %v4003 = vmul.f32 %v3314, %v3984
        %v4004 = vmul.f32 %v3315, %v3984
        %v4005 = vmul.f32 %v3316, %v3984
        %v4006 = vmul.f32 %v3317, %v3984
        %v4007 = vmul.f32 %v3318, %v3984
        %v4008 = vmul.f32 %v3319, %v3984
        %v4009 = vmul.f32 %v3320, %v3984
        %v4010 = vmul.f32 %v3321, %v3984
        %v4011 = vmul.f32 %v3322, %v3984
        %v4012 = vmul.f32 %v3323, %v3984
        %v4013 = vmul.f32 %v3324, %v3984
        %v4014 = vmul.f32 %v3325, %v3984
        %v4015 = vmul.f32 %v3326, %v3984
        %v4016 = vmul.f32 %v3327, %v3984
        %v4049 = vrot.slane %v3985, 4
        %v4050 = vrot.slane %v3986, 4
        %v4051 = vsel %vm2288, %v4049, %v4050
        %v4052 = vrot.slane %v3987, 4
        %v4053 = vsel %vm2288, %v4050, %v4052
        %v4054 = vrot.slane %v3988, 4
        %v4055 = vsel %vm2288, %v4052, %v4054
        %v4056 = vrot.slane %v3989, 4
        %v4057 = vsel %vm2288, %v4054, %v4056
        %v4058 = vrot.slane %v3990, 4
        %v4059 = vsel %vm2288, %v4056, %v4058
        %v4060 = vrot.slane %v3991, 4
        %v4061 = vsel %vm2288, %v4058, %v4060
        %v4062 = vrot.slane %v3992, 4
        %v4063 = vsel %vm2288, %v4060, %v4062
        %v4064 = vrot.slane %v3993, 4
        %v4065 = vsel %vm2288, %v4062, %v4064
        %v4066 = vrot.slane %v3994, 4
        %v4067 = vsel %vm2288, %v4064, %v4066
        %v4068 = vrot.slane %v3995, 4
        %v4069 = vsel %vm2288, %v4066, %v4068
        %v4070 = vrot.slane %v3996, 4
        %v4071 = vsel %vm2288, %v4068, %v4070
        %v4072 = vrot.slane %v3997, 4
        %v4073 = vsel %vm2288, %v4070, %v4072
        %v4074 = vrot.slane %v3998, 4
        %v4075 = vsel %vm2288, %v4072, %v4074
        %v4076 = vrot.slane %v3999, 4
        %v4077 = vsel %vm2288, %v4074, %v4076
        %v4078 = vrot.slane %v4000, 4
        %v4079 = vsel %vm2288, %v4076, %v4078
        %v4080 = vrot.slane %v4001, 4
        %v4081 = vsel %vm2288, %v4078, %v4080
        %v4082 = vrot.slane %v4002, 4
        %v4083 = vsel %vm2288, %v4080, %v4082
        %v4084 = vrot.slane %v4003, 4
        %v4085 = vsel %vm2288, %v4082, %v4084
        %v4086 = vrot.slane %v4004, 4
        %v4087 = vsel %vm2288, %v4084, %v4086
        %v4088 = vrot.slane %v4005, 4
        %v4089 = vsel %vm2288, %v4086, %v4088
        %v4090 = vrot.slane %v4006, 4
        %v4091 = vsel %vm2288, %v4088, %v4090
        %v4092 = vrot.slane %v4007, 4
        %v4093 = vsel %vm2288, %v4090, %v4092
        %v4094 = vrot.slane %v4008, 4
        %v4095 = vsel %vm2288, %v4092, %v4094
        %v4096 = vrot.slane %v4009, 4
        %v4097 = vsel %vm2288, %v4094, %v4096
        %v4098 = vrot.slane %v4010, 4
        %v4099 = vsel %vm2288, %v4096, %v4098
        %v4100 = vrot.slane %v4011, 4
        %v4101 = vsel %vm2288, %v4098, %v4100
        %v4102 = vrot.slane %v4012, 4
        %v4103 = vsel %vm2288, %v4100, %v4102
        %v4104 = vrot.slane %v4013, 4
        %v4105 = vsel %vm2288, %v4102, %v4104
        %v4106 = vrot.slane %v4014, 4
        %v4107 = vsel %vm2288, %v4104, %v4106
        %v4108 = vrot.slane %v4015, 4
        %v4109 = vsel %vm2288, %v4106, %v4108
        %v4110 = vrot.slane %v4016, 4
        %v4111 = vsel %vm2288, %v4108, %v4110
        %v4144 = vadd.f32 %v3949, %v4051
        %v4145 = vadd.f32 %v3950, %v4053
        %v4146 = vadd.f32 %v3951, %v4055
        %v4147 = vadd.f32 %v3952, %v4057
        %v4148 = vadd.f32 %v3953, %v4059
        %v4149 = vadd.f32 %v3954, %v4061
        %v4150 = vadd.f32 %v3955, %v4063
        %v4151 = vadd.f32 %v3956, %v4065
        %v4152 = vadd.f32 %v3957, %v4067
        %v4153 = vadd.f32 %v3958, %v4069
        %v4154 = vadd.f32 %v3959, %v4071
        %v4155 = vadd.f32 %v3960, %v4073
        %v4156 = vadd.f32 %v3961, %v4075
        %v4157 = vadd.f32 %v3962, %v4077
        %v4158 = vadd.f32 %v3963, %v4079
        %v4159 = vadd.f32 %v3964, %v4081
        %v4160 = vadd.f32 %v3965, %v4083
        %v4161 = vadd.f32 %v3966, %v4085
        %v4162 = vadd.f32 %v3967, %v4087
        %v4163 = vadd.f32 %v3968, %v4089
        %v4164 = vadd.f32 %v3969, %v4091
        %v4165 = vadd.f32 %v3970, %v4093
        %v4166 = vadd.f32 %v3971, %v4095
        %v4167 = vadd.f32 %v3972, %v4097
        %v4168 = vadd.f32 %v3973, %v4099
        %v4169 = vadd.f32 %v3974, %v4101
        %v4170 = vadd.f32 %v3975, %v4103
        %v4171 = vadd.f32 %v3976, %v4105
        %v4172 = vadd.f32 %v3977, %v4107
        %v4173 = vadd.f32 %v3978, %v4109
        %v4174 = vadd.f32 %v3979, %v4111
        %v4175 = vadd.f32 %v3980, %v4110
        %v4176 = vld [vmem:[#allocation2 + $0x36] sm:$0xff]
        %v4177 = vld [vmem:[#allocation2 + $0x3e] sm:$0xff]
        %v4178 = vld [vmem:[#allocation2 + $0x46] sm:$0xff]
        %v4179 = vld [vmem:[#allocation2 + $0x4e] sm:$0xff]
        %v4180 = vld [vmem:[#allocation2 + $0x56] sm:$0xff]
        %v4181 = vld [vmem:[#allocation2 + $0x5e] sm:$0xff]
        %v4182 = vld [vmem:[#allocation2 + $0x66] sm:$0xff]
        %v4183 = vld [vmem:[#allocation2 + $0x6e] sm:$0xff]
        %v4184 = vld [vmem:[#allocation2 + $0x76] sm:$0xff]
        %v4185 = vld [vmem:[#allocation2 + $0x7e] sm:$0xff]
        %v4186 = vld [vmem:[#allocation2 + $0x86] sm:$0xff]
        %v4187 = vld [vmem:[#allocation2 + $0x8e] sm:$0xff]
        %v4188 = vld [vmem:[#allocation2 + $0x96] sm:$0xff]
        %v4189 = vld [vmem:[#allocation2 + $0x9e] sm:$0xff]
        %v4190 = vld [vmem:[#allocation2 + $0xa6] sm:$0xff]
        %v4191 = vld [vmem:[#allocation2 + $0xae] sm:$0xff]
        %v4192 = vld [vmem:[#allocation2 + $0xb6] sm:$0xff]
        %v4193 = vld [vmem:[#allocation2 + $0xbe] sm:$0xff]
        %v4194 = vld [vmem:[#allocation2 + $0xc6] sm:$0xff]
        %v4195 = vld [vmem:[#allocation2 + $0xce] sm:$0xff]
        %v4196 = vld [vmem:[#allocation2 + $0xd6] sm:$0xff]
        %v4197 = vld [vmem:[#allocation2 + $0xde] sm:$0xff]
        %v4198 = vld [vmem:[#allocation2 + $0xe6] sm:$0xff]
        %v4199 = vld [vmem:[#allocation2 + $0xee] sm:$0xff]
        %v4200 = vld [vmem:[#allocation2 + $0xf6] sm:$0xff]
        %v4201 = vld [vmem:[#allocation2 + $0xfe] sm:$0xff]
        %v4202 = vld [vmem:[#allocation2 + $0x106] sm:$0xff]
        %v4203 = vld [vmem:[#allocation2 + $0x10e] sm:$0xff]
        %v4204 = vld [vmem:[#allocation2 + $0x116] sm:$0xff]
        %v4205 = vld [vmem:[#allocation2 + $0x11e] sm:$0xff]
        %v4206 = vld [vmem:[#allocation2 + $0x126] sm:$0xff]
        %v4207 = vld [vmem:[#allocation2 + $0x12e] sm:$0xff]
        %v4208 = vlaneseq
        %v4209 = vshrl.u32 %v4208, 7
        %v4210 = vsub.s32 7, %v4209
        %v4211 = vrot.slane %v1561, %v4210
        %v4212 = vmul.f32 %v4176, %v4211
        %v4213 = vmul.f32 %v4177, %v4211
        %v4214 = vmul.f32 %v4178, %v4211
        %v4215 = vmul.f32 %v4179, %v4211
        %v4216 = vmul.f32 %v4180, %v4211
        %v4217 = vmul.f32 %v4181, %v4211
        %v4218 = vmul.f32 %v4182, %v4211
        %v4219 = vmul.f32 %v4183, %v4211
        %v4220 = vmul.f32 %v4184, %v4211
        %v4221 = vmul.f32 %v4185, %v4211
        %v4222 = vmul.f32 %v4186, %v4211
        %v4223 = vmul.f32 %v4187, %v4211
        %v4224 = vmul.f32 %v4188, %v4211
        %v4225 = vmul.f32 %v4189, %v4211
        %v4226 = vmul.f32 %v4190, %v4211
        %v4227 = vmul.f32 %v4191, %v4211
        %v4228 = vmul.f32 %v4192, %v4211
        %v4229 = vmul.f32 %v4193, %v4211
        %v4230 = vmul.f32 %v4194, %v4211
        %v4231 = vmul.f32 %v4195, %v4211
        %v4232 = vmul.f32 %v4196, %v4211
        %v4233 = vmul.f32 %v4197, %v4211
        %v4234 = vmul.f32 %v4198, %v4211
        %v4235 = vmul.f32 %v4199, %v4211
        %v4236 = vmul.f32 %v4200, %v4211
        %v4237 = vmul.f32 %v4201, %v4211
        %v4238 = vmul.f32 %v4202, %v4211
        %v4239 = vmul.f32 %v4203, %v4211
        %v4240 = vmul.f32 %v4204, %v4211
        %v4241 = vmul.f32 %v4205, %v4211
        %v4242 = vmul.f32 %v4206, %v4211
        %v4243 = vmul.f32 %v4207, %v4211
        %v4244 = vadd.f32 %v4144, %v4212
        %v4245 = vadd.f32 %v4145, %v4213
        %v4246 = vadd.f32 %v4146, %v4214
        %v4247 = vadd.f32 %v4147, %v4215
        %v4248 = vadd.f32 %v4148, %v4216
        %v4249 = vadd.f32 %v4149, %v4217
        %v4250 = vadd.f32 %v4150, %v4218
        %v4251 = vadd.f32 %v4151, %v4219
        %v4252 = vadd.f32 %v4152, %v4220
        %v4253 = vadd.f32 %v4153, %v4221
        %v4254 = vadd.f32 %v4154, %v4222
        %v4255 = vadd.f32 %v4155, %v4223
        %v4256 = vadd.f32 %v4156, %v4224
        %v4257 = vadd.f32 %v4157, %v4225
        %v4258 = vadd.f32 %v4158, %v4226
        %v4259 = vadd.f32 %v4159, %v4227
        %v4260 = vadd.f32 %v4160, %v4228
        %v4261 = vadd.f32 %v4161, %v4229
        %v4262 = vadd.f32 %v4162, %v4230
        %v4263 = vadd.f32 %v4163, %v4231
        %v4264 = vadd.f32 %v4164, %v4232
        %v4265 = vadd.f32 %v4165, %v4233
        %v4266 = vadd.f32 %v4166, %v4234
        %v4267 = vadd.f32 %v4167, %v4235
        %v4268 = vadd.f32 %v4168, %v4236
        %v4269 = vadd.f32 %v4169, %v4237
        %v4270 = vadd.f32 %v4170, %v4238
        %v4271 = vadd.f32 %v4171, %v4239
        %v4272 = vadd.f32 %v4172, %v4240
        %v4273 = vadd.f32 %v4173, %v4241
        %v4274 = vadd.f32 %v4174, %v4242
        %v4275 = vadd.f32 %v4175, %v4243
        %v4276 = vlaneseq
        %v4277 = vshrl.u32 %v4276, 7
        %v4278 = vsub.s32 0, %v4277
        %v4279 = vrot.slane %v1562, %v4278
        %v4280 = vmul.f32 %v4176, %v4279
        %v4281 = vmul.f32 %v4177, %v4279
        %v4282 = vmul.f32 %v4178, %v4279
        %v4283 = vmul.f32 %v4179, %v4279
        %v4284 = vmul.f32 %v4180, %v4279
        %v4285 = vmul.f32 %v4181, %v4279
        %v4286 = vmul.f32 %v4182, %v4279
        %v4287 = vmul.f32 %v4183, %v4279
        %v4288 = vmul.f32 %v4184, %v4279
        %v4289 = vmul.f32 %v4185, %v4279
        %v4290 = vmul.f32 %v4186, %v4279
        %v4291 = vmul.f32 %v4187, %v4279
        %v4292 = vmul.f32 %v4188, %v4279
        %v4293 = vmul.f32 %v4189, %v4279
        %v4294 = vmul.f32 %v4190, %v4279
        %v4295 = vmul.f32 %v4191, %v4279
        %v4296 = vmul.f32 %v4192, %v4279
        %v4297 = vmul.f32 %v4193, %v4279
        %v4298 = vmul.f32 %v4194, %v4279
        %v4299 = vmul.f32 %v4195, %v4279
        %v4300 = vmul.f32 %v4196, %v4279
        %v4301 = vmul.f32 %v4197, %v4279
        %v4302 = vmul.f32 %v4198, %v4279
        %v4303 = vmul.f32 %v4199, %v4279
        %v4304 = vmul.f32 %v4200, %v4279
        %v4305 = vmul.f32 %v4201, %v4279
        %v4306 = vmul.f32 %v4202, %v4279
        %v4307 = vmul.f32 %v4203, %v4279
        %v4308 = vmul.f32 %v4204, %v4279
        %v4309 = vmul.f32 %v4205, %v4279
        %v4310 = vmul.f32 %v4206, %v4279
        %v4311 = vmul.f32 %v4207, %v4279
        %v4344 = vrot.slane %v4280, 1
        %v4345 = vrot.slane %v4281, 1
        %v4346 = vsel %vm1700, %v4344, %v4345
        %v4347 = vrot.slane %v4282, 1
        %v4348 = vsel %vm1700, %v4345, %v4347
        %v4349 = vrot.slane %v4283, 1
        %v4350 = vsel %vm1700, %v4347, %v4349
        %v4351 = vrot.slane %v4284, 1
        %v4352 = vsel %vm1700, %v4349, %v4351
        %v4353 = vrot.slane %v4285, 1
        %v4354 = vsel %vm1700, %v4351, %v4353
        %v4355 = vrot.slane %v4286, 1
        %v4356 = vsel %vm1700, %v4353, %v4355
        %v4357 = vrot.slane %v4287, 1
        %v4358 = vsel %vm1700, %v4355, %v4357
        %v4359 = vrot.slane %v4288, 1
        %v4360 = vsel %vm1700, %v4357, %v4359
        %v4361 = vrot.slane %v4289, 1
        %v4362 = vsel %vm1700, %v4359, %v4361
        %v4363 = vrot.slane %v4290, 1
        %v4364 = vsel %vm1700, %v4361, %v4363
        %v4365 = vrot.slane %v4291, 1
        %v4366 = vsel %vm1700, %v4363, %v4365
        %v4367 = vrot.slane %v4292, 1
        %v4368 = vsel %vm1700, %v4365, %v4367
        %v4369 = vrot.slane %v4293, 1
        %v4370 = vsel %vm1700, %v4367, %v4369
        %v4371 = vrot.slane %v4294, 1
        %v4372 = vsel %vm1700, %v4369, %v4371
        %v4373 = vrot.slane %v4295, 1
        %v4374 = vsel %vm1700, %v4371, %v4373
        %v4375 = vrot.slane %v4296, 1
        %v4376 = vsel %vm1700, %v4373, %v4375
        %v4377 = vrot.slane %v4297, 1
        %v4378 = vsel %vm1700, %v4375, %v4377
        %v4379 = vrot.slane %v4298, 1
        %v4380 = vsel %vm1700, %v4377, %v4379
        %v4381 = vrot.slane %v4299, 1
        %v4382 = vsel %vm1700, %v4379, %v4381
        %v4383 = vrot.slane %v4300, 1
        %v4384 = vsel %vm1700, %v4381, %v4383
        %v4385 = vrot.slane %v4301, 1
        %v4386 = vsel %vm1700, %v4383, %v4385
        %v4387 = vrot.slane %v4302, 1
        %v4388 = vsel %vm1700, %v4385, %v4387
        %v4389 = vrot.slane %v4303, 1
        %v4390 = vsel %vm1700, %v4387, %v4389
        %v4391 = vrot.slane %v4304, 1
        %v4392 = vsel %vm1700, %v4389, %v4391
        %v4393 = vrot.slane %v4305, 1
        %v4394 = vsel %vm1700, %v4391, %v4393
        %v4395 = vrot.slane %v4306, 1
        %v4396 = vsel %vm1700, %v4393, %v4395
        %v4397 = vrot.slane %v4307, 1
        %v4398 = vsel %vm1700, %v4395, %v4397
        %v4399 = vrot.slane %v4308, 1
        %v4400 = vsel %vm1700, %v4397, %v4399
        %v4401 = vrot.slane %v4309, 1
        %v4402 = vsel %vm1700, %v4399, %v4401
        %v4403 = vrot.slane %v4310, 1
        %v4404 = vsel %vm1700, %v4401, %v4403
        %v4405 = vrot.slane %v4311, 1
        %v4406 = vsel %vm1700, %v4403, %v4405
        %v4439 = vadd.f32 %v4244, %v4346
        %v4440 = vadd.f32 %v4245, %v4348
        %v4441 = vadd.f32 %v4246, %v4350
        %v4442 = vadd.f32 %v4247, %v4352
        %v4443 = vadd.f32 %v4248, %v4354
        %v4444 = vadd.f32 %v4249, %v4356
        %v4445 = vadd.f32 %v4250, %v4358
        %v4446 = vadd.f32 %v4251, %v4360
        %v4447 = vadd.f32 %v4252, %v4362
        %v4448 = vadd.f32 %v4253, %v4364
        %v4449 = vadd.f32 %v4254, %v4366
        %v4450 = vadd.f32 %v4255, %v4368
        %v4451 = vadd.f32 %v4256, %v4370
        %v4452 = vadd.f32 %v4257, %v4372
        %v4453 = vadd.f32 %v4258, %v4374
        %v4454 = vadd.f32 %v4259, %v4376
        %v4455 = vadd.f32 %v4260, %v4378
        %v4456 = vadd.f32 %v4261, %v4380
        %v4457 = vadd.f32 %v4262, %v4382
        %v4458 = vadd.f32 %v4263, %v4384
        %v4459 = vadd.f32 %v4264, %v4386
        %v4460 = vadd.f32 %v4265, %v4388
        %v4461 = vadd.f32 %v4266, %v4390
        %v4462 = vadd.f32 %v4267, %v4392
        %v4463 = vadd.f32 %v4268, %v4394
        %v4464 = vadd.f32 %v4269, %v4396
        %v4465 = vadd.f32 %v4270, %v4398
        %v4466 = vadd.f32 %v4271, %v4400
        %v4467 = vadd.f32 %v4272, %v4402
        %v4468 = vadd.f32 %v4273, %v4404
        %v4469 = vadd.f32 %v4274, %v4406
        %v4470 = vadd.f32 %v4275, %v4405
        %v4471 = vlaneseq
        %v4472 = vshrl.u32 %v4471, 7
        %v4473 = vsub.s32 1, %v4472
        %v4474 = vrot.slane %v1562, %v4473
        %v4475 = vmul.f32 %v4176, %v4474
        %v4476 = vmul.f32 %v4177, %v4474
        %v4477 = vmul.f32 %v4178, %v4474
        %v4478 = vmul.f32 %v4179, %v4474
        %v4479 = vmul.f32 %v4180, %v4474
        %v4480 = vmul.f32 %v4181, %v4474
        %v4481 = vmul.f32 %v4182, %v4474
        %v4482 = vmul.f32 %v4183, %v4474
        %v4483 = vmul.f32 %v4184, %v4474
        %v4484 = vmul.f32 %v4185, %v4474
        %v4485 = vmul.f32 %v4186, %v4474
        %v4486 = vmul.f32 %v4187, %v4474
        %v4487 = vmul.f32 %v4188, %v4474
        %v4488 = vmul.f32 %v4189, %v4474
        %v4489 = vmul.f32 %v4190, %v4474
        %v4490 = vmul.f32 %v4191, %v4474
        %v4491 = vmul.f32 %v4192, %v4474
        %v4492 = vmul.f32 %v4193, %v4474
        %v4493 = vmul.f32 %v4194, %v4474
        %v4494 = vmul.f32 %v4195, %v4474
        %v4495 = vmul.f32 %v4196, %v4474
        %v4496 = vmul.f32 %v4197, %v4474
        %v4497 = vmul.f32 %v4198, %v4474
        %v4498 = vmul.f32 %v4199, %v4474
        %v4499 = vmul.f32 %v4200, %v4474
        %v4500 = vmul.f32 %v4201, %v4474
        %v4501 = vmul.f32 %v4202, %v4474
        %v4502 = vmul.f32 %v4203, %v4474
        %v4503 = vmul.f32 %v4204, %v4474
        %v4504 = vmul.f32 %v4205, %v4474
        %v4505 = vmul.f32 %v4206, %v4474
        %v4506 = vmul.f32 %v4207, %v4474
        %v4539 = vrot.slane %v4475, 2
        %v4540 = vrot.slane %v4476, 2
        %v4541 = vsel %vm1896, %v4539, %v4540
        %v4542 = vrot.slane %v4477, 2
        %v4543 = vsel %vm1896, %v4540, %v4542
        %v4544 = vrot.slane %v4478, 2
        %v4545 = vsel %vm1896, %v4542, %v4544
        %v4546 = vrot.slane %v4479, 2
        %v4547 = vsel %vm1896, %v4544, %v4546
        %v4548 = vrot.slane %v4480, 2
        %v4549 = vsel %vm1896, %v4546, %v4548
        %v4550 = vrot.slane %v4481, 2
        %v4551 = vsel %vm1896, %v4548, %v4550
        %v4552 = vrot.slane %v4482, 2
        %v4553 = vsel %vm1896, %v4550, %v4552
        %v4554 = vrot.slane %v4483, 2
        %v4555 = vsel %vm1896, %v4552, %v4554
        %v4556 = vrot.slane %v4484, 2
        %v4557 = vsel %vm1896, %v4554, %v4556
        %v4558 = vrot.slane %v4485, 2
        %v4559 = vsel %vm1896, %v4556, %v4558
        %v4560 = vrot.slane %v4486, 2
        %v4561 = vsel %vm1896, %v4558, %v4560
        %v4562 = vrot.slane %v4487, 2
        %v4563 = vsel %vm1896, %v4560, %v4562
        %v4564 = vrot.slane %v4488, 2
        %v4565 = vsel %vm1896, %v4562, %v4564
        %v4566 = vrot.slane %v4489, 2
        %v4567 = vsel %vm1896, %v4564, %v4566
        %v4568 = vrot.slane %v4490, 2
        %v4569 = vsel %vm1896, %v4566, %v4568
        %v4570 = vrot.slane %v4491, 2
        %v4571 = vsel %vm1896, %v4568, %v4570
        %v4572 = vrot.slane %v4492, 2
        %v4573 = vsel %vm1896, %v4570, %v4572
        %v4574 = vrot.slane %v4493, 2
        %v4575 = vsel %vm1896, %v4572, %v4574
        %v4576 = vrot.slane %v4494, 2
        %v4577 = vsel %vm1896, %v4574, %v4576
        %v4578 = vrot.slane %v4495, 2
        %v4579 = vsel %vm1896, %v4576, %v4578
        %v4580 = vrot.slane %v4496, 2
        %v4581 = vsel %vm1896, %v4578, %v4580
        %v4582 = vrot.slane %v4497, 2
        %v4583 = vsel %vm1896, %v4580, %v4582
        %v4584 = vrot.slane %v4498, 2
        %v4585 = vsel %vm1896, %v4582, %v4584
        %v4586 = vrot.slane %v4499, 2
        %v4587 = vsel %vm1896, %v4584, %v4586
        %v4588 = vrot.slane %v4500, 2
        %v4589 = vsel %vm1896, %v4586, %v4588
        %v4590 = vrot.slane %v4501, 2
        %v4591 = vsel %vm1896, %v4588, %v4590
        %v4592 = vrot.slane %v4502, 2
        %v4593 = vsel %vm1896, %v4590, %v4592
        %v4594 = vrot.slane %v4503, 2
        %v4595 = vsel %vm1896, %v4592, %v4594
        %v4596 = vrot.slane %v4504, 2
        %v4597 = vsel %vm1896, %v4594, %v4596
        %v4598 = vrot.slane %v4505, 2
        %v4599 = vsel %vm1896, %v4596, %v4598
        %v4600 = vrot.slane %v4506, 2
        %v4601 = vsel %vm1896, %v4598, %v4600
        %v4634 = vadd.f32 %v4439, %v4541
        %v4635 = vadd.f32 %v4440, %v4543
        %v4636 = vadd.f32 %v4441, %v4545
        %v4637 = vadd.f32 %v4442, %v4547
        %v4638 = vadd.f32 %v4443, %v4549
        %v4639 = vadd.f32 %v4444, %v4551
        %v4640 = vadd.f32 %v4445, %v4553
        %v4641 = vadd.f32 %v4446, %v4555
        %v4642 = vadd.f32 %v4447, %v4557
        %v4643 = vadd.f32 %v4448, %v4559
        %v4644 = vadd.f32 %v4449, %v4561
        %v4645 = vadd.f32 %v4450, %v4563
        %v4646 = vadd.f32 %v4451, %v4565
        %v4647 = vadd.f32 %v4452, %v4567
        %v4648 = vadd.f32 %v4453, %v4569
        %v4649 = vadd.f32 %v4454, %v4571
        %v4650 = vadd.f32 %v4455, %v4573
        %v4651 = vadd.f32 %v4456, %v4575
        %v4652 = vadd.f32 %v4457, %v4577
        %v4653 = vadd.f32 %v4458, %v4579
        %v4654 = vadd.f32 %v4459, %v4581
        %v4655 = vadd.f32 %v4460, %v4583
        %v4656 = vadd.f32 %v4461, %v4585
        %v4657 = vadd.f32 %v4462, %v4587
        %v4658 = vadd.f32 %v4463, %v4589
        %v4659 = vadd.f32 %v4464, %v4591
        %v4660 = vadd.f32 %v4465, %v4593
        %v4661 = vadd.f32 %v4466, %v4595
        %v4662 = vadd.f32 %v4467, %v4597
        %v4663 = vadd.f32 %v4468, %v4599
        %v4664 = vadd.f32 %v4469, %v4601
        %v4665 = vadd.f32 %v4470, %v4600
        %v4666 = vlaneseq
        %v4667 = vshrl.u32 %v4666, 7
        %v4668 = vsub.s32 2, %v4667
        %v4669 = vrot.slane %v1562, %v4668
        %v4670 = vmul.f32 %v4176, %v4669
        %v4671 = vmul.f32 %v4177, %v4669
        %v4672 = vmul.f32 %v4178, %v4669
        %v4673 = vmul.f32 %v4179, %v4669
        %v4674 = vmul.f32 %v4180, %v4669
        %v4675 = vmul.f32 %v4181, %v4669
        %v4676 = vmul.f32 %v4182, %v4669
        %v4677 = vmul.f32 %v4183, %v4669
        %v4678 = vmul.f32 %v4184, %v4669
        %v4679 = vmul.f32 %v4185, %v4669
        %v4680 = vmul.f32 %v4186, %v4669
        %v4681 = vmul.f32 %v4187, %v4669
        %v4682 = vmul.f32 %v4188, %v4669
        %v4683 = vmul.f32 %v4189, %v4669
        %v4684 = vmul.f32 %v4190, %v4669
        %v4685 = vmul.f32 %v4191, %v4669
        %v4686 = vmul.f32 %v4192, %v4669
        %v4687 = vmul.f32 %v4193, %v4669
        %v4688 = vmul.f32 %v4194, %v4669
        %v4689 = vmul.f32 %v4195, %v4669
        %v4690 = vmul.f32 %v4196, %v4669
        %v4691 = vmul.f32 %v4197, %v4669
        %v4692 = vmul.f32 %v4198, %v4669
        %v4693 = vmul.f32 %v4199, %v4669
        %v4694 = vmul.f32 %v4200, %v4669
        %v4695 = vmul.f32 %v4201, %v4669
        %v4696 = vmul.f32 %v4202, %v4669
        %v4697 = vmul.f32 %v4203, %v4669
        %v4698 = vmul.f32 %v4204, %v4669
        %v4699 = vmul.f32 %v4205, %v4669
        %v4700 = vmul.f32 %v4206, %v4669
        %v4701 = vmul.f32 %v4207, %v4669
        %v4734 = vrot.slane %v4670, 3
        %v4735 = vrot.slane %v4671, 3
        %v4736 = vsel %vm2092, %v4734, %v4735
        %v4737 = vrot.slane %v4672, 3
        %v4738 = vsel %vm2092, %v4735, %v4737
        %v4739 = vrot.slane %v4673, 3
        %v4740 = vsel %vm2092, %v4737, %v4739
        %v4741 = vrot.slane %v4674, 3
        %v4742 = vsel %vm2092, %v4739, %v4741
        %v4743 = vrot.slane %v4675, 3
        %v4744 = vsel %vm2092, %v4741, %v4743
        %v4745 = vrot.slane %v4676, 3
        %v4746 = vsel %vm2092, %v4743, %v4745
        %v4747 = vrot.slane %v4677, 3
        %v4748 = vsel %vm2092, %v4745, %v4747
        %v4749 = vrot.slane %v4678, 3
        %v4750 = vsel %vm2092, %v4747, %v4749
        %v4751 = vrot.slane %v4679, 3
        %v4752 = vsel %vm2092, %v4749, %v4751
        %v4753 = vrot.slane %v4680, 3
        %v4754 = vsel %vm2092, %v4751, %v4753
        %v4755 = vrot.slane %v4681, 3
        %v4756 = vsel %vm2092, %v4753, %v4755
        %v4757 = vrot.slane %v4682, 3
        %v4758 = vsel %vm2092, %v4755, %v4757
        %v4759 = vrot.slane %v4683, 3
        %v4760 = vsel %vm2092, %v4757, %v4759
        %v4761 = vrot.slane %v4684, 3
        %v4762 = vsel %vm2092, %v4759, %v4761
        %v4763 = vrot.slane %v4685, 3
        %v4764 = vsel %vm2092, %v4761, %v4763
        %v4765 = vrot.slane %v4686, 3
        %v4766 = vsel %vm2092, %v4763, %v4765
        %v4767 = vrot.slane %v4687, 3
        %v4768 = vsel %vm2092, %v4765, %v4767
        %v4769 = vrot.slane %v4688, 3
        %v4770 = vsel %vm2092, %v4767, %v4769
        %v4771 = vrot.slane %v4689, 3
        %v4772 = vsel %vm2092, %v4769, %v4771
        %v4773 = vrot.slane %v4690, 3
        %v4774 = vsel %vm2092, %v4771, %v4773
        %v4775 = vrot.slane %v4691, 3
        %v4776 = vsel %vm2092, %v4773, %v4775
        %v4777 = vrot.slane %v4692, 3
        %v4778 = vsel %vm2092, %v4775, %v4777
        %v4779 = vrot.slane %v4693, 3
        %v4780 = vsel %vm2092, %v4777, %v4779
        %v4781 = vrot.slane %v4694, 3
        %v4782 = vsel %vm2092, %v4779, %v4781
        %v4783 = vrot.slane %v4695, 3
        %v4784 = vsel %vm2092, %v4781, %v4783
        %v4785 = vrot.slane %v4696, 3
        %v4786 = vsel %vm2092, %v4783, %v4785
        %v4787 = vrot.slane %v4697, 3
        %v4788 = vsel %vm2092, %v4785, %v4787
        %v4789 = vrot.slane %v4698, 3
        %v4790 = vsel %vm2092, %v4787, %v4789
        %v4791 = vrot.slane %v4699, 3
        %v4792 = vsel %vm2092, %v4789, %v4791
        %v4793 = vrot.slane %v4700, 3
        %v4794 = vsel %vm2092, %v4791, %v4793
        %v4795 = vrot.slane %v4701, 3
        %v4796 = vsel %vm2092, %v4793, %v4795
        %v4829 = vadd.f32 %v4634, %v4736
        %v4830 = vadd.f32 %v4635, %v4738
        %v4831 = vadd.f32 %v4636, %v4740
        %v4832 = vadd.f32 %v4637, %v4742
        %v4833 = vadd.f32 %v4638, %v4744
        %v4834 = vadd.f32 %v4639, %v4746
        %v4835 = vadd.f32 %v4640, %v4748
        %v4836 = vadd.f32 %v4641, %v4750
        %v4837 = vadd.f32 %v4642, %v4752
        %v4838 = vadd.f32 %v4643, %v4754
        %v4839 = vadd.f32 %v4644, %v4756
        %v4840 = vadd.f32 %v4645, %v4758
        %v4841 = vadd.f32 %v4646, %v4760
        %v4842 = vadd.f32 %v4647, %v4762
        %v4843 = vadd.f32 %v4648, %v4764
        %v4844 = vadd.f32 %v4649, %v4766
        %v4845 = vadd.f32 %v4650, %v4768
        %v4846 = vadd.f32 %v4651, %v4770
        %v4847 = vadd.f32 %v4652, %v4772
        %v4848 = vadd.f32 %v4653, %v4774
        %v4849 = vadd.f32 %v4654, %v4776
        %v4850 = vadd.f32 %v4655, %v4778
        %v4851 = vadd.f32 %v4656, %v4780
        %v4852 = vadd.f32 %v4657, %v4782
        %v4853 = vadd.f32 %v4658, %v4784
        %v4854 = vadd.f32 %v4659, %v4786
        %v4855 = vadd.f32 %v4660, %v4788
        %v4856 = vadd.f32 %v4661, %v4790
        %v4857 = vadd.f32 %v4662, %v4792
        %v4858 = vadd.f32 %v4663, %v4794
        %v4859 = vadd.f32 %v4664, %v4796
        %v4860 = vadd.f32 %v4665, %v4795
        %v4861 = vlaneseq
        %v4862 = vshrl.u32 %v4861, 7
        %v4863 = vsub.s32 3, %v4862
        %v4864 = vrot.slane %v1562, %v4863
        %v4865 = vmul.f32 %v4176, %v4864
        %v4866 = vmul.f32 %v4177, %v4864
        %v4867 = vmul.f32 %v4178, %v4864
        %v4868 = vmul.f32 %v4179, %v4864
        %v4869 = vmul.f32 %v4180, %v4864
        %v4870 = vmul.f32 %v4181, %v4864
        %v4871 = vmul.f32 %v4182, %v4864
        %v4872 = vmul.f32 %v4183, %v4864
        %v4873 = vmul.f32 %v4184, %v4864
        %v4874 = vmul.f32 %v4185, %v4864
        %v4875 = vmul.f32 %v4186, %v4864
        %v4876 = vmul.f32 %v4187, %v4864
        %v4877 = vmul.f32 %v4188, %v4864
        %v4878 = vmul.f32 %v4189, %v4864
        %v4879 = vmul.f32 %v4190, %v4864
        %v4880 = vmul.f32 %v4191, %v4864
        %v4881 = vmul.f32 %v4192, %v4864
        %v4882 = vmul.f32 %v4193, %v4864
        %v4883 = vmul.f32 %v4194, %v4864
        %v4884 = vmul.f32 %v4195, %v4864
        %v4885 = vmul.f32 %v4196, %v4864
        %v4886 = vmul.f32 %v4197, %v4864
        %v4887 = vmul.f32 %v4198, %v4864
        %v4888 = vmul.f32 %v4199, %v4864
        %v4889 = vmul.f32 %v4200, %v4864
        %v4890 = vmul.f32 %v4201, %v4864
        %v4891 = vmul.f32 %v4202, %v4864
        %v4892 = vmul.f32 %v4203, %v4864
        %v4893 = vmul.f32 %v4204, %v4864
        %v4894 = vmul.f32 %v4205, %v4864
        %v4895 = vmul.f32 %v4206, %v4864
        %v4896 = vmul.f32 %v4207, %v4864
        %v4929 = vrot.slane %v4865, 4
        %v4930 = vrot.slane %v4866, 4
        %v4931 = vsel %vm2288, %v4929, %v4930
        %v4932 = vrot.slane %v4867, 4
        %v4933 = vsel %vm2288, %v4930, %v4932
        %v4934 = vrot.slane %v4868, 4
        %v4935 = vsel %vm2288, %v4932, %v4934
        %v4936 = vrot.slane %v4869, 4
        %v4937 = vsel %vm2288, %v4934, %v4936
        %v4938 = vrot.slane %v4870, 4
        %v4939 = vsel %vm2288, %v4936, %v4938
        %v4940 = vrot.slane %v4871, 4
        %v4941 = vsel %vm2288, %v4938, %v4940
        %v4942 = vrot.slane %v4872, 4
        %v4943 = vsel %vm2288, %v4940, %v4942
        %v4944 = vrot.slane %v4873, 4
        %v4945 = vsel %vm2288, %v4942, %v4944
        %v4946 = vrot.slane %v4874, 4
        %v4947 = vsel %vm2288, %v4944, %v4946
        %v4948 = vrot.slane %v4875, 4
        %v4949 = vsel %vm2288, %v4946, %v4948
        %v4950 = vrot.slane %v4876, 4
        %v4951 = vsel %vm2288, %v4948, %v4950
        %v4952 = vrot.slane %v4877, 4
        %v4953 = vsel %vm2288, %v4950, %v4952
        %v4954 = vrot.slane %v4878, 4
        %v4955 = vsel %vm2288, %v4952, %v4954
        %v4956 = vrot.slane %v4879, 4
        %v4957 = vsel %vm2288, %v4954, %v4956
        %v4958 = vrot.slane %v4880, 4
        %v4959 = vsel %vm2288, %v4956, %v4958
        %v4960 = vrot.slane %v4881, 4
        %v4961 = vsel %vm2288, %v4958, %v4960
        %v4962 = vrot.slane %v4882, 4
        %v4963 = vsel %vm2288, %v4960, %v4962
        %v4964 = vrot.slane %v4883, 4
        %v4965 = vsel %vm2288, %v4962, %v4964
        %v4966 = vrot.slane %v4884, 4
        %v4967 = vsel %vm2288, %v4964, %v4966
        %v4968 = vrot.slane %v4885, 4
        %v4969 = vsel %vm2288, %v4966, %v4968
        %v4970 = vrot.slane %v4886, 4
        %v4971 = vsel %vm2288, %v4968, %v4970
        %v4972 = vrot.slane %v4887, 4
        %v4973 = vsel %vm2288, %v4970, %v4972
        %v4974 = vrot.slane %v4888, 4
        %v4975 = vsel %vm2288, %v4972, %v4974
        %v4976 = vrot.slane %v4889, 4
        %v4977 = vsel %vm2288, %v4974, %v4976
        %v4978 = vrot.slane %v4890, 4
        %v4979 = vsel %vm2288, %v4976, %v4978
        %v4980 = vrot.slane %v4891, 4
        %v4981 = vsel %vm2288, %v4978, %v4980
        %v4982 = vrot.slane %v4892, 4
        %v4983 = vsel %vm2288, %v4980, %v4982
        %v4984 = vrot.slane %v4893, 4
        %v4985 = vsel %vm2288, %v4982, %v4984
        %v4986 = vrot.slane %v4894, 4
        %v4987 = vsel %vm2288, %v4984, %v4986
        %v4988 = vrot.slane %v4895, 4
        %v4989 = vsel %vm2288, %v4986, %v4988
        %v4990 = vrot.slane %v4896, 4
        %v4991 = vsel %vm2288, %v4988, %v4990
        %v5024 = vadd.f32 %v4829, %v4931
        %v5025 = vadd.f32 %v4830, %v4933
        %v5026 = vadd.f32 %v4831, %v4935
        %v5027 = vadd.f32 %v4832, %v4937
        %v5028 = vadd.f32 %v4833, %v4939
        %v5029 = vadd.f32 %v4834, %v4941
        %v5030 = vadd.f32 %v4835, %v4943
        %v5031 = vadd.f32 %v4836, %v4945
        %v5032 = vadd.f32 %v4837, %v4947
        %v5033 = vadd.f32 %v4838, %v4949
        %v5034 = vadd.f32 %v4839, %v4951
        %v5035 = vadd.f32 %v4840, %v4953
        %v5036 = vadd.f32 %v4841, %v4955
        %v5037 = vadd.f32 %v4842, %v4957
        %v5038 = vadd.f32 %v4843, %v4959
        %v5039 = vadd.f32 %v4844, %v4961
        %v5040 = vadd.f32 %v4845, %v4963
        %v5041 = vadd.f32 %v4846, %v4965
        %v5042 = vadd.f32 %v4847, %v4967
        %v5043 = vadd.f32 %v4848, %v4969
        %v5044 = vadd.f32 %v4849, %v4971
        %v5045 = vadd.f32 %v4850, %v4973
        %v5046 = vadd.f32 %v4851, %v4975
        %v5047 = vadd.f32 %v4852, %v4977
        %v5048 = vadd.f32 %v4853, %v4979
        %v5049 = vadd.f32 %v4854, %v4981
        %v5050 = vadd.f32 %v4855, %v4983
        %v5051 = vadd.f32 %v4856, %v4985
        %v5052 = vadd.f32 %v4857, %v4987
        %v5053 = vadd.f32 %v4858, %v4989
        %v5054 = vadd.f32 %v4859, %v4991
        %v5055 = vadd.f32 %v4860, %v4990
        %v5056 = vld [vmem:[#allocation2 + $0x48] sm:$0xff]
        %v5057 = vld [vmem:[#allocation2 + $0x50] sm:$0xff]
        %v5058 = vld [vmem:[#allocation2 + $0x58] sm:$0xff]
        %v5059 = vld [vmem:[#allocation2 + $0x60] sm:$0xff]
        %v5060 = vld [vmem:[#allocation2 + $0x68] sm:$0xff]
        %v5061 = vld [vmem:[#allocation2 + $0x70] sm:$0xff]
        %v5062 = vld [vmem:[#allocation2 + $0x78] sm:$0xff]
        %v5063 = vld [vmem:[#allocation2 + $0x80] sm:$0xff]
        %v5064 = vld [vmem:[#allocation2 + $0x88] sm:$0xff]
        %v5065 = vld [vmem:[#allocation2 + $0x90] sm:$0xff]
        %v5066 = vld [vmem:[#allocation2 + $0x98] sm:$0xff]
        %v5067 = vld [vmem:[#allocation2 + $0xa0] sm:$0xff]
        %v5068 = vld [vmem:[#allocation2 + $0xa8] sm:$0xff]
        %v5069 = vld [vmem:[#allocation2 + $0xb0] sm:$0xff]
        %v5070 = vld [vmem:[#allocation2 + $0xb8] sm:$0xff]
        %v5071 = vld [vmem:[#allocation2 + $0xc0] sm:$0xff]
        %v5072 = vld [vmem:[#allocation2 + $0xc8] sm:$0xff]
        %v5073 = vld [vmem:[#allocation2 + $0xd0] sm:$0xff]
        %v5074 = vld [vmem:[#allocation2 + $0xd8] sm:$0xff]
        %v5075 = vld [vmem:[#allocation2 + $0xe0] sm:$0xff]
        %v5076 = vld [vmem:[#allocation2 + $0xe8] sm:$0xff]
        %v5077 = vld [vmem:[#allocation2 + $0xf0] sm:$0xff]
        %v5078 = vld [vmem:[#allocation2 + $0xf8] sm:$0xff]
        %v5079 = vld [vmem:[#allocation2 + $0x100] sm:$0xff]
        %v5080 = vld [vmem:[#allocation2 + $0x108] sm:$0xff]
        %v5081 = vld [vmem:[#allocation2 + $0x110] sm:$0xff]
        %v5082 = vld [vmem:[#allocation2 + $0x118] sm:$0xff]
        %v5083 = vld [vmem:[#allocation2 + $0x120] sm:$0xff]
        %v5084 = vld [vmem:[#allocation2 + $0x128] sm:$0xff]
        %v5085 = vld [vmem:[#allocation2 + $0x130] sm:$0xff]
        %v5086 = vld [vmem:[#allocation2 + $0x138] sm:$0xff]
        %v5087 = vld [vmem:[#allocation2 + $0x140] sm:$0xff]
        %v5088 = vlaneseq
        %v5089 = vshrl.u32 %v5088, 7
        %v5090 = vsub.s32 4, %v5089
        %v5091 = vrot.slane %v1562, %v5090
        %v5092 = vmul.f32 %v5056, %v5091
        %v5093 = vmul.f32 %v5057, %v5091
        %v5094 = vmul.f32 %v5058, %v5091
        %v5095 = vmul.f32 %v5059, %v5091
        %v5096 = vmul.f32 %v5060, %v5091
        %v5097 = vmul.f32 %v5061, %v5091
        %v5098 = vmul.f32 %v5062, %v5091
        %v5099 = vmul.f32 %v5063, %v5091
        %v5100 = vmul.f32 %v5064, %v5091
        %v5101 = vmul.f32 %v5065, %v5091
        %v5102 = vmul.f32 %v5066, %v5091
        %v5103 = vmul.f32 %v5067, %v5091
        %v5104 = vmul.f32 %v5068, %v5091
        %v5105 = vmul.f32 %v5069, %v5091
        %v5106 = vmul.f32 %v5070, %v5091
        %v5107 = vmul.f32 %v5071, %v5091
        %v5108 = vmul.f32 %v5072, %v5091
        %v5109 = vmul.f32 %v5073, %v5091
        %v5110 = vmul.f32 %v5074, %v5091
        %v5111 = vmul.f32 %v5075, %v5091
        %v5112 = vmul.f32 %v5076, %v5091
        %v5113 = vmul.f32 %v5077, %v5091
        %v5114 = vmul.f32 %v5078, %v5091
        %v5115 = vmul.f32 %v5079, %v5091
        %v5116 = vmul.f32 %v5080, %v5091
        %v5117 = vmul.f32 %v5081, %v5091
        %v5118 = vmul.f32 %v5082, %v5091
        %v5119 = vmul.f32 %v5083, %v5091
        %v5120 = vmul.f32 %v5084, %v5091
        %v5121 = vmul.f32 %v5085, %v5091
        %v5122 = vmul.f32 %v5086, %v5091
        %v5123 = vmul.f32 %v5087, %v5091
        %v5124 = vadd.f32 %v5024, %v5092
        %v5125 = vadd.f32 %v5025, %v5093
        %v5126 = vadd.f32 %v5026, %v5094
        %v5127 = vadd.f32 %v5027, %v5095
        %v5128 = vadd.f32 %v5028, %v5096
        %v5129 = vadd.f32 %v5029, %v5097
        %v5130 = vadd.f32 %v5030, %v5098
        %v5131 = vadd.f32 %v5031, %v5099
        %v5132 = vadd.f32 %v5032, %v5100
        %v5133 = vadd.f32 %v5033, %v5101
        %v5134 = vadd.f32 %v5034, %v5102
        %v5135 = vadd.f32 %v5035, %v5103
        %v5136 = vadd.f32 %v5036, %v5104
        %v5137 = vadd.f32 %v5037, %v5105
        %v5138 = vadd.f32 %v5038, %v5106
        %v5139 = vadd.f32 %v5039, %v5107
        %v5140 = vadd.f32 %v5040, %v5108
        %v5141 = vadd.f32 %v5041, %v5109
        %v5142 = vadd.f32 %v5042, %v5110
        %v5143 = vadd.f32 %v5043, %v5111
        %v5144 = vadd.f32 %v5044, %v5112
        %v5145 = vadd.f32 %v5045, %v5113
        %v5146 = vadd.f32 %v5046, %v5114
        %v5147 = vadd.f32 %v5047, %v5115
        %v5148 = vadd.f32 %v5048, %v5116
        %v5149 = vadd.f32 %v5049, %v5117
        %v5150 = vadd.f32 %v5050, %v5118
        %v5151 = vadd.f32 %v5051, %v5119
        %v5152 = vadd.f32 %v5052, %v5120
        %v5153 = vadd.f32 %v5053, %v5121
        %v5154 = vadd.f32 %v5054, %v5122
        %v5155 = vadd.f32 %v5055, %v5123
        %v5156 = vlaneseq
        %v5157 = vshrl.u32 %v5156, 7
        %v5158 = vsub.s32 5, %v5157
        %v5159 = vrot.slane %v1562, %v5158
        %v5160 = vmul.f32 %v5056, %v5159
        %v5161 = vmul.f32 %v5057, %v5159
        %v5162 = vmul.f32 %v5058, %v5159
        %v5163 = vmul.f32 %v5059, %v5159
        %v5164 = vmul.f32 %v5060, %v5159
        %v5165 = vmul.f32 %v5061, %v5159
        %v5166 = vmul.f32 %v5062, %v5159
        %v5167 = vmul.f32 %v5063, %v5159
        %v5168 = vmul.f32 %v5064, %v5159
        %v5169 = vmul.f32 %v5065, %v5159
        %v5170 = vmul.f32 %v5066, %v5159
        %v5171 = vmul.f32 %v5067, %v5159
        %v5172 = vmul.f32 %v5068, %v5159
        %v5173 = vmul.f32 %v5069, %v5159
        %v5174 = vmul.f32 %v5070, %v5159
        %v5175 = vmul.f32 %v5071, %v5159
        %v5176 = vmul.f32 %v5072, %v5159
        %v5177 = vmul.f32 %v5073, %v5159
        %v5178 = vmul.f32 %v5074, %v5159
        %v5179 = vmul.f32 %v5075, %v5159
        %v5180 = vmul.f32 %v5076, %v5159
        %v5181 = vmul.f32 %v5077, %v5159
        %v5182 = vmul.f32 %v5078, %v5159
        %v5183 = vmul.f32 %v5079, %v5159
        %v5184 = vmul.f32 %v5080, %v5159
        %v5185 = vmul.f32 %v5081, %v5159
        %v5186 = vmul.f32 %v5082, %v5159
        %v5187 = vmul.f32 %v5083, %v5159
        %v5188 = vmul.f32 %v5084, %v5159
        %v5189 = vmul.f32 %v5085, %v5159
        %v5190 = vmul.f32 %v5086, %v5159
        %v5191 = vmul.f32 %v5087, %v5159
        %v5224 = vrot.slane %v5160, 1
        %v5225 = vrot.slane %v5161, 1
        %v5226 = vsel %vm1700, %v5224, %v5225
        %v5227 = vrot.slane %v5162, 1
        %v5228 = vsel %vm1700, %v5225, %v5227
        %v5229 = vrot.slane %v5163, 1
        %v5230 = vsel %vm1700, %v5227, %v5229
        %v5231 = vrot.slane %v5164, 1
        %v5232 = vsel %vm1700, %v5229, %v5231
        %v5233 = vrot.slane %v5165, 1
        %v5234 = vsel %vm1700, %v5231, %v5233
        %v5235 = vrot.slane %v5166, 1
        %v5236 = vsel %vm1700, %v5233, %v5235
        %v5237 = vrot.slane %v5167, 1
        %v5238 = vsel %vm1700, %v5235, %v5237
        %v5239 = vrot.slane %v5168, 1
        %v5240 = vsel %vm1700, %v5237, %v5239
        %v5241 = vrot.slane %v5169, 1
        %v5242 = vsel %vm1700, %v5239, %v5241
        %v5243 = vrot.slane %v5170, 1
        %v5244 = vsel %vm1700, %v5241, %v5243
        %v5245 = vrot.slane %v5171, 1
        %v5246 = vsel %vm1700, %v5243, %v5245
        %v5247 = vrot.slane %v5172, 1
        %v5248 = vsel %vm1700, %v5245, %v5247
        %v5249 = vrot.slane %v5173, 1
        %v5250 = vsel %vm1700, %v5247, %v5249
        %v5251 = vrot.slane %v5174, 1
        %v5252 = vsel %vm1700, %v5249, %v5251
        %v5253 = vrot.slane %v5175, 1
        %v5254 = vsel %vm1700, %v5251, %v5253
        %v5255 = vrot.slane %v5176, 1
        %v5256 = vsel %vm1700, %v5253, %v5255
        %v5257 = vrot.slane %v5177, 1
        %v5258 = vsel %vm1700, %v5255, %v5257
        %v5259 = vrot.slane %v5178, 1
        %v5260 = vsel %vm1700, %v5257, %v5259
        %v5261 = vrot.slane %v5179, 1
        %v5262 = vsel %vm1700, %v5259, %v5261
        %v5263 = vrot.slane %v5180, 1
        %v5264 = vsel %vm1700, %v5261, %v5263
        %v5265 = vrot.slane %v5181, 1
        %v5266 = vsel %vm1700, %v5263, %v5265
        %v5267 = vrot.slane %v5182, 1
        %v5268 = vsel %vm1700, %v5265, %v5267
        %v5269 = vrot.slane %v5183, 1
        %v5270 = vsel %vm1700, %v5267, %v5269
        %v5271 = vrot.slane %v5184, 1
        %v5272 = vsel %vm1700, %v5269, %v5271
        %v5273 = vrot.slane %v5185, 1
        %v5274 = vsel %vm1700, %v5271, %v5273
        %v5275 = vrot.slane %v5186, 1
        %v5276 = vsel %vm1700, %v5273, %v5275
        %v5277 = vrot.slane %v5187, 1
        %v5278 = vsel %vm1700, %v5275, %v5277
        %v5279 = vrot.slane %v5188, 1
        %v5280 = vsel %vm1700, %v5277, %v5279
        %v5281 = vrot.slane %v5189, 1
        %v5282 = vsel %vm1700, %v5279, %v5281
        %v5283 = vrot.slane %v5190, 1
        %v5284 = vsel %vm1700, %v5281, %v5283
        %v5285 = vrot.slane %v5191, 1
        %v5286 = vsel %vm1700, %v5283, %v5285
        %v5319 = vadd.f32 %v5124, %v5226
        %v5320 = vadd.f32 %v5125, %v5228
        %v5321 = vadd.f32 %v5126, %v5230
        %v5322 = vadd.f32 %v5127, %v5232
        %v5323 = vadd.f32 %v5128, %v5234
        %v5324 = vadd.f32 %v5129, %v5236
        %v5325 = vadd.f32 %v5130, %v5238
        %v5326 = vadd.f32 %v5131, %v5240
        %v5327 = vadd.f32 %v5132, %v5242
        %v5328 = vadd.f32 %v5133, %v5244
        %v5329 = vadd.f32 %v5134, %v5246
        %v5330 = vadd.f32 %v5135, %v5248
        %v5331 = vadd.f32 %v5136, %v5250
        %v5332 = vadd.f32 %v5137, %v5252
        %v5333 = vadd.f32 %v5138, %v5254
        %v5334 = vadd.f32 %v5139, %v5256
        %v5335 = vadd.f32 %v5140, %v5258
        %v5336 = vadd.f32 %v5141, %v5260
        %v5337 = vadd.f32 %v5142, %v5262
        %v5338 = vadd.f32 %v5143, %v5264
        %v5339 = vadd.f32 %v5144, %v5266
        %v5340 = vadd.f32 %v5145, %v5268
        %v5341 = vadd.f32 %v5146, %v5270
        %v5342 = vadd.f32 %v5147, %v5272
        %v5343 = vadd.f32 %v5148, %v5274
        %v5344 = vadd.f32 %v5149, %v5276
        %v5345 = vadd.f32 %v5150, %v5278
        %v5346 = vadd.f32 %v5151, %v5280
        %v5347 = vadd.f32 %v5152, %v5282
        %v5348 = vadd.f32 %v5153, %v5284
        %v5349 = vadd.f32 %v5154, %v5286
        %v5350 = vadd.f32 %v5155, %v5285
        %v5351 = vlaneseq
        %v5352 = vshrl.u32 %v5351, 7
        %v5353 = vsub.s32 6, %v5352
        %v5354 = vrot.slane %v1562, %v5353
        %v5355 = vmul.f32 %v5056, %v5354
        %v5356 = vmul.f32 %v5057, %v5354
        %v5357 = vmul.f32 %v5058, %v5354
        %v5358 = vmul.f32 %v5059, %v5354
        %v5359 = vmul.f32 %v5060, %v5354
        %v5360 = vmul.f32 %v5061, %v5354
        %v5361 = vmul.f32 %v5062, %v5354
        %v5362 = vmul.f32 %v5063, %v5354
        %v5363 = vmul.f32 %v5064, %v5354
        %v5364 = vmul.f32 %v5065, %v5354
        %v5365 = vmul.f32 %v5066, %v5354
        %v5366 = vmul.f32 %v5067, %v5354
        %v5367 = vmul.f32 %v5068, %v5354
        %v5368 = vmul.f32 %v5069, %v5354
        %v5369 = vmul.f32 %v5070, %v5354
        %v5370 = vmul.f32 %v5071, %v5354
        %v5371 = vmul.f32 %v5072, %v5354
        %v5372 = vmul.f32 %v5073, %v5354
        %v5373 = vmul.f32 %v5074, %v5354
        %v5374 = vmul.f32 %v5075, %v5354
        %v5375 = vmul.f32 %v5076, %v5354
        %v5376 = vmul.f32 %v5077, %v5354
        %v5377 = vmul.f32 %v5078, %v5354
        %v5378 = vmul.f32 %v5079, %v5354
        %v5379 = vmul.f32 %v5080, %v5354
        %v5380 = vmul.f32 %v5081, %v5354
        %v5381 = vmul.f32 %v5082, %v5354
        %v5382 = vmul.f32 %v5083, %v5354
        %v5383 = vmul.f32 %v5084, %v5354
        %v5384 = vmul.f32 %v5085, %v5354
        %v5385 = vmul.f32 %v5086, %v5354
        %v5386 = vmul.f32 %v5087, %v5354
        %v5419 = vrot.slane %v5355, 2
        %v5420 = vrot.slane %v5356, 2
        %v5421 = vsel %vm1896, %v5419, %v5420
        %v5422 = vrot.slane %v5357, 2
        %v5423 = vsel %vm1896, %v5420, %v5422
        %v5424 = vrot.slane %v5358, 2
        %v5425 = vsel %vm1896, %v5422, %v5424
        %v5426 = vrot.slane %v5359, 2
        %v5427 = vsel %vm1896, %v5424, %v5426
        %v5428 = vrot.slane %v5360, 2
        %v5429 = vsel %vm1896, %v5426, %v5428
        %v5430 = vrot.slane %v5361, 2
        %v5431 = vsel %vm1896, %v5428, %v5430
        %v5432 = vrot.slane %v5362, 2
        %v5433 = vsel %vm1896, %v5430, %v5432
        %v5434 = vrot.slane %v5363, 2
        %v5435 = vsel %vm1896, %v5432, %v5434
        %v5436 = vrot.slane %v5364, 2
        %v5437 = vsel %vm1896, %v5434, %v5436
        %v5438 = vrot.slane %v5365, 2
        %v5439 = vsel %vm1896, %v5436, %v5438
        %v5440 = vrot.slane %v5366, 2
        %v5441 = vsel %vm1896, %v5438, %v5440
        %v5442 = vrot.slane %v5367, 2
        %v5443 = vsel %vm1896, %v5440, %v5442
        %v5444 = vrot.slane %v5368, 2
        %v5445 = vsel %vm1896, %v5442, %v5444
        %v5446 = vrot.slane %v5369, 2
        %v5447 = vsel %vm1896, %v5444, %v5446
        %v5448 = vrot.slane %v5370, 2
        %v5449 = vsel %vm1896, %v5446, %v5448
        %v5450 = vrot.slane %v5371, 2
        %v5451 = vsel %vm1896, %v5448, %v5450
        %v5452 = vrot.slane %v5372, 2
        %v5453 = vsel %vm1896, %v5450, %v5452
        %v5454 = vrot.slane %v5373, 2
        %v5455 = vsel %vm1896, %v5452, %v5454
        %v5456 = vrot.slane %v5374, 2
        %v5457 = vsel %vm1896, %v5454, %v5456
        %v5458 = vrot.slane %v5375, 2
        %v5459 = vsel %vm1896, %v5456, %v5458
        %v5460 = vrot.slane %v5376, 2
        %v5461 = vsel %vm1896, %v5458, %v5460
        %v5462 = vrot.slane %v5377, 2
        %v5463 = vsel %vm1896, %v5460, %v5462
        %v5464 = vrot.slane %v5378, 2
        %v5465 = vsel %vm1896, %v5462, %v5464
        %v5466 = vrot.slane %v5379, 2
        %v5467 = vsel %vm1896, %v5464, %v5466
        %v5468 = vrot.slane %v5380, 2
        %v5469 = vsel %vm1896, %v5466, %v5468
        %v5470 = vrot.slane %v5381, 2
        %v5471 = vsel %vm1896, %v5468, %v5470
        %v5472 = vrot.slane %v5382, 2
        %v5473 = vsel %vm1896, %v5470, %v5472
        %v5474 = vrot.slane %v5383, 2
        %v5475 = vsel %vm1896, %v5472, %v5474
        %v5476 = vrot.slane %v5384, 2
        %v5477 = vsel %vm1896, %v5474, %v5476
        %v5478 = vrot.slane %v5385, 2
        %v5479 = vsel %vm1896, %v5476, %v5478
        %v5480 = vrot.slane %v5386, 2
        %v5481 = vsel %vm1896, %v5478, %v5480
        %v5514 = vadd.f32 %v5319, %v5421
        %v5515 = vadd.f32 %v5320, %v5423
        %v5516 = vadd.f32 %v5321, %v5425
        %v5517 = vadd.f32 %v5322, %v5427
        %v5518 = vadd.f32 %v5323, %v5429
        %v5519 = vadd.f32 %v5324, %v5431
        %v5520 = vadd.f32 %v5325, %v5433
        %v5521 = vadd.f32 %v5326, %v5435
        %v5522 = vadd.f32 %v5327, %v5437
        %v5523 = vadd.f32 %v5328, %v5439
        %v5524 = vadd.f32 %v5329, %v5441
        %v5525 = vadd.f32 %v5330, %v5443
        %v5526 = vadd.f32 %v5331, %v5445
        %v5527 = vadd.f32 %v5332, %v5447
        %v5528 = vadd.f32 %v5333, %v5449
        %v5529 = vadd.f32 %v5334, %v5451
        %v5530 = vadd.f32 %v5335, %v5453
        %v5531 = vadd.f32 %v5336, %v5455
        %v5532 = vadd.f32 %v5337, %v5457
        %v5533 = vadd.f32 %v5338, %v5459
        %v5534 = vadd.f32 %v5339, %v5461
        %v5535 = vadd.f32 %v5340, %v5463
        %v5536 = vadd.f32 %v5341, %v5465
        %v5537 = vadd.f32 %v5342, %v5467
        %v5538 = vadd.f32 %v5343, %v5469
        %v5539 = vadd.f32 %v5344, %v5471
        %v5540 = vadd.f32 %v5345, %v5473
        %v5541 = vadd.f32 %v5346, %v5475
        %v5542 = vadd.f32 %v5347, %v5477
        %v5543 = vadd.f32 %v5348, %v5479
        %v5544 = vadd.f32 %v5349, %v5481
        %v5545 = vadd.f32 %v5350, %v5480
        %v5546 = vlaneseq
        %v5547 = vshrl.u32 %v5546, 7
        %v5548 = vsub.s32 7, %v5547
        %v5549 = vrot.slane %v1562, %v5548
        %v5550 = vmul.f32 %v5056, %v5549
        %v5551 = vmul.f32 %v5057, %v5549
        %v5552 = vmul.f32 %v5058, %v5549
        %v5553 = vmul.f32 %v5059, %v5549
        %v5554 = vmul.f32 %v5060, %v5549
        %v5555 = vmul.f32 %v5061, %v5549
        %v5556 = vmul.f32 %v5062, %v5549
        %v5557 = vmul.f32 %v5063, %v5549
        %v5558 = vmul.f32 %v5064, %v5549
        %v5559 = vmul.f32 %v5065, %v5549
        %v5560 = vmul.f32 %v5066, %v5549
        %v5561 = vmul.f32 %v5067, %v5549
        %v5562 = vmul.f32 %v5068, %v5549
        %v5563 = vmul.f32 %v5069, %v5549
        %v5564 = vmul.f32 %v5070, %v5549
        %v5565 = vmul.f32 %v5071, %v5549
        %v5566 = vmul.f32 %v5072, %v5549
        %v5567 = vmul.f32 %v5073, %v5549
        %v5568 = vmul.f32 %v5074, %v5549
        %v5569 = vmul.f32 %v5075, %v5549
        %v5570 = vmul.f32 %v5076, %v5549
        %v5571 = vmul.f32 %v5077, %v5549
        %v5572 = vmul.f32 %v5078, %v5549
        %v5573 = vmul.f32 %v5079, %v5549
        %v5574 = vmul.f32 %v5080, %v5549
        %v5575 = vmul.f32 %v5081, %v5549
        %v5576 = vmul.f32 %v5082, %v5549
        %v5577 = vmul.f32 %v5083, %v5549
        %v5578 = vmul.f32 %v5084, %v5549
        %v5579 = vmul.f32 %v5085, %v5549
        %v5580 = vmul.f32 %v5086, %v5549
        %v5581 = vmul.f32 %v5087, %v5549
        %v5614 = vrot.slane %v5550, 3
        %v5615 = vrot.slane %v5551, 3
        %v5616 = vsel %vm2092, %v5614, %v5615
        %v5617 = vrot.slane %v5552, 3
        %v5618 = vsel %vm2092, %v5615, %v5617
        %v5619 = vrot.slane %v5553, 3
        %v5620 = vsel %vm2092, %v5617, %v5619
        %v5621 = vrot.slane %v5554, 3
        %v5622 = vsel %vm2092, %v5619, %v5621
        %v5623 = vrot.slane %v5555, 3
        %v5624 = vsel %vm2092, %v5621, %v5623
        %v5625 = vrot.slane %v5556, 3
        %v5626 = vsel %vm2092, %v5623, %v5625
        %v5627 = vrot.slane %v5557, 3
        %v5628 = vsel %vm2092, %v5625, %v5627
        %v5629 = vrot.slane %v5558, 3
        %v5630 = vsel %vm2092, %v5627, %v5629
        %v5631 = vrot.slane %v5559, 3
        %v5632 = vsel %vm2092, %v5629, %v5631
        %v5633 = vrot.slane %v5560, 3
        %v5634 = vsel %vm2092, %v5631, %v5633
        %v5635 = vrot.slane %v5561, 3
        %v5636 = vsel %vm2092, %v5633, %v5635
        %v5637 = vrot.slane %v5562, 3
        %v5638 = vsel %vm2092, %v5635, %v5637
        %v5639 = vrot.slane %v5563, 3
        %v5640 = vsel %vm2092, %v5637, %v5639
        %v5641 = vrot.slane %v5564, 3
        %v5642 = vsel %vm2092, %v5639, %v5641
        %v5643 = vrot.slane %v5565, 3
        %v5644 = vsel %vm2092, %v5641, %v5643
        %v5645 = vrot.slane %v5566, 3
        %v5646 = vsel %vm2092, %v5643, %v5645
        %v5647 = vrot.slane %v5567, 3
        %v5648 = vsel %vm2092, %v5645, %v5647
        %v5649 = vrot.slane %v5568, 3
        %v5650 = vsel %vm2092, %v5647, %v5649
        %v5651 = vrot.slane %v5569, 3
        %v5652 = vsel %vm2092, %v5649, %v5651
        %v5653 = vrot.slane %v5570, 3
        %v5654 = vsel %vm2092, %v5651, %v5653
        %v5655 = vrot.slane %v5571, 3
        %v5656 = vsel %vm2092, %v5653, %v5655
        %v5657 = vrot.slane %v5572, 3
        %v5658 = vsel %vm2092, %v5655, %v5657
        %v5659 = vrot.slane %v5573, 3
        %v5660 = vsel %vm2092, %v5657, %v5659
        %v5661 = vrot.slane %v5574, 3
        %v5662 = vsel %vm2092, %v5659, %v5661
        %v5663 = vrot.slane %v5575, 3
        %v5664 = vsel %vm2092, %v5661, %v5663
        %v5665 = vrot.slane %v5576, 3
        %v5666 = vsel %vm2092, %v5663, %v5665
        %v5667 = vrot.slane %v5577, 3
        %v5668 = vsel %vm2092, %v5665, %v5667
        %v5669 = vrot.slane %v5578, 3
        %v5670 = vsel %vm2092, %v5667, %v5669
        %v5671 = vrot.slane %v5579, 3
        %v5672 = vsel %vm2092, %v5669, %v5671
        %v5673 = vrot.slane %v5580, 3
        %v5674 = vsel %vm2092, %v5671, %v5673
        %v5675 = vrot.slane %v5581, 3
        %v5676 = vsel %vm2092, %v5673, %v5675
        %v5709 = vadd.f32 %v5514, %v5616
        %v5710 = vadd.f32 %v5515, %v5618
        %v5711 = vadd.f32 %v5516, %v5620
        %v5712 = vadd.f32 %v5517, %v5622
        %v5713 = vadd.f32 %v5518, %v5624
        %v5714 = vadd.f32 %v5519, %v5626
        %v5715 = vadd.f32 %v5520, %v5628
        %v5716 = vadd.f32 %v5521, %v5630
        %v5717 = vadd.f32 %v5522, %v5632
        %v5718 = vadd.f32 %v5523, %v5634
        %v5719 = vadd.f32 %v5524, %v5636
        %v5720 = vadd.f32 %v5525, %v5638
        %v5721 = vadd.f32 %v5526, %v5640
        %v5722 = vadd.f32 %v5527, %v5642
        %v5723 = vadd.f32 %v5528, %v5644
        %v5724 = vadd.f32 %v5529, %v5646
        %v5725 = vadd.f32 %v5530, %v5648
        %v5726 = vadd.f32 %v5531, %v5650
        %v5727 = vadd.f32 %v5532, %v5652
        %v5728 = vadd.f32 %v5533, %v5654
        %v5729 = vadd.f32 %v5534, %v5656
        %v5730 = vadd.f32 %v5535, %v5658
        %v5731 = vadd.f32 %v5536, %v5660
        %v5732 = vadd.f32 %v5537, %v5662
        %v5733 = vadd.f32 %v5538, %v5664
        %v5734 = vadd.f32 %v5539, %v5666
        %v5735 = vadd.f32 %v5540, %v5668
        %v5736 = vadd.f32 %v5541, %v5670
        %v5737 = vadd.f32 %v5542, %v5672
        %v5738 = vadd.f32 %v5543, %v5674
        %v5739 = vadd.f32 %v5544, %v5676
        %v5740 = vadd.f32 %v5545, %v5675
        %v5741 = vlaneseq
        %v5742 = vshrl.u32 %v5741, 7
        %v5743 = vsub.s32 0, %v5742
        %v5744 = vrot.slane %v1563, %v5743
        %v5745 = vmul.f32 %v5056, %v5744
        %v5746 = vmul.f32 %v5057, %v5744
        %v5747 = vmul.f32 %v5058, %v5744
        %v5748 = vmul.f32 %v5059, %v5744
        %v5749 = vmul.f32 %v5060, %v5744
        %v5750 = vmul.f32 %v5061, %v5744
        %v5751 = vmul.f32 %v5062, %v5744
        %v5752 = vmul.f32 %v5063, %v5744
        %v5753 = vmul.f32 %v5064, %v5744
        %v5754 = vmul.f32 %v5065, %v5744
        %v5755 = vmul.f32 %v5066, %v5744
        %v5756 = vmul.f32 %v5067, %v5744
        %v5757 = vmul.f32 %v5068, %v5744
        %v5758 = vmul.f32 %v5069, %v5744
        %v5759 = vmul.f32 %v5070, %v5744
        %v5760 = vmul.f32 %v5071, %v5744
        %v5761 = vmul.f32 %v5072, %v5744
        %v5762 = vmul.f32 %v5073, %v5744
        %v5763 = vmul.f32 %v5074, %v5744
        %v5764 = vmul.f32 %v5075, %v5744
        %v5765 = vmul.f32 %v5076, %v5744
        %v5766 = vmul.f32 %v5077, %v5744
        %v5767 = vmul.f32 %v5078, %v5744
        %v5768 = vmul.f32 %v5079, %v5744
        %v5769 = vmul.f32 %v5080, %v5744
        %v5770 = vmul.f32 %v5081, %v5744
        %v5771 = vmul.f32 %v5082, %v5744
        %v5772 = vmul.f32 %v5083, %v5744
        %v5773 = vmul.f32 %v5084, %v5744
        %v5774 = vmul.f32 %v5085, %v5744
        %v5775 = vmul.f32 %v5086, %v5744
        %v5776 = vmul.f32 %v5087, %v5744
        %v5809 = vrot.slane %v5745, 4
        %v5810 = vrot.slane %v5746, 4
        %v5811 = vsel %vm2288, %v5809, %v5810
        %v5812 = vrot.slane %v5747, 4
        %v5813 = vsel %vm2288, %v5810, %v5812
        %v5814 = vrot.slane %v5748, 4
        %v5815 = vsel %vm2288, %v5812, %v5814
        %v5816 = vrot.slane %v5749, 4
        %v5817 = vsel %vm2288, %v5814, %v5816
        %v5818 = vrot.slane %v5750, 4
        %v5819 = vsel %vm2288, %v5816, %v5818
        %v5820 = vrot.slane %v5751, 4
        %v5821 = vsel %vm2288, %v5818, %v5820
        %v5822 = vrot.slane %v5752, 4
        %v5823 = vsel %vm2288, %v5820, %v5822
        %v5824 = vrot.slane %v5753, 4
        %v5825 = vsel %vm2288, %v5822, %v5824
        %v5826 = vrot.slane %v5754, 4
        %v5827 = vsel %vm2288, %v5824, %v5826
        %v5828 = vrot.slane %v5755, 4
        %v5829 = vsel %vm2288, %v5826, %v5828
        %v5830 = vrot.slane %v5756, 4
        %v5831 = vsel %vm2288, %v5828, %v5830
        %v5832 = vrot.slane %v5757, 4
        %v5833 = vsel %vm2288, %v5830, %v5832
        %v5834 = vrot.slane %v5758, 4
        %v5835 = vsel %vm2288, %v5832, %v5834
        %v5836 = vrot.slane %v5759, 4
        %v5837 = vsel %vm2288, %v5834, %v5836
        %v5838 = vrot.slane %v5760, 4
        %v5839 = vsel %vm2288, %v5836, %v5838
        %v5840 = vrot.slane %v5761, 4
        %v5841 = vsel %vm2288, %v5838, %v5840
        %v5842 = vrot.slane %v5762, 4
        %v5843 = vsel %vm2288, %v5840, %v5842
        %v5844 = vrot.slane %v5763, 4
        %v5845 = vsel %vm2288, %v5842, %v5844
        %v5846 = vrot.slane %v5764, 4
        %v5847 = vsel %vm2288, %v5844, %v5846
        %v5848 = vrot.slane %v5765, 4
        %v5849 = vsel %vm2288, %v5846, %v5848
        %v5850 = vrot.slane %v5766, 4
        %v5851 = vsel %vm2288, %v5848, %v5850
        %v5852 = vrot.slane %v5767, 4
        %v5853 = vsel %vm2288, %v5850, %v5852
        %v5854 = vrot.slane %v5768, 4
        %v5855 = vsel %vm2288, %v5852, %v5854
        %v5856 = vrot.slane %v5769, 4
        %v5857 = vsel %vm2288, %v5854, %v5856
        %v5858 = vrot.slane %v5770, 4
        %v5859 = vsel %vm2288, %v5856, %v5858
        %v5860 = vrot.slane %v5771, 4
        %v5861 = vsel %vm2288, %v5858, %v5860
        %v5862 = vrot.slane %v5772, 4
        %v5863 = vsel %vm2288, %v5860, %v5862
        %v5864 = vrot.slane %v5773, 4
        %v5865 = vsel %vm2288, %v5862, %v5864
        %v5866 = vrot.slane %v5774, 4
        %v5867 = vsel %vm2288, %v5864, %v5866
        %v5868 = vrot.slane %v5775, 4
        %v5869 = vsel %vm2288, %v5866, %v5868
        %v5870 = vrot.slane %v5776, 4
        %v5871 = vsel %vm2288, %v5868, %v5870
        %v5904 = vadd.f32 %v5709, %v5811
        %v5905 = vadd.f32 %v5710, %v5813
        %v5906 = vadd.f32 %v5711, %v5815
        %v5907 = vadd.f32 %v5712, %v5817
        %v5908 = vadd.f32 %v5713, %v5819
        %v5909 = vadd.f32 %v5714, %v5821
        %v5910 = vadd.f32 %v5715, %v5823
        %v5911 = vadd.f32 %v5716, %v5825
        %v5912 = vadd.f32 %v5717, %v5827
        %v5913 = vadd.f32 %v5718, %v5829
        %v5914 = vadd.f32 %v5719, %v5831
        %v5915 = vadd.f32 %v5720, %v5833
        %v5916 = vadd.f32 %v5721, %v5835
        %v5917 = vadd.f32 %v5722, %v5837
        %v5918 = vadd.f32 %v5723, %v5839
        %v5919 = vadd.f32 %v5724, %v5841
        %v5920 = vadd.f32 %v5725, %v5843
        %v5921 = vadd.f32 %v5726, %v5845
        %v5922 = vadd.f32 %v5727, %v5847
        %v5923 = vadd.f32 %v5728, %v5849
        %v5924 = vadd.f32 %v5729, %v5851
        %v5925 = vadd.f32 %v5730, %v5853
        %v5926 = vadd.f32 %v5731, %v5855
        %v5927 = vadd.f32 %v5732, %v5857
        %v5928 = vadd.f32 %v5733, %v5859
        %v5929 = vadd.f32 %v5734, %v5861
        %v5930 = vadd.f32 %v5735, %v5863
        %v5931 = vadd.f32 %v5736, %v5865
        %v5932 = vadd.f32 %v5737, %v5867
        %v5933 = vadd.f32 %v5738, %v5869
        %v5934 = vadd.f32 %v5739, %v5871
        %v5935 = vadd.f32 %v5740, %v5870
        %v5936 = vld [vmem:[%s7 + $0x26] sm:$0xff]
        %v5937 = vld [vmem:[%s7 + $0x2e] sm:$0xff]
        %v5938 = vld [vmem:[%s7 + $0x36] sm:$0xff]
        %v5939 = vld [vmem:[%s7 + $0x3e] sm:$0xff]
        %v5940 = vld [vmem:[%s7 + $0x46] sm:$0xff]
        %v5941 = vld [vmem:[%s7 + $0x4e] sm:$0xff]
        %v5942 = vld [vmem:[%s7 + $0x56] sm:$0xff]
        %v5943 = vld [vmem:[%s7 + $0x5e] sm:$0xff]
        %v5944 = vld [vmem:[%s7 + $0x66] sm:$0xff]
        %v5945 = vld [vmem:[%s7 + $0x6e] sm:$0xff]
        %v5946 = vld [vmem:[%s7 + $0x76] sm:$0xff]
        %v5947 = vld [vmem:[%s7 + $0x7e] sm:$0xff]
        %v5948 = vld [vmem:[%s7 + $0x86] sm:$0xff]
        %v5949 = vld [vmem:[%s7 + $0x8e] sm:$0xff]
        %v5950 = vld [vmem:[%s7 + $0x96] sm:$0xff]
        %v5951 = vld [vmem:[%s7 + $0x9e] sm:$0xff]
        %v5952 = vld [vmem:[%s7 + $0xa6] sm:$0xff]
        %v5953 = vld [vmem:[%s7 + $0xae] sm:$0xff]
        %v5954 = vld [vmem:[%s7 + $0xb6] sm:$0xff]
        %v5955 = vld [vmem:[%s7 + $0xbe] sm:$0xff]
        %v5956 = vld [vmem:[%s7 + $0xc6] sm:$0xff]
        %v5957 = vld [vmem:[%s7 + $0xce] sm:$0xff]
        %v5958 = vld [vmem:[%s7 + $0xd6] sm:$0xff]
        %v5959 = vld [vmem:[%s7 + $0xde] sm:$0xff]
        %v5960 = vld [vmem:[%s7 + $0xe6] sm:$0xff]
        %v5961 = vld [vmem:[%s7 + $0xee] sm:$0xff]
        %v5962 = vld [vmem:[%s7 + $0xf6] sm:$0xff]
        %v5963 = vld [vmem:[%s7 + $0xfe] sm:$0xff]
        %v5964 = vld [vmem:[%s7 + $0x106] sm:$0xff]
        %v5965 = vld [vmem:[%s7 + $0x10e] sm:$0xff]
        %v5966 = vld [vmem:[%s7 + $0x116] sm:$0xff]
        %v5967 = vld [vmem:[%s7 + $0x11e] sm:$0xf]
        %5969 = vset.pattern.permute.xlu0 0
        %5970 = vperm.xlu0 %5969, %v5936
        %v5971 = vpop.permute.xlu0 %5970
        %5974 = vset.pattern.permute.xlu0 0
        %5975 = vperm.xlu0 %5974, %v5937
        %v5976 = vpop.permute.xlu0 %5975
        %5979 = vset.pattern.permute.xlu0 0
        %5980 = vperm.xlu0 %5979, %v5938
        %v5981 = vpop.permute.xlu0 %5980
        %5984 = vset.pattern.permute.xlu0 0
        %5985 = vperm.xlu0 %5984, %v5939
        %v5986 = vpop.permute.xlu0 %5985
        %5989 = vset.pattern.permute.xlu0 0
        %5990 = vperm.xlu0 %5989, %v5940
        %v5991 = vpop.permute.xlu0 %5990
        %5994 = vset.pattern.permute.xlu0 0
        %5995 = vperm.xlu0 %5994, %v5941
        %v5996 = vpop.permute.xlu0 %5995
        %5999 = vset.pattern.permute.xlu0 0
        %6000 = vperm.xlu0 %5999, %v5942
        %v6001 = vpop.permute.xlu0 %6000
        %6004 = vset.pattern.permute.xlu0 0
        %6005 = vperm.xlu0 %6004, %v5943
        %v6006 = vpop.permute.xlu0 %6005
        %6009 = vset.pattern.permute.xlu0 0
        %6010 = vperm.xlu0 %6009, %v5944
        %v6011 = vpop.permute.xlu0 %6010
        %6014 = vset.pattern.permute.xlu0 0
        %6015 = vperm.xlu0 %6014, %v5945
        %v6016 = vpop.permute.xlu0 %6015
        %6019 = vset.pattern.permute.xlu0 0
        %6020 = vperm.xlu0 %6019, %v5946
        %v6021 = vpop.permute.xlu0 %6020
        %6024 = vset.pattern.permute.xlu0 0
        %6025 = vperm.xlu0 %6024, %v5947
        %v6026 = vpop.permute.xlu0 %6025
        %6029 = vset.pattern.permute.xlu0 0
        %6030 = vperm.xlu0 %6029, %v5948
        %v6031 = vpop.permute.xlu0 %6030
        %6034 = vset.pattern.permute.xlu0 0
        %6035 = vperm.xlu0 %6034, %v5949
        %v6036 = vpop.permute.xlu0 %6035
        %6039 = vset.pattern.permute.xlu0 0
        %6040 = vperm.xlu0 %6039, %v5950
        %v6041 = vpop.permute.xlu0 %6040
        %6044 = vset.pattern.permute.xlu0 0
        %6045 = vperm.xlu0 %6044, %v5951
        %v6046 = vpop.permute.xlu0 %6045
        %6049 = vset.pattern.permute.xlu0 0
        %6050 = vperm.xlu0 %6049, %v5952
        %v6051 = vpop.permute.xlu0 %6050
        %6054 = vset.pattern.permute.xlu0 0
        %6055 = vperm.xlu0 %6054, %v5953
        %v6056 = vpop.permute.xlu0 %6055
        %6059 = vset.pattern.permute.xlu0 0
        %6060 = vperm.xlu0 %6059, %v5954
        %v6061 = vpop.permute.xlu0 %6060
        %6064 = vset.pattern.permute.xlu0 0
        %6065 = vperm.xlu0 %6064, %v5955
        %v6066 = vpop.permute.xlu0 %6065
        %6069 = vset.pattern.permute.xlu0 0
        %6070 = vperm.xlu0 %6069, %v5956
        %v6071 = vpop.permute.xlu0 %6070
        %6074 = vset.pattern.permute.xlu0 0
        %6075 = vperm.xlu0 %6074, %v5957
        %v6076 = vpop.permute.xlu0 %6075
        %6079 = vset.pattern.permute.xlu0 0
        %6080 = vperm.xlu0 %6079, %v5958
        %v6081 = vpop.permute.xlu0 %6080
        %6084 = vset.pattern.permute.xlu0 0
        %6085 = vperm.xlu0 %6084, %v5959
        %v6086 = vpop.permute.xlu0 %6085
        %6089 = vset.pattern.permute.xlu0 0
        %6090 = vperm.xlu0 %6089, %v5960
        %v6091 = vpop.permute.xlu0 %6090
        %6094 = vset.pattern.permute.xlu0 0
        %6095 = vperm.xlu0 %6094, %v5961
        %v6096 = vpop.permute.xlu0 %6095
        %6099 = vset.pattern.permute.xlu0 0
        %6100 = vperm.xlu0 %6099, %v5962
        %v6101 = vpop.permute.xlu0 %6100
        %6104 = vset.pattern.permute.xlu0 0
        %6105 = vperm.xlu0 %6104, %v5963
        %v6106 = vpop.permute.xlu0 %6105
        %6109 = vset.pattern.permute.xlu0 0
        %6110 = vperm.xlu0 %6109, %v5964
        %v6111 = vpop.permute.xlu0 %6110
        %6114 = vset.pattern.permute.xlu0 0
        %6115 = vperm.xlu0 %6114, %v5965
        %v6116 = vpop.permute.xlu0 %6115
        %6119 = vset.pattern.permute.xlu0 0
        %6120 = vperm.xlu0 %6119, %v5966
        %v6121 = vpop.permute.xlu0 %6120
        %6124 = vset.pattern.permute.xlu0 0
        %6125 = vperm.xlu0 %6124, %v5967
        %v6126 = vpop.permute.xlu0 %6125
        %v6128 = vmul.f32 %v5904, %v5971
        %v6129 = vmul.f32 %v5905, %v5976
        %v6130 = vmul.f32 %v5906, %v5981
        %v6131 = vmul.f32 %v5907, %v5986
        %v6132 = vmul.f32 %v5908, %v5991
        %v6133 = vmul.f32 %v5909, %v5996
        %v6134 = vmul.f32 %v5910, %v6001
        %v6135 = vmul.f32 %v5911, %v6006
        %v6136 = vmul.f32 %v5912, %v6011
        %v6137 = vmul.f32 %v5913, %v6016
        %v6138 = vmul.f32 %v5914, %v6021
        %v6139 = vmul.f32 %v5915, %v6026
        %v6140 = vmul.f32 %v5916, %v6031
        %v6141 = vmul.f32 %v5917, %v6036
        %v6142 = vmul.f32 %v5918, %v6041
        %v6143 = vmul.f32 %v5919, %v6046
        %v6144 = vmul.f32 %v5920, %v6051
        %v6145 = vmul.f32 %v5921, %v6056
        %v6146 = vmul.f32 %v5922, %v6061
        %v6147 = vmul.f32 %v5923, %v6066
        %v6148 = vmul.f32 %v5924, %v6071
        %v6149 = vmul.f32 %v5925, %v6076
        %v6150 = vmul.f32 %v5926, %v6081
        %v6151 = vmul.f32 %v5927, %v6086
        %v6152 = vmul.f32 %v5928, %v6091
        %v6153 = vmul.f32 %v5929, %v6096
        %v6154 = vmul.f32 %v5930, %v6101
        %v6155 = vmul.f32 %v5931, %v6106
        %v6156 = vmul.f32 %v5932, %v6111
        %v6157 = vmul.f32 %v5933, %v6116
        %v6158 = vmul.f32 %v5934, %v6121
        %v6159 = vmul.f32 %v5935, %v6126
        %v6160 = vadd.f32 %v6128, %v6129
        %v6161 = vadd.f32 %v6160, %v6130
        %v6162 = vadd.f32 %v6161, %v6131
        %v6163 = vadd.f32 %v6162, %v6132
        %v6164 = vadd.f32 %v6163, %v6133
        %v6165 = vadd.f32 %v6164, %v6134
        %v6166 = vadd.f32 %v6165, %v6135
        %v6167 = vadd.f32 %v6166, %v6136
        %v6168 = vadd.f32 %v6167, %v6137
        %v6169 = vadd.f32 %v6168, %v6138
        %v6170 = vadd.f32 %v6169, %v6139
        %v6171 = vadd.f32 %v6170, %v6140
        %v6172 = vadd.f32 %v6171, %v6141
        %v6173 = vadd.f32 %v6172, %v6142
        %v6174 = vadd.f32 %v6173, %v6143
        %v6175 = vadd.f32 %v6174, %v6144
        %v6176 = vadd.f32 %v6175, %v6145
        %v6177 = vadd.f32 %v6176, %v6146
        %v6178 = vadd.f32 %v6177, %v6147
        %v6179 = vadd.f32 %v6178, %v6148
        %v6180 = vadd.f32 %v6179, %v6149
        %v6181 = vadd.f32 %v6180, %v6150
        %v6182 = vadd.f32 %v6181, %v6151
        %v6183 = vadd.f32 %v6182, %v6152
        %v6184 = vadd.f32 %v6183, %v6153
        %v6185 = vadd.f32 %v6184, %v6154
        %v6186 = vadd.f32 %v6185, %v6155
        %v6187 = vadd.f32 %v6186, %v6156
        %v6188 = vadd.f32 %v6187, %v6157
        %v6189 = vadd.f32 %v6188, %v6158
        %v6190 = vsel %vm2288, %v6159, 0.0
        %v6191 = vadd.f32 %v6189, %v6190
        %v6192 = vrot.slane %v6191, 4
        %v6193 = vadd.f32 %v6191, %v6192
        %v6194 = vrot.slane %v6193, 2
        %v6195 = vadd.f32 %v6193, %v6194
        %v6196 = vrot.slane %v6195, 1
        %v6197 = vadd.f32 %v6195, %v6196
        %v6198 = vmul.f32 %v6197, 0.0051020407
        %v6199 = vmul.f32 %v6128, %v6128
        %v6200 = vmul.f32 %v6129, %v6129
        %v6201 = vmul.f32 %v6130, %v6130
        %v6202 = vmul.f32 %v6131, %v6131
        %v6203 = vmul.f32 %v6132, %v6132
        %v6204 = vmul.f32 %v6133, %v6133
        %v6205 = vmul.f32 %v6134, %v6134
        %v6206 = vmul.f32 %v6135, %v6135
        %v6207 = vmul.f32 %v6136, %v6136
        %v6208 = vmul.f32 %v6137, %v6137
        %v6209 = vmul.f32 %v6138, %v6138
        %v6210 = vmul.f32 %v6139, %v6139
        %v6211 = vmul.f32 %v6140, %v6140
        %v6212 = vmul.f32 %v6141, %v6141
        %v6213 = vmul.f32 %v6142, %v6142
        %v6214 = vmul.f32 %v6143, %v6143
        %v6215 = vmul.f32 %v6144, %v6144
        %v6216 = vmul.f32 %v6145, %v6145
        %v6217 = vmul.f32 %v6146, %v6146
        %v6218 = vmul.f32 %v6147, %v6147
        %v6219 = vmul.f32 %v6148, %v6148
        %v6220 = vmul.f32 %v6149, %v6149
        %v6221 = vmul.f32 %v6150, %v6150
        %v6222 = vmul.f32 %v6151, %v6151
        %v6223 = vmul.f32 %v6152, %v6152
        %v6224 = vmul.f32 %v6153, %v6153
        %v6225 = vmul.f32 %v6154, %v6154
        %v6226 = vmul.f32 %v6155, %v6155
        %v6227 = vmul.f32 %v6156, %v6156
        %v6228 = vmul.f32 %v6157, %v6157
        %v6229 = vmul.f32 %v6158, %v6158
        %v6230 = vmul.f32 %v6159, %v6159
        %v6231 = vadd.f32 %v6199, %v6200
        %v6232 = vadd.f32 %v6231, %v6201
        %v6233 = vadd.f32 %v6232, %v6202
        %v6234 = vadd.f32 %v6233, %v6203
        %v6235 = vadd.f32 %v6234, %v6204
        %v6236 = vadd.f32 %v6235, %v6205
        %v6237 = vadd.f32 %v6236, %v6206
        %v6238 = vadd.f32 %v6237, %v6207
        %v6239 = vadd.f32 %v6238, %v6208
        %v6240 = vadd.f32 %v6239, %v6209
        %v6241 = vadd.f32 %v6240, %v6210
        %v6242 = vadd.f32 %v6241, %v6211
        %v6243 = vadd.f32 %v6242, %v6212
        %v6244 = vadd.f32 %v6243, %v6213
        %v6245 = vadd.f32 %v6244, %v6214
        %v6246 = vadd.f32 %v6245, %v6215
        %v6247 = vadd.f32 %v6246, %v6216
        %v6248 = vadd.f32 %v6247, %v6217
        %v6249 = vadd.f32 %v6248, %v6218
        %v6250 = vadd.f32 %v6249, %v6219
        %v6251 = vadd.f32 %v6250, %v6220
        %v6252 = vadd.f32 %v6251, %v6221
        %v6253 = vadd.f32 %v6252, %v6222
        %v6254 = vadd.f32 %v6253, %v6223
        %v6255 = vadd.f32 %v6254, %v6224
        %v6256 = vadd.f32 %v6255, %v6225
        %v6257 = vadd.f32 %v6256, %v6226
        %v6258 = vadd.f32 %v6257, %v6227
        %v6259 = vadd.f32 %v6258, %v6228
        %v6260 = vadd.f32 %v6259, %v6229
        %v6261 = vsel %vm2288, %v6230, 0.0
        %v6262 = vadd.f32 %v6260, %v6261
        %v6263 = vrot.slane %v6262, 4
        %v6264 = vadd.f32 %v6262, %v6263
        %v6265 = vrot.slane %v6264, 2
        %v6266 = vadd.f32 %v6264, %v6265
        %v6267 = vrot.slane %v6266, 1
        %v6268 = vadd.f32 %v6266, %v6267
        %v6269 = vmul.f32 %v6268, 0.0051020407
        %v6270 = vmul.f32 %v6198, %v6198
        %v6271 = vsub.f32 %v6269, %v6270
        %v6272 = vsub.f32 %v5904, %v6198
        %v6273 = vsub.f32 %v5905, %v6198
        %v6274 = vsub.f32 %v5906, %v6198
        %v6275 = vsub.f32 %v5907, %v6198
        %v6276 = vsub.f32 %v5908, %v6198
        %v6277 = vsub.f32 %v5909, %v6198
        %v6278 = vsub.f32 %v5910, %v6198
        %v6279 = vsub.f32 %v5911, %v6198
        %v6280 = vsub.f32 %v5912, %v6198
        %v6281 = vsub.f32 %v5913, %v6198
        %v6282 = vsub.f32 %v5914, %v6198
        %v6283 = vsub.f32 %v5915, %v6198
        %v6284 = vsub.f32 %v5916, %v6198
        %v6285 = vsub.f32 %v5917, %v6198
        %v6286 = vsub.f32 %v5918, %v6198
        %v6287 = vsub.f32 %v5919, %v6198
        %v6288 = vsub.f32 %v5920, %v6198
        %v6289 = vsub.f32 %v5921, %v6198
        %v6290 = vsub.f32 %v5922, %v6198
        %v6291 = vsub.f32 %v5923, %v6198
        %v6292 = vsub.f32 %v5924, %v6198
        %v6293 = vsub.f32 %v5925, %v6198
        %v6294 = vsub.f32 %v5926, %v6198
        %v6295 = vsub.f32 %v5927, %v6198
        %v6296 = vsub.f32 %v5928, %v6198
        %v6297 = vsub.f32 %v5929, %v6198
        %v6298 = vsub.f32 %v5930, %v6198
        %v6299 = vsub.f32 %v5931, %v6198
        %v6300 = vsub.f32 %v5932, %v6198
        %v6301 = vsub.f32 %v5933, %v6198
        %v6302 = vsub.f32 %v5934, %v6198
        %v6303 = vsub.f32 %v5935, %v6198
        %v6304 = vadd.f32 %v6271, 1e-05
        %v6305 = vrsqrt.pop %v6304
        %v6306 = vmul.f32 %v6272, %v6305
        %v6307 = vmul.f32 %v6273, %v6305
        %v6308 = vmul.f32 %v6274, %v6305
        %v6309 = vmul.f32 %v6275, %v6305
        %v6310 = vmul.f32 %v6276, %v6305
        %v6311 = vmul.f32 %v6277, %v6305
        %v6312 = vmul.f32 %v6278, %v6305
        %v6313 = vmul.f32 %v6279, %v6305
        %v6314 = vmul.f32 %v6280, %v6305
        %v6315 = vmul.f32 %v6281, %v6305
        %v6316 = vmul.f32 %v6282, %v6305
        %v6317 = vmul.f32 %v6283, %v6305
        %v6318 = vmul.f32 %v6284, %v6305
        %v6319 = vmul.f32 %v6285, %v6305
        %v6320 = vmul.f32 %v6286, %v6305
        %v6321 = vmul.f32 %v6287, %v6305
        %v6322 = vmul.f32 %v6288, %v6305
        %v6323 = vmul.f32 %v6289, %v6305
        %v6324 = vmul.f32 %v6290, %v6305
        %v6325 = vmul.f32 %v6291, %v6305
        %v6326 = vmul.f32 %v6292, %v6305
        %v6327 = vmul.f32 %v6293, %v6305
        %v6328 = vmul.f32 %v6294, %v6305
        %v6329 = vmul.f32 %v6295, %v6305
        %v6330 = vmul.f32 %v6296, %v6305
        %v6331 = vmul.f32 %v6297, %v6305
        %v6332 = vmul.f32 %v6298, %v6305
        %v6333 = vmul.f32 %v6299, %v6305
        %v6334 = vmul.f32 %v6300, %v6305
        %v6335 = vmul.f32 %v6301, %v6305
        %v6336 = vmul.f32 %v6302, %v6305
        %v6337 = vmul.f32 %v6303, %v6305
        %v6338 = vld [vmem:[%s472] sm:$0x1]
        %v6340 = vlaneseq
        %v6341 = vshrl.u32 %v6340, 7
        %v6342 = vsub.s32 0, %v6341
        %v6343 = vrot.slane %v6338, %v6342
        %v6345 = vmul.f32 %v6306, %v6343
        %v6346 = vmul.f32 %v6307, %v6343
        %v6347 = vmul.f32 %v6308, %v6343
        %v6348 = vmul.f32 %v6309, %v6343
        %v6349 = vmul.f32 %v6310, %v6343
        %v6350 = vmul.f32 %v6311, %v6343
        %v6351 = vmul.f32 %v6312, %v6343
        %v6352 = vmul.f32 %v6313, %v6343
        %v6353 = vmul.f32 %v6314, %v6343
        %v6354 = vmul.f32 %v6315, %v6343
        %v6355 = vmul.f32 %v6316, %v6343
        %v6356 = vmul.f32 %v6317, %v6343
        %v6357 = vmul.f32 %v6318, %v6343
        %v6358 = vmul.f32 %v6319, %v6343
        %v6359 = vmul.f32 %v6320, %v6343
        %v6360 = vmul.f32 %v6321, %v6343
        %v6361 = vmul.f32 %v6322, %v6343
        %v6362 = vmul.f32 %v6323, %v6343
        %v6363 = vmul.f32 %v6324, %v6343
        %v6364 = vmul.f32 %v6325, %v6343
        %v6365 = vmul.f32 %v6326, %v6343
        %v6366 = vmul.f32 %v6327, %v6343
        %v6367 = vmul.f32 %v6328, %v6343
        %v6368 = vmul.f32 %v6329, %v6343
        %v6369 = vmul.f32 %v6330, %v6343
        %v6370 = vmul.f32 %v6331, %v6343
        %v6371 = vmul.f32 %v6332, %v6343
        %v6372 = vmul.f32 %v6333, %v6343
        %v6373 = vmul.f32 %v6334, %v6343
        %v6374 = vmul.f32 %v6335, %v6343
        %v6375 = vmul.f32 %v6336, %v6343
        %v6376 = vmul.f32 %v6337, %v6343
        %v6377 = vld [vmem:[%s475] sm:$0x1]
        %v6379 = vlaneseq
        %v6380 = vshrl.u32 %v6379, 7
        %v6381 = vsub.s32 0, %v6380
        %v6382 = vrot.slane %v6377, %v6381
        %v6384 = vadd.f32 %v6345, %v6382
        %v6385 = vadd.f32 %v6346, %v6382
        %v6386 = vadd.f32 %v6347, %v6382
        %v6387 = vadd.f32 %v6348, %v6382
        %v6388 = vadd.f32 %v6349, %v6382
        %v6389 = vadd.f32 %v6350, %v6382
        %v6390 = vadd.f32 %v6351, %v6382
        %v6391 = vadd.f32 %v6352, %v6382
        %v6392 = vadd.f32 %v6353, %v6382
        %v6393 = vadd.f32 %v6354, %v6382
        %v6394 = vadd.f32 %v6355, %v6382
        %v6395 = vadd.f32 %v6356, %v6382
        %v6396 = vadd.f32 %v6357, %v6382
        %v6397 = vadd.f32 %v6358, %v6382
        %v6398 = vadd.f32 %v6359, %v6382
        %v6399 = vadd.f32 %v6360, %v6382
        %v6400 = vadd.f32 %v6361, %v6382
        %v6401 = vadd.f32 %v6362, %v6382
        %v6402 = vadd.f32 %v6363, %v6382
        %v6403 = vadd.f32 %v6364, %v6382
        %v6404 = vadd.f32 %v6365, %v6382
        %v6405 = vadd.f32 %v6366, %v6382
        %v6406 = vadd.f32 %v6367, %v6382
        %v6407 = vadd.f32 %v6368, %v6382
        %v6408 = vadd.f32 %v6369, %v6382
        %v6409 = vadd.f32 %v6370, %v6382
        %v6410 = vadd.f32 %v6371, %v6382
        %v6411 = vadd.f32 %v6372, %v6382
        %v6412 = vadd.f32 %v6373, %v6382
        %v6413 = vadd.f32 %v6374, %v6382
        %v6414 = vadd.f32 %v6375, %v6382
        %v6415 = vadd.f32 %v6376, %v6382
        %6416 = vst [vmem:[%s463] sm:$0xff] %v6384
        %6417 = vst [vmem:[%s463 + $0x8] sm:$0xff] %v6385
        %6418 = vst [vmem:[%s463 + $0x10] sm:$0xff] %v6386
        %6419 = vst [vmem:[%s463 + $0x18] sm:$0xff] %v6387
        %6420 = vst [vmem:[%s463 + $0x20] sm:$0xff] %v6388
        %6421 = vst [vmem:[%s463 + $0x28] sm:$0xff] %v6389
        %6422 = vst [vmem:[%s463 + $0x30] sm:$0xff] %v6390
        %6423 = vst [vmem:[%s463 + $0x38] sm:$0xff] %v6391
        %6424 = vst [vmem:[%s463 + $0x40] sm:$0xff] %v6392
        %6425 = vst [vmem:[%s463 + $0x48] sm:$0xff] %v6393
        %6426 = vst [vmem:[%s463 + $0x50] sm:$0xff] %v6394
        %6427 = vst [vmem:[%s463 + $0x58] sm:$0xff] %v6395
        %6428 = vst [vmem:[%s463 + $0x60] sm:$0xff] %v6396
        %6429 = vst [vmem:[%s463 + $0x68] sm:$0xff] %v6397
        %6430 = vst [vmem:[%s463 + $0x70] sm:$0xff] %v6398
        %6431 = vst [vmem:[%s463 + $0x78] sm:$0xff] %v6399
        %6432 = vst [vmem:[%s463 + $0x80] sm:$0xff] %v6400
        %6433 = vst [vmem:[%s463 + $0x88] sm:$0xff] %v6401
        %6434 = vst [vmem:[%s463 + $0x90] sm:$0xff] %v6402
        %6435 = vst [vmem:[%s463 + $0x98] sm:$0xff] %v6403
        %6436 = vst [vmem:[%s463 + $0xa0] sm:$0xff] %v6404
        %6437 = vst [vmem:[%s463 + $0xa8] sm:$0xff] %v6405
        %6438 = vst [vmem:[%s463 + $0xb0] sm:$0xff] %v6406
        %6439 = vst [vmem:[%s463 + $0xb8] sm:$0xff] %v6407
        %6440 = vst [vmem:[%s463 + $0xc0] sm:$0xff] %v6408
        %6441 = vst [vmem:[%s463 + $0xc8] sm:$0xff] %v6409
        %6442 = vst [vmem:[%s463 + $0xd0] sm:$0xff] %v6410
        %6443 = vst [vmem:[%s463 + $0xd8] sm:$0xff] %v6411
        %6444 = vst [vmem:[%s463 + $0xe0] sm:$0xff] %v6412
        %6445 = vst [vmem:[%s463 + $0xe8] sm:$0xff] %v6413
        %6446 = vst [vmem:[%s463 + $0xf0] sm:$0xff] %v6414
        %6447 = vst [vmem:[%s463 + $0xf8] sm:$0xf] %v6415
        %s6448 = sand.u32 %s228, 1
        %s6449 = scalar_lea.sflag [#allocation6], %s6448
        %s6450 = sand.u32 %s228, 1
        %s6451 = smul.addr %s6450, 256
        %s6452 = scalar_lea.vmem [#allocation5], %s6451
        // Predicated region
        $region129: #{tpu_custom_call.1} parent=119 // pred_check
          %p6453 = pneg %p238
        $region130: #{tpu_custom_call.1} parent=119 // pred_check_branch
          %6455 = sbr.rel (%p6453) target = $region132
        $region131: #{tpu_custom_call.1} parent=119 // pred_region
          %s6457 = ssub.s32 4096, 4096
          %6458 = vsyncadd %s6449, %s6457
          %s6459 = smul.addr %s22, 128
          %s6460 = scalar_lea.hbm %s8, %s6459
          %s6461 = sshll.u32 %s6452, 4
          %s6462 = int_to_ptr.vmem [resolvable:$true] %s6461
          %6467 = dma.vmem_to_hbm [thread:$0]  %s6462, 4096, %s6460, %s6449, 128, 256, 8
        $region132: #{tpu_custom_call.1} parent=119 // pred_fallthru
          _
      $region120: #{tpu_custom_call.1} parent=5 // pred_fallthru
        _
      %p6468 = scmp.le.s32.totalorder 2, %s17
      // Predicated region
      $region133: #{tpu_custom_call.1} parent=5 // pred_check
        %p6469 = pneg %p6468
      $region134: #{tpu_custom_call.1} parent=5 // pred_check_branch
        %6471 = sbr.rel (%p6469) target = $region136
      $region135: #{tpu_custom_call.1} parent=5 // pred_region
        %s6472 = ssub.s32 %s17, 2
        // Predicated region
        $region137: #{tpu_custom_call.1} parent=135 // pred_check
          %p6473 = pneg %p244
        $region138: #{tpu_custom_call.1} parent=135 // pred_check_branch
          %6475 = sbr.rel (%p6473) target = $region140
        $region139: #{tpu_custom_call.1} parent=135 // pred_region
          %s6476 = sand.u32 %s229, 1
          %s6477 = scalar_lea.sflag [#allocation6], %s6476
          %s6478 = sand.u32 %s229, 1
          %s6479 = smul.addr %s6478, 256
          %s6480 = scalar_lea.vmem [#allocation5], %s6479
          %6481 = dma.done %s6477, 4096
        $region140: #{tpu_custom_call.1} parent=135 // pred_fallthru
          _
      $region136: #{tpu_custom_call.1} parent=5 // pred_fallthru
        _
    $region6: #{tpu_custom_call.1} parent=1 // loop_footer
      %s21 = sadd.s32 1, %s17
    $region7: #{tpu_custom_call.1} parent=1 // loop_footer_branch
      %16 = sbr.rel target = $region3
    $region8: #{tpu_custom_call.1} parent=1 // loop_exit
      _
    %6482 = vsyncpa [#allocation6], 1
    %s6483 = scalar_lea.sflag [#allocation6], 1
    %6484 = vsyncpa %s6483, 1

</llo_original>
